<compile_context>
chip_gen: v7x
topology: tpu7x:2x2x1
jax: 0.10.0
libtpu: 0.0.40
codegen_flags: <defaults>
</compile_context>

<pallas_src>
import functools

import jax
import jax.numpy as jnp
from jax.experimental import pallas as pl
from jax.experimental.pallas import tpu as pltpu


# ----------------------------------------------------------------------------
# Tile helper: largest MXU/lane-friendly tile that divides `dim`, else the full
# dimension (full-extent blocks are always legal for BlockSpec).
# ----------------------------------------------------------------------------
def _pick_tile(dim, candidates):
    for c in candidates:
        if dim % c == 0:
            return c
    return dim


# ----------------------------------------------------------------------------
# Kernel 1: tiled linear  y = x @ Wt + b   (optional fused ReLU)
# grid = (M/TM, N/TN, K/TK), f32 accumulator in VMEM, K is the reduction axis.
# ----------------------------------------------------------------------------
def _linear_kernel(x_ref, wt_ref, b_ref, o_ref, acc_ref, *, relu):
    @pl.when(pl.program_id(2) == 0)
    def _init():
        acc_ref[...] = jnp.zeros_like(acc_ref)

    acc_ref[...] += jnp.dot(x_ref[...], wt_ref[...],
                            preferred_element_type=jnp.float32)

    @pl.when(pl.program_id(2) == pl.num_programs(2) - 1)
    def _finish():
        y = acc_ref[...] + b_ref[...].astype(jnp.float32)
        if relu:
            y = jnp.maximum(y, 0.0)
        o_ref[...] = y.astype(o_ref.dtype)


def linear_pallas(x, wt, b2, relu=False):
    """x: (M, K); wt: (K, N) pre-transposed; b2: (1, N) -> (M, N)."""
    M, K = x.shape
    N = wt.shape[1]
    tm = _pick_tile(M, (256, 128))
    tn = _pick_tile(N, (512, 256, 128))
    tk = _pick_tile(K, (512, 256, 128))
    return pl.pallas_call(
        functools.partial(_linear_kernel, relu=relu),
        out_shape=jax.ShapeDtypeStruct((M, N), x.dtype),
        grid=(M // tm, N // tn, K // tk),
        in_specs=[
            pl.BlockSpec((tm, tk), lambda i, j, k: (i, k)),
            pl.BlockSpec((tk, tn), lambda i, j, k: (k, j)),
            pl.BlockSpec((1, tn), lambda i, j, k: (0, j)),
        ],
        out_specs=pl.BlockSpec((tm, tn), lambda i, j, k: (i, j)),
        scratch_shapes=[pltpu.VMEM((tm, tn), jnp.float32)],
        compiler_params=pltpu.CompilerParams(
            dimension_semantics=("parallel", "parallel", "arbitrary")),
    )(x, wt, b2)


# ----------------------------------------------------------------------------
# Kernel 2: tiled linear with fused residual-add + LayerNorm epilogue
#   out = LayerNorm(res + x @ Wt + b)        (LN spans full N, so N untiled)
# ----------------------------------------------------------------------------
def _linear_addln_kernel(x_ref, wt_ref, b_ref, res_ref, g_ref, bb_ref, o_ref,
                         acc_ref, *, eps):
    @pl.when(pl.program_id(1) == 0)
    def _init():
        acc_ref[...] = jnp.zeros_like(acc_ref)

    acc_ref[...] += jnp.dot(x_ref[...], wt_ref[...],
                            preferred_element_type=jnp.float32)

    @pl.when(pl.program_id(1) == pl.num_programs(1) - 1)
    def _finish():
        h = (acc_ref[...] + b_ref[...].astype(jnp.float32)
             + res_ref[...].astype(jnp.float32))
        mu = jnp.mean(h, axis=-1, keepdims=True)
        d = h - mu
        var = jnp.mean(d * d, axis=-1, keepdims=True)
        y = d * jax.lax.rsqrt(var + eps)
        o_ref[...] = (y * g_ref[...] + bb_ref[...]).astype(o_ref.dtype)


def linear_addln_pallas(x, wt, b2, res, g2, bb2, eps=1e-5):
    """LayerNorm(res + x @ wt + b). x: (M, K); wt: (K, N); res: (M, N)."""
    M, K = x.shape
    N = wt.shape[1]
    tm = _pick_tile(M, (256, 128))
    tk = _pick_tile(K, (512, 256, 128))
    return pl.pallas_call(
        functools.partial(_linear_addln_kernel, eps=eps),
        out_shape=jax.ShapeDtypeStruct((M, N), x.dtype),
        grid=(M // tm, K // tk),
        in_specs=[
            pl.BlockSpec((tm, tk), lambda i, k: (i, k)),
            pl.BlockSpec((tk, N), lambda i, k: (k, 0)),
            pl.BlockSpec((1, N), lambda i, k: (0, 0)),
            pl.BlockSpec((tm, N), lambda i, k: (i, 0)),
            pl.BlockSpec((1, N), lambda i, k: (0, 0)),
            pl.BlockSpec((1, N), lambda i, k: (0, 0)),
        ],
        out_specs=pl.BlockSpec((tm, N), lambda i, k: (i, 0)),
        scratch_shapes=[pltpu.VMEM((tm, N), jnp.float32)],
        compiler_params=pltpu.CompilerParams(
            dimension_semantics=("parallel", "arbitrary")),
    )(x, wt, b2, res, g2, bb2)


# ----------------------------------------------------------------------------
# Kernel 3a: self-attention core. One batch per grid step, lane-dense blocks.
# qkv block: (1, L, 3E); heads sliced in-kernel; q is pre-scaled (folded into
# the projection weights). Output written as a single lane-dense (1, L, E) tile.
# ----------------------------------------------------------------------------
def _mha_self_kernel(qkv_ref, o_ref, *, nhead, hd):
    E = nhead * hd
    qkv = qkv_ref[0].astype(jnp.float32)                     # (L, 3E)
    outs = []
    for h in range(nhead):                                   # static unroll
        qh = qkv[:, h * hd:(h + 1) * hd]
        kh = qkv[:, E + h * hd:E + (h + 1) * hd]
        vh = qkv[:, 2 * E + h * hd:2 * E + (h + 1) * hd]
        # contract last dims directly -> no in-kernel transpose of k
        s = jax.lax.dot_general(qh, kh, (((1,), (1,)), ((), ())),
                                preferred_element_type=jnp.float32)   # (L, L)
        m = jnp.max(s, axis=-1, keepdims=True)
        p = jnp.exp(s - m)
        p = p * pl.reciprocal(jnp.sum(p, axis=-1, keepdims=True), approx=True)
        outs.append(jnp.dot(p, vh, preferred_element_type=jnp.float32))
    o_ref[0] = jnp.concatenate(outs, axis=-1).astype(o_ref.dtype)


def mha_self_pallas(qkv, nhead):
    """qkv: (B, L, 3E) -> (B, L, E)."""
    B, L, threeE = qkv.shape
    E = threeE // 3
    hd = E // nhead
    return pl.pallas_call(
        functools.partial(_mha_self_kernel, nhead=nhead, hd=hd),
        out_shape=jax.ShapeDtypeStruct((B, L, E), qkv.dtype),
        grid=(B,),
        in_specs=[pl.BlockSpec((1, L, threeE), lambda b: (b, 0, 0))],
        out_specs=pl.BlockSpec((1, L, E), lambda b: (b, 0, 0)),
        compiler_params=pltpu.CompilerParams(dimension_semantics=("parallel",)),
    )(qkv)


# ----------------------------------------------------------------------------
# Kernel 3b: cross-attention core. q block (1, L, E), kv block (1, S, 2E).
# ----------------------------------------------------------------------------
def _mha_cross_kernel(q_ref, kv_ref, o_ref, *, nhead, hd):
    E = nhead * hd
    q = q_ref[0].astype(jnp.float32)                         # (L, E), pre-scaled
    kv = kv_ref[0].astype(jnp.float32)                       # (S, 2E)
    outs = []
    for h in range(nhead):
        qh = q[:, h * hd:(h + 1) * hd]
        kh = kv[:, h * hd:(h + 1) * hd]
        vh = kv[:, E + h * hd:E + (h + 1) * hd]
        s = jax.lax.dot_general(qh, kh, (((1,), (1,)), ((), ())),
                                preferred_element_type=jnp.float32)   # (L, S)
        m = jnp.max(s, axis=-1, keepdims=True)
        p = jnp.exp(s - m)
        p = p * pl.reciprocal(jnp.sum(p, axis=-1, keepdims=True), approx=True)
        outs.append(jnp.dot(p, vh, preferred_element_type=jnp.float32))
    o_ref[0] = jnp.concatenate(outs, axis=-1).astype(o_ref.dtype)


def mha_cross_pallas(q, kv, nhead):
    """q: (B, L, E); kv: (B, S, 2E) -> (B, L, E)."""
    B, L, E = q.shape
    S = kv.shape[1]
    hd = E // nhead
    return pl.pallas_call(
        functools.partial(_mha_cross_kernel, nhead=nhead, hd=hd),
        out_shape=jax.ShapeDtypeStruct((B, L, E), q.dtype),
        grid=(B,),
        in_specs=[pl.BlockSpec((1, L, E), lambda b: (b, 0, 0)),
                  pl.BlockSpec((1, S, 2 * E), lambda b: (b, 0, 0))],
        out_specs=pl.BlockSpec((1, L, E), lambda b: (b, 0, 0)),
        compiler_params=pltpu.CompilerParams(dimension_semantics=("parallel",)),
    )(q, kv)


# ----------------------------------------------------------------------------
# One-time parameter preparation: pre-transpose weights to (K, N), pre-split the
# cross-attn in_proj into q / kv halves, fold the 1/sqrt(hd) scaling into the
# q projections, reshape biases / LN params to (1, N) rows.
# ----------------------------------------------------------------------------
def prepare_params(params, d_model, nhead):
    E = d_model
    scale = float(E // nhead) ** -0.5

    def row(v):
        return v.reshape(1, -1)

    sa_w_t = params["sa_in_w"].T                         # (E, 3E)
    sa_w_t = sa_w_t.at[:, :E].multiply(scale)            # fold q scaling
    sa_b = params["sa_in_b"].at[:E].multiply(scale)

    return {
        "sa_w_t": sa_w_t, "sa_b": row(sa_b),
        "sa_out_w_t": params["sa_out_w"].T, "sa_out_b": row(params["sa_out_b"]),
        "ca_q_w_t": params["ca_in_w"][:E].T * scale,
        "ca_q_b": row(params["ca_in_b"][:E] * scale),
        "ca_kv_w_t": params["ca_in_w"][E:].T,            # (E, 2E)
        "ca_kv_b": row(params["ca_in_b"][E:]),
        "ca_out_w_t": params["ca_out_w"].T, "ca_out_b": row(params["ca_out_b"]),
        "ff1_w_t": params["ff1_w"].T, "ff1_b": row(params["ff1_b"]),
        "ff2_w_t": params["ff2_w"].T, "ff2_b": row(params["ff2_b"]),
        "ln1_g": row(params["ln1_g"]), "ln1_b": row(params["ln1_b"]),
        "ln2_g": row(params["ln2_g"]), "ln2_b": row(params["ln2_b"]),
        "ln3_g": row(params["ln3_g"]), "ln3_b": row(params["ln3_b"]),
    }


# ----------------------------------------------------------------------------
# TransformerDecoderLayer forward (kernels + thin glue; no head-transposes)
# ----------------------------------------------------------------------------
def transformer_decoder_layer(query, key, prep, nhead):
    """query: (B, C, Pq), key: (B, C, Pk) -> (B, C, Pq)."""
    B, E, Pq = query.shape
    Pk = key.shape[2]

    # Boundary layout only (module interface is channel-first).
    xq = jnp.transpose(query, (0, 2, 1)).reshape(B * Pq, E)      # (B*Pq, E)
    xk = jnp.transpose(key, (0, 2, 1)).reshape(B * Pk, E)        # (B*Pk, E)

    # ---- self attention (qkv_same path) ----
    qkv = linear_pallas(xq, prep["sa_w_t"], prep["sa_b"]).reshape(B, Pq, 3 * E)
    attn = mha_self_pallas(qkv, nhead).reshape(B * Pq, E)
    x = linear_addln_pallas(attn, prep["sa_out_w_t"], prep["sa_out_b"],
                            xq, prep["ln1_g"], prep["ln1_b"])

    # ---- cross attention (kv_same path) ----
    q = linear_pallas(x, prep["ca_q_w_t"], prep["ca_q_b"]).reshape(B, Pq, E)
    kv = linear_pallas(xk, prep["ca_kv_w_t"], prep["ca_kv_b"]).reshape(B, Pk, 2 * E)
    attn = mha_cross_pallas(q, kv, nhead).reshape(B * Pq, E)
    x = linear_addln_pallas(attn, prep["ca_out_w_t"], prep["ca_out_b"],
                            x, prep["ln2_g"], prep["ln2_b"])

    # ---- feed-forward ----
    h = linear_pallas(x, prep["ff1_w_t"], prep["ff1_b"], relu=True)
    x = linear_addln_pallas(h, prep["ff2_w_t"], prep["ff2_b"],
                            x, prep["ln3_g"], prep["ln3_b"])

    return x.reshape(B, Pq, E).transpose(0, 2, 1)                # (B, C, Pq)


# ----------------------------------------------------------------------------
# Pure-JAX reference (uses raw torch-layout params)
# ----------------------------------------------------------------------------
def reference(query, key, params, nhead):
    B, E, Pq = query.shape
    Pk = key.shape[2]
    H = nhead
    hd = E // H
    scale = float(hd) ** -0.5

    xq = jnp.transpose(query, (0, 2, 1)).reshape(B * Pq, E)
    xk = jnp.transpose(key, (0, 2, 1)).reshape(B * Pk, E)

    def lin(x, w, b):
        return x @ w.T + b

    def heads(t, L):
        return t.reshape(B, L, H, hd).transpose(0, 2, 1, 3)

    def attn(q2d, k2d, v2d, Lq, Lk):
        q = heads(q2d, Lq) * scale
        k = heads(k2d, Lk)
        v = heads(v2d, Lk)
        s = jnp.einsum("bhld,bhsd->bhls", q, k)
        p = jax.nn.softmax(s, axis=-1)
        o = jnp.einsum("bhls,bhsd->bhld", p, v)
        return o.transpose(0, 2, 1, 3).reshape(B * Lq, E)

    def ln(x, g, b, eps=1e-5):
        mu = jnp.mean(x, -1, keepdims=True)
        var = jnp.mean((x - mu) ** 2, -1, keepdims=True)
        return (x - mu) / jnp.sqrt(var + eps) * g + b

    qkv = lin(xq, params["sa_in_w"], params["sa_in_b"])
    q, k, v = jnp.split(qkv, 3, -1)
    a = lin(attn(q, k, v, Pq, Pq), params["sa_out_w"], params["sa_out_b"])
    x = ln(xq + a, params["ln1_g"], params["ln1_b"])

    q = lin(x, params["ca_in_w"][:E], params["ca_in_b"][:E])
    kv = lin(xk, params["ca_in_w"][E:], params["ca_in_b"][E:])
    k, v = jnp.split(kv, 2, -1)
    a = lin(attn(q, k, v, Pq, Pk), params["ca_out_w"], params["ca_out_b"])
    x = ln(x + a, params["ln2_g"], params["ln2_b"])

    h = jnp.maximum(lin(x, params["ff1_w"], params["ff1_b"]), 0.0)
    h = lin(h, params["ff2_w"], params["ff2_b"])
    x = ln(x + h, params["ln3_g"], params["ln3_b"])
    return x.reshape(B, Pq, E).transpose(0, 2, 1)


# ----------------------------------------------------------------------------
# Deterministic parameter init (mirrors module __init__ shapes, torch layout)
# ----------------------------------------------------------------------------
def init_params(key, d_model, nhead, dim_feedforward):
    ks = jax.random.split(key, 8)

    def xavier(k, shape):
        fan_out, fan_in = shape
        lim = (6.0 / (fan_in + fan_out)) ** 0.5
        return jax.random.uniform(k, shape, jnp.float32, -lim, lim)

    E, F = d_model, dim_feedforward
    return {
        "sa_in_w": xavier(ks[0], (3 * E, E)),
        "sa_in_b": jnp.zeros((3 * E,), jnp.float32),
        "sa_out_w": xavier(ks[1], (E, E)),
        "sa_out_b": jnp.zeros((E,), jnp.float32),
        "ca_in_w": xavier(ks[2], (3 * E, E)),
        "ca_in_b": jnp.zeros((3 * E,), jnp.float32),
        "ca_out_w": xavier(ks[3], (E, E)),
        "ca_out_b": jnp.zeros((E,), jnp.float32),
        "ff1_w": xavier(ks[4], (F, E)),
        "ff1_b": jnp.zeros((F,), jnp.float32),
        "ff2_w": xavier(ks[5], (E, F)),
        "ff2_b": jnp.zeros((E,), jnp.float32),
        "ln1_g": jnp.ones((E,), jnp.float32),
        "ln1_b": jnp.zeros((E,), jnp.float32),
        "ln2_g": jnp.ones((E,), jnp.float32),
        "ln2_b": jnp.zeros((E,), jnp.float32),
        "ln3_g": jnp.ones((E,), jnp.float32),
        "ln3_b": jnp.zeros((E,), jnp.float32),
    }


if __name__ == "__main__":
    d_model, nhead, dim_feedforward = 32, 4, 64
    B, Pq, Pk = 2, 8, 16

    root = jax.random.PRNGKey(0)
    kq, kk, kp = jax.random.split(root, 3)
    query = jax.random.normal(kq, (B, d_model, Pq), jnp.float32)   # (B, C, Pq)
    key = jax.random.normal(kk, (B, d_model, Pk), jnp.float32)     # (B, C, Pk)
    params = init_params(kp, d_model, nhead, dim_feedforward)
    prep = prepare_params(params, d_model, nhead)                  # one-time prep

    fwd = jax.jit(functools.partial(transformer_decoder_layer, nhead=nhead))
    out = fwd(query, key, prep)
    out = jax.block_until_ready(out)

    ref = reference(query, key, params, nhead)
    assert out.shape == (B, d_model, Pq)
    err = float(jnp.max(jnp.abs(out - ref)))
    # approx reciprocal in the softmax denominator -> slightly looser tolerance
    assert jnp.allclose(out, ref, rtol=2e-3, atol=2e-3), f"mismatch vs reference (max abs err {err})"

    print("KERNEL_OK")
</pallas_src>

<mosaic_0001>
module attributes {stable_mosaic.version = 11 : i64} {
  func.func @_linear_kernel(%arg0: i32, %arg1: i32, %arg2: i32, %arg3: memref<16x32xf32, #tpu.memory_space<vmem>>, %arg4: memref<32x96xf32, #tpu.memory_space<vmem>>, %arg5: memref<1x96xf32, #tpu.memory_space<vmem>>, %arg6: memref<16x96xf32, #tpu.memory_space<vmem>>, %arg7: memref<16x96xf32, #tpu.memory_space<vmem>>) attributes {dimension_semantics = [#tpu.dimension_semantics<parallel>, #tpu.dimension_semantics<parallel>, #tpu.dimension_semantics<arbitrary>], iteration_bounds = array<i64: 1, 1, 1>, scalar_prefetch = 0 : i64, scratch_operands = 1 : i64, tpu.core_type = #tpu.core_type<tc>, window_params = [{transform_indices = @transform_0, window_bounds = array<i64: 16, 32>}, {transform_indices = @transform_1, window_bounds = array<i64: 32, 96>}, {transform_indices = @transform_2, window_bounds = array<i64: 1, 96>}, {transform_indices = @transform_3, window_bounds = array<i64: 16, 96>}]} {
    %c0_i32 = arith.constant 0 : i32
    %0 = arith.cmpi eq, %arg2, %c0_i32 : i32
    %1 = arith.extui %0 : i1 to i32
    %c0_i32_0 = arith.constant 0 : i32
    %2 = arith.cmpi ne, %1, %c0_i32_0 : i32
    scf.if %2 {
      %cst_10 = arith.constant 0.000000e+00 : f32
      %12 = vector.broadcast %cst_10 : f32 to vector<16x96xf32>
      %c0_11 = arith.constant 0 : index
      %c0_12 = arith.constant 0 : index
      %13 = vector.load %arg7[%c0_11, %c0_12] : memref<16x96xf32, #tpu.memory_space<vmem>>, vector<16x96xf32>
      tpu.vector_store %arg7[%c0_11, %c0_12], %12 {strides = array<i32>} : memref<16x96xf32, #tpu.memory_space<vmem>>, vector<16x96xf32>,
    } else {
    }
    %c0 = arith.constant 0 : index
    %c0_1 = arith.constant 0 : index
    %3 = vector.load %arg7[%c0, %c0_1] : memref<16x96xf32, #tpu.memory_space<vmem>>, vector<16x96xf32>
    %c0_2 = arith.constant 0 : index
    %c0_3 = arith.constant 0 : index
    %4 = vector.load %arg3[%c0_2, %c0_3] : memref<16x32xf32, #tpu.memory_space<vmem>>, vector<16x32xf32>
    %c0_4 = arith.constant 0 : index
    %c0_5 = arith.constant 0 : index
    %5 = vector.load %arg4[%c0_4, %c0_5] : memref<32x96xf32, #tpu.memory_space<vmem>>, vector<32x96xf32>
    %cst = arith.constant dense<0.000000e+00> : vector<16x96xf32>
    %6 = tpu.matmul %4, %5, %cst {dimension_numbers = #tpu.dot_dimension_numbers<[1], [0], [0], [1], [0, 0, 1, 1], [], []>} : vector<16x32xf32>, vector<32x96xf32>, vector<16x96xf32> -> vector<16x96xf32>
    %7 = arith.addf %3, %6 : vector<16x96xf32>
    %c0_6 = arith.constant 0 : index
    %c0_7 = arith.constant 0 : index
    %8 = vector.load %arg7[%c0_6, %c0_7] : memref<16x96xf32, #tpu.memory_space<vmem>>, vector<16x96xf32>
    tpu.vector_store %arg7[%c0_6, %c0_7], %7 {strides = array<i32>} : memref<16x96xf32, #tpu.memory_space<vmem>>, vector<16x96xf32>,
    %c0_i32_8 = arith.constant 0 : i32
    %9 = arith.cmpi eq, %arg2, %c0_i32_8 : i32
    %10 = arith.extui %9 : i1 to i32
    %c0_i32_9 = arith.constant 0 : i32
    %11 = arith.cmpi ne, %10, %c0_i32_9 : i32
    scf.if %11 {
      %c0_10 = arith.constant 0 : index
      %c0_11 = arith.constant 0 : index
      %12 = vector.load %arg7[%c0_10, %c0_11] : memref<16x96xf32, #tpu.memory_space<vmem>>, vector<16x96xf32>
      %c0_12 = arith.constant 0 : index
      %c0_13 = arith.constant 0 : index
      %13 = vector.load %arg5[%c0_12, %c0_13] : memref<1x96xf32, #tpu.memory_space<vmem>>, vector<1x96xf32>
      %14 = vector.broadcast %13 : vector<1x96xf32> to vector<16x96xf32>
      %15 = arith.addf %12, %14 : vector<16x96xf32>
      %c0_14 = arith.constant 0 : index
      %c0_15 = arith.constant 0 : index
      %16 = vector.load %arg6[%c0_14, %c0_15] : memref<16x96xf32, #tpu.memory_space<vmem>>, vector<16x96xf32>
      tpu.vector_store %arg6[%c0_14, %c0_15], %15 {strides = array<i32>} : memref<16x96xf32, #tpu.memory_space<vmem>>, vector<16x96xf32>,
    } else {
    }
    return
  }
  func.func @transform_0(%arg0: i32, %arg1: i32, %arg2: i32) -> (i32, i32) {
    %c0_i32 = arith.constant 0 : i32
    return %arg0, %arg2 : i32, i32
  }
  func.func @transform_1(%arg0: i32, %arg1: i32, %arg2: i32) -> (i32, i32) {
    %c0_i32 = arith.constant 0 : i32
    return %arg2, %arg1 : i32, i32
  }
  func.func @transform_2(%arg0: i32, %arg1: i32, %arg2: i32) -> (i32, i32) {
    %c0_i32 = arith.constant 0 : i32
    %c0_i32_0 = arith.constant 0 : i32
    return %c0_i32, %arg1 : i32, i32
  }
  func.func @transform_3(%arg0: i32, %arg1: i32, %arg2: i32) -> (i32, i32) {
    %c0_i32 = arith.constant 0 : i32
    return %arg0, %arg1 : i32, i32
  }
}

module attributes {stable_mosaic.version = 11 : i64} {
  func.func @_linear_addln_kernel(%arg0: i32, %arg1: i32, %arg2: memref<16x32xf32, #tpu.memory_space<vmem>>, %arg3: memref<32x32xf32, #tpu.memory_space<vmem>>, %arg4: memref<1x32xf32, #tpu.memory_space<vmem>>, %arg5: memref<16x32xf32, #tpu.memory_space<vmem>>, %arg6: memref<1x32xf32, #tpu.memory_space<vmem>>, %arg7: memref<1x32xf32, #tpu.memory_space<vmem>>, %arg8: memref<16x32xf32, #tpu.memory_space<vmem>>, %arg9: memref<16x32xf32, #tpu.memory_space<vmem>>) attributes {dimension_semantics = [#tpu.dimension_semantics<parallel>, #tpu.dimension_semantics<arbitrary>], iteration_bounds = array<i64: 1, 1>, scalar_prefetch = 0 : i64, scratch_operands = 1 : i64, tpu.core_type = #tpu.core_type<tc>, window_params = [{transform_indices = @transform_0, window_bounds = array<i64: 16, 32>}, {transform_indices = @transform_1, window_bounds = array<i64: 32, 32>}, {pipeline_mode = #tpu.pipeline_mode<synchronous>, transform_indices = @transform_2, window_bounds = array<i64: 1, 32>}, {transform_indices = @transform_3, window_bounds = array<i64: 16, 32>}, {pipeline_mode = #tpu.pipeline_mode<synchronous>, transform_indices = @transform_4, window_bounds = array<i64: 1, 32>}, {pipeline_mode = #tpu.pipeline_mode<synchronous>, transform_indices = @transform_5, window_bounds = array<i64: 1, 32>}, {transform_indices = @transform_6, window_bounds = array<i64: 16, 32>}]} {
    %c0_i32 = arith.constant 0 : i32
    %0 = arith.cmpi eq, %arg1, %c0_i32 : i32
    %1 = arith.extui %0 : i1 to i32
    %c0_i32_0 = arith.constant 0 : i32
    %2 = arith.cmpi ne, %1, %c0_i32_0 : i32
    scf.if %2 {
      %cst_10 = arith.constant 0.000000e+00 : f32
      %12 = vector.broadcast %cst_10 : f32 to vector<16x32xf32>
      %c0_11 = arith.constant 0 : index
      %c0_12 = arith.constant 0 : index
      %13 = vector.load %arg9[%c0_11, %c0_12] : memref<16x32xf32, #tpu.memory_space<vmem>>, vector<16x32xf32>
      tpu.vector_store %arg9[%c0_11, %c0_12], %12 {strides = array<i32>} : memref<16x32xf32, #tpu.memory_space<vmem>>, vector<16x32xf32>,
    } else {
    }
    %c0 = arith.constant 0 : index
    %c0_1 = arith.constant 0 : index
    %3 = vector.load %arg9[%c0, %c0_1] : memref<16x32xf32, #tpu.memory_space<vmem>>, vector<16x32xf32>
    %c0_2 = arith.constant 0 : index
    %c0_3 = arith.constant 0 : index
    %4 = vector.load %arg2[%c0_2, %c0_3] : memref<16x32xf32, #tpu.memory_space<vmem>>, vector<16x32xf32>
    %c0_4 = arith.constant 0 : index
    %c0_5 = arith.constant 0 : index
    %5 = vector.load %arg3[%c0_4, %c0_5] : memref<32x32xf32, #tpu.memory_space<vmem>>, vector<32x32xf32>
    %cst = arith.constant dense<0.000000e+00> : vector<16x32xf32>
    %6 = tpu.matmul %4, %5, %cst {dimension_numbers = #tpu.dot_dimension_numbers<[1], [0], [0], [1], [0, 0, 1, 1], [], []>} : vector<16x32xf32>, vector<32x32xf32>, vector<16x32xf32> -> vector<16x32xf32>
    %7 = arith.addf %3, %6 : vector<16x32xf32>
    %c0_6 = arith.constant 0 : index
    %c0_7 = arith.constant 0 : index
    %8 = vector.load %arg9[%c0_6, %c0_7] : memref<16x32xf32, #tpu.memory_space<vmem>>, vector<16x32xf32>
    tpu.vector_store %arg9[%c0_6, %c0_7], %7 {strides = array<i32>} : memref<16x32xf32, #tpu.memory_space<vmem>>, vector<16x32xf32>,
    %c0_i32_8 = arith.constant 0 : i32
    %9 = arith.cmpi eq, %arg1, %c0_i32_8 : i32
    %10 = arith.extui %9 : i1 to i32
    %c0_i32_9 = arith.constant 0 : i32
    %11 = arith.cmpi ne, %10, %c0_i32_9 : i32
    scf.if %11 {
      %c0_10 = arith.constant 0 : index
      %c0_11 = arith.constant 0 : index
      %12 = vector.load %arg9[%c0_10, %c0_11] : memref<16x32xf32, #tpu.memory_space<vmem>>, vector<16x32xf32>
      %c0_12 = arith.constant 0 : index
      %c0_13 = arith.constant 0 : index
      %13 = vector.load %arg4[%c0_12, %c0_13] : memref<1x32xf32, #tpu.memory_space<vmem>>, vector<1x32xf32>
      %14 = vector.broadcast %13 : vector<1x32xf32> to vector<16x32xf32>
      %15 = arith.addf %12, %14 : vector<16x32xf32>
      %c0_14 = arith.constant 0 : index
      %c0_15 = arith.constant 0 : index
      %16 = vector.load %arg5[%c0_14, %c0_15] : memref<16x32xf32, #tpu.memory_space<vmem>>, vector<16x32xf32>
      %17 = arith.addf %15, %16 : vector<16x32xf32>
      %cst_16 = arith.constant dense<0.000000e+00> : vector<16xf32>
      %18 = vector.multi_reduction <add>, %17, %cst_16 [1] : vector<16x32xf32> to vector<16xf32>
      %19 = vector.shape_cast %18 : vector<16xf32> to vector<16x1xf32>
      %cst_17 = arith.constant 3.200000e+01 : f32
      %20 = vector.broadcast %cst_17 : f32 to vector<16x1xf32>
      %21 = arith.divf %19, %20 : vector<16x1xf32>
      %22 = vector.broadcast %21 : vector<16x1xf32> to vector<16x32xf32>
      %23 = arith.subf %17, %22 : vector<16x32xf32>
      %24 = arith.mulf %23, %23 : vector<16x32xf32>
      %cst_18 = arith.constant dense<0.000000e+00> : vector<16xf32>
      %25 = vector.multi_reduction <add>, %24, %cst_18 [1] : vector<16x32xf32> to vector<16xf32>
      %26 = vector.shape_cast %25 : vector<16xf32> to vector<16x1xf32>
      %cst_19 = arith.constant 3.200000e+01 : f32
      %27 = vector.broadcast %cst_19 : f32 to vector<16x1xf32>
      %28 = arith.divf %26, %27 : vector<16x1xf32>
      %cst_20 = arith.constant 9.99999974E-6 : f32
      %29 = vector.broadcast %cst_20 : f32 to vector<16x1xf32>
      %30 = arith.addf %28, %29 : vector<16x1xf32>
      %31 = math.rsqrt %30 : vector<16x1xf32>
      %32 = vector.broadcast %31 : vector<16x1xf32> to vector<16x32xf32>
      %33 = arith.mulf %23, %32 : vector<16x32xf32>
      %c0_21 = arith.constant 0 : index
      %c0_22 = arith.constant 0 : index
      %34 = vector.load %arg6[%c0_21, %c0_22] : memref<1x32xf32, #tpu.memory_space<vmem>>, vector<1x32xf32>
      %35 = vector.broadcast %34 : vector<1x32xf32> to vector<16x32xf32>
      %36 = arith.mulf %33, %35 : vector<16x32xf32>
      %c0_23 = arith.constant 0 : index
      %c0_24 = arith.constant 0 : index
      %37 = vector.load %arg7[%c0_23, %c0_24] : memref<1x32xf32, #tpu.memory_space<vmem>>, vector<1x32xf32>
      %38 = vector.broadcast %37 : vector<1x32xf32> to vector<16x32xf32>
      %39 = arith.addf %36, %38 : vector<16x32xf32>
      %c0_25 = arith.constant 0 : index
      %c0_26 = arith.constant 0 : index
      %40 = vector.load %arg8[%c0_25, %c0_26] : memref<16x32xf32, #tpu.memory_space<vmem>>, vector<16x32xf32>
      tpu.vector_store %arg8[%c0_25, %c0_26], %39 {strides = array<i32>} : memref<16x32xf32, #tpu.memory_space<vmem>>, vector<16x32xf32>,
    } else {
    }
    return
  }
  func.func @transform_0(%arg0: i32, %arg1: i32) -> (i32, i32) {
    %c0_i32 = arith.constant 0 : i32
    return %arg0, %arg1 : i32, i32
  }
  func.func @transform_1(%arg0: i32, %arg1: i32) -> (i32, i32) {
    %c0_i32 = arith.constant 0 : i32
    %c0_i32_0 = arith.constant 0 : i32
    return %arg1, %c0_i32 : i32, i32
  }
  func.func @transform_2(%arg0: i32, %arg1: i32) -> (i32, i32) {
    %c0_i32 = arith.constant 0 : i32
    %c0_i32_0 = arith.constant 0 : i32
    %c0_i32_1 = arith.constant 0 : i32
    return %c0_i32, %c0_i32_0 : i32, i32
  }
  func.func @transform_3(%arg0: i32, %arg1: i32) -> (i32, i32) {
    %c0_i32 = arith.constant 0 : i32
    %c0_i32_0 = arith.constant 0 : i32
    return %arg0, %c0_i32 : i32, i32
  }
  func.func @transform_4(%arg0: i32, %arg1: i32) -> (i32, i32) {
    %c0_i32 = arith.constant 0 : i32
    %c0_i32_0 = arith.constant 0 : i32
    %c0_i32_1 = arith.constant 0 : i32
    return %c0_i32, %c0_i32_0 : i32, i32
  }
  func.func @transform_5(%arg0: i32, %arg1: i32) -> (i32, i32) {
    %c0_i32 = arith.constant 0 : i32
    %c0_i32_0 = arith.constant 0 : i32
    %c0_i32_1 = arith.constant 0 : i32
    return %c0_i32, %c0_i32_0 : i32, i32
  }
  func.func @transform_6(%arg0: i32, %arg1: i32) -> (i32, i32) {
    %c0_i32 = arith.constant 0 : i32
    %c0_i32_0 = arith.constant 0 : i32
    return %arg0, %c0_i32 : i32, i32
  }
}

module attributes {stable_mosaic.version = 11 : i64} {
  func.func @_linear_kernel(%arg0: i32, %arg1: i32, %arg2: i32, %arg3: memref<16x32xf32, #tpu.memory_space<vmem>>, %arg4: memref<32x32xf32, #tpu.memory_space<vmem>>, %arg5: memref<1x32xf32, #tpu.memory_space<vmem>>, %arg6: memref<16x32xf32, #tpu.memory_space<vmem>>, %arg7: memref<16x32xf32, #tpu.memory_space<vmem>>) attributes {dimension_semantics = [#tpu.dimension_semantics<parallel>, #tpu.dimension_semantics<parallel>, #tpu.dimension_semantics<arbitrary>], iteration_bounds = array<i64: 1, 1, 1>, scalar_prefetch = 0 : i64, scratch_operands = 1 : i64, tpu.core_type = #tpu.core_type<tc>, window_params = [{transform_indices = @transform_0, window_bounds = array<i64: 16, 32>}, {transform_indices = @transform_1, window_bounds = array<i64: 32, 32>}, {transform_indices = @transform_2, window_bounds = array<i64: 1, 32>}, {transform_indices = @transform_3, window_bounds = array<i64: 16, 32>}]} {
    %c0_i32 = arith.constant 0 : i32
    %0 = arith.cmpi eq, %arg2, %c0_i32 : i32
    %1 = arith.extui %0 : i1 to i32
    %c0_i32_0 = arith.constant 0 : i32
    %2 = arith.cmpi ne, %1, %c0_i32_0 : i32
    scf.if %2 {
      %cst_10 = arith.constant 0.000000e+00 : f32
      %12 = vector.broadcast %cst_10 : f32 to vector<16x32xf32>
      %c0_11 = arith.constant 0 : index
      %c0_12 = arith.constant 0 : index
      %13 = vector.load %arg7[%c0_11, %c0_12] : memref<16x32xf32, #tpu.memory_space<vmem>>, vector<16x32xf32>
      tpu.vector_store %arg7[%c0_11, %c0_12], %12 {strides = array<i32>} : memref<16x32xf32, #tpu.memory_space<vmem>>, vector<16x32xf32>,
    } else {
    }
    %c0 = arith.constant 0 : index
    %c0_1 = arith.constant 0 : index
    %3 = vector.load %arg7[%c0, %c0_1] : memref<16x32xf32, #tpu.memory_space<vmem>>, vector<16x32xf32>
    %c0_2 = arith.constant 0 : index
    %c0_3 = arith.constant 0 : index
    %4 = vector.load %arg3[%c0_2, %c0_3] : memref<16x32xf32, #tpu.memory_space<vmem>>, vector<16x32xf32>
    %c0_4 = arith.constant 0 : index
    %c0_5 = arith.constant 0 : index
    %5 = vector.load %arg4[%c0_4, %c0_5] : memref<32x32xf32, #tpu.memory_space<vmem>>, vector<32x32xf32>
    %cst = arith.constant dense<0.000000e+00> : vector<16x32xf32>
    %6 = tpu.matmul %4, %5, %cst {dimension_numbers = #tpu.dot_dimension_numbers<[1], [0], [0], [1], [0, 0, 1, 1], [], []>} : vector<16x32xf32>, vector<32x32xf32>, vector<16x32xf32> -> vector<16x32xf32>
    %7 = arith.addf %3, %6 : vector<16x32xf32>
    %c0_6 = arith.constant 0 : index
    %c0_7 = arith.constant 0 : index
    %8 = vector.load %arg7[%c0_6, %c0_7] : memref<16x32xf32, #tpu.memory_space<vmem>>, vector<16x32xf32>
    tpu.vector_store %arg7[%c0_6, %c0_7], %7 {strides = array<i32>} : memref<16x32xf32, #tpu.memory_space<vmem>>, vector<16x32xf32>,
    %c0_i32_8 = arith.constant 0 : i32
    %9 = arith.cmpi eq, %arg2, %c0_i32_8 : i32
    %10 = arith.extui %9 : i1 to i32
    %c0_i32_9 = arith.constant 0 : i32
    %11 = arith.cmpi ne, %10, %c0_i32_9 : i32
    scf.if %11 {
      %c0_10 = arith.constant 0 : index
      %c0_11 = arith.constant 0 : index
      %12 = vector.load %arg7[%c0_10, %c0_11] : memref<16x32xf32, #tpu.memory_space<vmem>>, vector<16x32xf32>
      %c0_12 = arith.constant 0 : index
      %c0_13 = arith.constant 0 : index
      %13 = vector.load %arg5[%c0_12, %c0_13] : memref<1x32xf32, #tpu.memory_space<vmem>>, vector<1x32xf32>
      %14 = vector.broadcast %13 : vector<1x32xf32> to vector<16x32xf32>
      %15 = arith.addf %12, %14 : vector<16x32xf32>
      %c0_14 = arith.constant 0 : index
      %c0_15 = arith.constant 0 : index
      %16 = vector.load %arg6[%c0_14, %c0_15] : memref<16x32xf32, #tpu.memory_space<vmem>>, vector<16x32xf32>
      tpu.vector_store %arg6[%c0_14, %c0_15], %15 {strides = array<i32>} : memref<16x32xf32, #tpu.memory_space<vmem>>, vector<16x32xf32>,
    } else {
    }
    return
  }
  func.func @transform_0(%arg0: i32, %arg1: i32, %arg2: i32) -> (i32, i32) {
    %c0_i32 = arith.constant 0 : i32
    return %arg0, %arg2 : i32, i32
  }
  func.func @transform_1(%arg0: i32, %arg1: i32, %arg2: i32) -> (i32, i32) {
    %c0_i32 = arith.constant 0 : i32
    return %arg2, %arg1 : i32, i32
  }
  func.func @transform_2(%arg0: i32, %arg1: i32, %arg2: i32) -> (i32, i32) {
    %c0_i32 = arith.constant 0 : i32
    %c0_i32_0 = arith.constant 0 : i32
    return %c0_i32, %arg1 : i32, i32
  }
  func.func @transform_3(%arg0: i32, %arg1: i32, %arg2: i32) -> (i32, i32) {
    %c0_i32 = arith.constant 0 : i32
    return %arg0, %arg1 : i32, i32
  }
}

module attributes {stable_mosaic.version = 11 : i64} {
  func.func @_mha_self_kernel(%arg0: i32, %arg1: memref<1x8x96xf32, #tpu.memory_space<vmem>>, %arg2: memref<1x8x32xf32, #tpu.memory_space<vmem>>) attributes {dimension_semantics = [#tpu.dimension_semantics<parallel>], iteration_bounds = array<i64: 2>, scalar_prefetch = 0 : i64, scratch_operands = 0 : i64, tpu.core_type = #tpu.core_type<tc>, window_params = [{transform_indices = @transform_0, window_bounds = array<i64: 1, 8, 96>}, {transform_indices = @transform_1, window_bounds = array<i64: 1, 8, 32>}]} {
    %c0 = arith.constant 0 : index
    %c0_0 = arith.constant 0 : index
    %c0_1 = arith.constant 0 : index
    %0 = vector.load %arg1[%c0, %c0_0, %c0_1] : memref<1x8x96xf32, #tpu.memory_space<vmem>>, vector<1x8x96xf32>
    %1 = vector.shape_cast %0 : vector<1x8x96xf32> to vector<8x96xf32>
    %2 = vector.extract_strided_slice %1 {offsets = [0, 0], sizes = [8, 8], strides = [1, 1]} : vector<8x96xf32> to vector<8x8xf32>
    %3 = vector.extract_strided_slice %1 {offsets = [0, 32], sizes = [8, 8], strides = [1, 1]} : vector<8x96xf32> to vector<8x8xf32>
    %4 = vector.extract_strided_slice %1 {offsets = [0, 64], sizes = [8, 8], strides = [1, 1]} : vector<8x96xf32> to vector<8x8xf32>
    %cst = arith.constant dense<0.000000e+00> : vector<8x8xf32>
    %5 = tpu.matmul %2, %3, %cst {dimension_numbers = #tpu.dot_dimension_numbers<[1], [1], [0], [0], [0, 0, 1, 0], [], []>} : vector<8x8xf32>, vector<8x8xf32>, vector<8x8xf32> -> vector<8x8xf32>
    %cst_2 = arith.constant dense<0xFF800000> : vector<8xf32>
    %6 = vector.multi_reduction <maximumf>, %5, %cst_2 [1] : vector<8x8xf32> to vector<8xf32>
    %7 = vector.shape_cast %6 : vector<8xf32> to vector<8x1xf32>
    %8 = vector.broadcast %7 : vector<8x1xf32> to vector<8x8xf32>
    %9 = arith.subf %5, %8 : vector<8x8xf32>
    %10 = math.exp %9 : vector<8x8xf32>
    %cst_3 = arith.constant dense<0.000000e+00> : vector<8xf32>
    %11 = vector.multi_reduction <add>, %10, %cst_3 [1] : vector<8x8xf32> to vector<8xf32>
    %12 = vector.shape_cast %11 : vector<8xf32> to vector<8x1xf32>
    %13 = tpu.reciprocal %12 {approx = true} : vector<8x1xf32> -> vector<8x1xf32>
    %14 = vector.broadcast %13 : vector<8x1xf32> to vector<8x8xf32>
    %15 = arith.mulf %10, %14 : vector<8x8xf32>
    %cst_4 = arith.constant dense<0.000000e+00> : vector<8x8xf32>
    %16 = tpu.matmul %15, %4, %cst_4 {dimension_numbers = #tpu.dot_dimension_numbers<[1], [0], [0], [1], [0, 0, 1, 1], [], []>} : vector<8x8xf32>, vector<8x8xf32>, vector<8x8xf32> -> vector<8x8xf32>
    %17 = vector.extract_strided_slice %1 {offsets = [0, 8], sizes = [8, 8], strides = [1, 1]} : vector<8x96xf32> to vector<8x8xf32>
    %18 = vector.extract_strided_slice %1 {offsets = [0, 40], sizes = [8, 8], strides = [1, 1]} : vector<8x96xf32> to vector<8x8xf32>
    %19 = vector.extract_strided_slice %1 {offsets = [0, 72], sizes = [8, 8], strides = [1, 1]} : vector<8x96xf32> to vector<8x8xf32>
    %cst_5 = arith.constant dense<0.000000e+00> : vector<8x8xf32>
    %20 = tpu.matmul %17, %18, %cst_5 {dimension_numbers = #tpu.dot_dimension_numbers<[1], [1], [0], [0], [0, 0, 1, 0], [], []>} : vector<8x8xf32>, vector<8x8xf32>, vector<8x8xf32> -> vector<8x8xf32>
    %cst_6 = arith.constant dense<0xFF800000> : vector<8xf32>
    %21 = vector.multi_reduction <maximumf>, %20, %cst_6 [1] : vector<8x8xf32> to vector<8xf32>
    %22 = vector.shape_cast %21 : vector<8xf32> to vector<8x1xf32>
    %23 = vector.broadcast %22 : vector<8x1xf32> to vector<8x8xf32>
    %24 = arith.subf %20, %23 : vector<8x8xf32>
    %25 = math.exp %24 : vector<8x8xf32>
    %cst_7 = arith.constant dense<0.000000e+00> : vector<8xf32>
    %26 = vector.multi_reduction <add>, %25, %cst_7 [1] : vector<8x8xf32> to vector<8xf32>
    %27 = vector.shape_cast %26 : vector<8xf32> to vector<8x1xf32>
    %28 = tpu.reciprocal %27 {approx = true} : vector<8x1xf32> -> vector<8x1xf32>
    %29 = vector.broadcast %28 : vector<8x1xf32> to vector<8x8xf32>
    %30 = arith.mulf %25, %29 : vector<8x8xf32>
    %cst_8 = arith.constant dense<0.000000e+00> : vector<8x8xf32>
    %31 = tpu.matmul %30, %19, %cst_8 {dimension_numbers = #tpu.dot_dimension_numbers<[1], [0], [0], [1], [0, 0, 1, 1], [], []>} : vector<8x8xf32>, vector<8x8xf32>, vector<8x8xf32> -> vector<8x8xf32>
    %32 = vector.extract_strided_slice %1 {offsets = [0, 16], sizes = [8, 8], strides = [1, 1]} : vector<8x96xf32> to vector<8x8xf32>
    %33 = vector.extract_strided_slice %1 {offsets = [0, 48], sizes = [8, 8], strides = [1, 1]} : vector<8x96xf32> to vector<8x8xf32>
    %34 = vector.extract_strided_slice %1 {offsets = [0, 80], sizes = [8, 8], strides = [1, 1]} : vector<8x96xf32> to vector<8x8xf32>
    %cst_9 = arith.constant dense<0.000000e+00> : vector<8x8xf32>
    %35 = tpu.matmul %32, %33, %cst_9 {dimension_numbers = #tpu.dot_dimension_numbers<[1], [1], [0], [0], [0, 0, 1, 0], [], []>} : vector<8x8xf32>, vector<8x8xf32>, vector<8x8xf32> -> vector<8x8xf32>
    %cst_10 = arith.constant dense<0xFF800000> : vector<8xf32>
    %36 = vector.multi_reduction <maximumf>, %35, %cst_10 [1] : vector<8x8xf32> to vector<8xf32>
    %37 = vector.shape_cast %36 : vector<8xf32> to vector<8x1xf32>
    %38 = vector.broadcast %37 : vector<8x1xf32> to vector<8x8xf32>
    %39 = arith.subf %35, %38 : vector<8x8xf32>
    %40 = math.exp %39 : vector<8x8xf32>
    %cst_11 = arith.constant dense<0.000000e+00> : vector<8xf32>
    %41 = vector.multi_reduction <add>, %40, %cst_11 [1] : vector<8x8xf32> to vector<8xf32>
    %42 = vector.shape_cast %41 : vector<8xf32> to vector<8x1xf32>
    %43 = tpu.reciprocal %42 {approx = true} : vector<8x1xf32> -> vector<8x1xf32>
    %44 = vector.broadcast %43 : vector<8x1xf32> to vector<8x8xf32>
    %45 = arith.mulf %40, %44 : vector<8x8xf32>
    %cst_12 = arith.constant dense<0.000000e+00> : vector<8x8xf32>
    %46 = tpu.matmul %45, %34, %cst_12 {dimension_numbers = #tpu.dot_dimension_numbers<[1], [0], [0], [1], [0, 0, 1, 1], [], []>} : vector<8x8xf32>, vector<8x8xf32>, vector<8x8xf32> -> vector<8x8xf32>
    %47 = vector.extract_strided_slice %1 {offsets = [0, 24], sizes = [8, 8], strides = [1, 1]} : vector<8x96xf32> to vector<8x8xf32>
    %48 = vector.extract_strided_slice %1 {offsets = [0, 56], sizes = [8, 8], strides = [1, 1]} : vector<8x96xf32> to vector<8x8xf32>
    %49 = vector.extract_strided_slice %1 {offsets = [0, 88], sizes = [8, 8], strides = [1, 1]} : vector<8x96xf32> to vector<8x8xf32>
    %cst_13 = arith.constant dense<0.000000e+00> : vector<8x8xf32>
    %50 = tpu.matmul %47, %48, %cst_13 {dimension_numbers = #tpu.dot_dimension_numbers<[1], [1], [0], [0], [0, 0, 1, 0], [], []>} : vector<8x8xf32>, vector<8x8xf32>, vector<8x8xf32> -> vector<8x8xf32>
    %cst_14 = arith.constant dense<0xFF800000> : vector<8xf32>
    %51 = vector.multi_reduction <maximumf>, %50, %cst_14 [1] : vector<8x8xf32> to vector<8xf32>
    %52 = vector.shape_cast %51 : vector<8xf32> to vector<8x1xf32>
    %53 = vector.broadcast %52 : vector<8x1xf32> to vector<8x8xf32>
    %54 = arith.subf %50, %53 : vector<8x8xf32>
    %55 = math.exp %54 : vector<8x8xf32>
    %cst_15 = arith.constant dense<0.000000e+00> : vector<8xf32>
    %56 = vector.multi_reduction <add>, %55, %cst_15 [1] : vector<8x8xf32> to vector<8xf32>
    %57 = vector.shape_cast %56 : vector<8xf32> to vector<8x1xf32>
    %58 = tpu.reciprocal %57 {approx = true} : vector<8x1xf32> -> vector<8x1xf32>
    %59 = vector.broadcast %58 : vector<8x1xf32> to vector<8x8xf32>
    %60 = arith.mulf %55, %59 : vector<8x8xf32>
    %cst_16 = arith.constant dense<0.000000e+00> : vector<8x8xf32>
    %61 = tpu.matmul %60, %49, %cst_16 {dimension_numbers = #tpu.dot_dimension_numbers<[1], [0], [0], [1], [0, 0, 1, 1], [], []>} : vector<8x8xf32>, vector<8x8xf32>, vector<8x8xf32> -> vector<8x8xf32>
    %62 = tpu.concatenate %16, %31, %46, %61 in 1 : vector<8x8xf32>, vector<8x8xf32>, vector<8x8xf32>, vector<8x8xf32> -> vector<8x32xf32>
    %c0_17 = arith.constant 0 : index
    %c0_18 = arith.constant 0 : index
    %c0_19 = arith.constant 0 : index
    %63 = vector.load %arg2[%c0_17, %c0_18, %c0_19] : memref<1x8x32xf32, #tpu.memory_space<vmem>>, vector<1x8x32xf32>
    %64 = vector.shape_cast %63 : vector<1x8x32xf32> to vector<8x32xf32>
    %65 = vector.shape_cast %62 : vector<8x32xf32> to vector<1x8x32xf32>
    tpu.vector_store %arg2[%c0_17, %c0_18, %c0_19], %65 {strides = array<i32>} : memref<1x8x32xf32, #tpu.memory_space<vmem>>, vector<1x8x32xf32>,
    return
  }
  func.func @transform_0(%arg0: i32) -> (i32, i32, i32) {
    %c0_i32 = arith.constant 0 : i32
    %c0_i32_0 = arith.constant 0 : i32
    %c0_i32_1 = arith.constant 0 : i32
    return %arg0, %c0_i32, %c0_i32_0 : i32, i32, i32
  }
  func.func @transform_1(%arg0: i32) -> (i32, i32, i32) {
    %c0_i32 = arith.constant 0 : i32
    %c0_i32_0 = arith.constant 0 : i32
    %c0_i32_1 = arith.constant 0 : i32
    return %arg0, %c0_i32, %c0_i32_0 : i32, i32, i32
  }
}

module attributes {stable_mosaic.version = 11 : i64} {
  func.func @_linear_kernel(%arg0: i32, %arg1: i32, %arg2: i32, %arg3: memref<32x32xf32, #tpu.memory_space<vmem>>, %arg4: memref<32x64xf32, #tpu.memory_space<vmem>>, %arg5: memref<1x64xf32, #tpu.memory_space<vmem>>, %arg6: memref<32x64xf32, #tpu.memory_space<vmem>>, %arg7: memref<32x64xf32, #tpu.memory_space<vmem>>) attributes {dimension_semantics = [#tpu.dimension_semantics<parallel>, #tpu.dimension_semantics<parallel>, #tpu.dimension_semantics<arbitrary>], iteration_bounds = array<i64: 1, 1, 1>, scalar_prefetch = 0 : i64, scratch_operands = 1 : i64, tpu.core_type = #tpu.core_type<tc>, window_params = [{transform_indices = @transform_0, window_bounds = array<i64: 32, 32>}, {transform_indices = @transform_1, window_bounds = array<i64: 32, 64>}, {transform_indices = @transform_2, window_bounds = array<i64: 1, 64>}, {transform_indices = @transform_3, window_bounds = array<i64: 32, 64>}]} {
    %c0_i32 = arith.constant 0 : i32
    %0 = arith.cmpi eq, %arg2, %c0_i32 : i32
    %1 = arith.extui %0 : i1 to i32
    %c0_i32_0 = arith.constant 0 : i32
    %2 = arith.cmpi ne, %1, %c0_i32_0 : i32
    scf.if %2 {
      %cst_10 = arith.constant 0.000000e+00 : f32
      %12 = vector.broadcast %cst_10 : f32 to vector<32x64xf32>
      %c0_11 = arith.constant 0 : index
      %c0_12 = arith.constant 0 : index
      %13 = vector.load %arg7[%c0_11, %c0_12] : memref<32x64xf32, #tpu.memory_space<vmem>>, vector<32x64xf32>
      tpu.vector_store %arg7[%c0_11, %c0_12], %12 {strides = array<i32>} : memref<32x64xf32, #tpu.memory_space<vmem>>, vector<32x64xf32>,
    } else {
    }
    %c0 = arith.constant 0 : index
    %c0_1 = arith.constant 0 : index
    %3 = vector.load %arg7[%c0, %c0_1] : memref<32x64xf32, #tpu.memory_space<vmem>>, vector<32x64xf32>
    %c0_2 = arith.constant 0 : index
    %c0_3 = arith.constant 0 : index
    %4 = vector.load %arg3[%c0_2, %c0_3] : memref<32x32xf32, #tpu.memory_space<vmem>>, vector<32x32xf32>
    %c0_4 = arith.constant 0 : index
    %c0_5 = arith.constant 0 : index
    %5 = vector.load %arg4[%c0_4, %c0_5] : memref<32x64xf32, #tpu.memory_space<vmem>>, vector<32x64xf32>
    %cst = arith.constant dense<0.000000e+00> : vector<32x64xf32>
    %6 = tpu.matmul %4, %5, %cst {dimension_numbers = #tpu.dot_dimension_numbers<[1], [0], [0], [1], [0, 0, 1, 1], [], []>} : vector<32x32xf32>, vector<32x64xf32>, vector<32x64xf32> -> vector<32x64xf32>
    %7 = arith.addf %3, %6 : vector<32x64xf32>
    %c0_6 = arith.constant 0 : index
    %c0_7 = arith.constant 0 : index
    %8 = vector.load %arg7[%c0_6, %c0_7] : memref<32x64xf32, #tpu.memory_space<vmem>>, vector<32x64xf32>
    tpu.vector_store %arg7[%c0_6, %c0_7], %7 {strides = array<i32>} : memref<32x64xf32, #tpu.memory_space<vmem>>, vector<32x64xf32>,
    %c0_i32_8 = arith.constant 0 : i32
    %9 = arith.cmpi eq, %arg2, %c0_i32_8 : i32
    %10 = arith.extui %9 : i1 to i32
    %c0_i32_9 = arith.constant 0 : i32
    %11 = arith.cmpi ne, %10, %c0_i32_9 : i32
    scf.if %11 {
      %c0_10 = arith.constant 0 : index
      %c0_11 = arith.constant 0 : index
      %12 = vector.load %arg7[%c0_10, %c0_11] : memref<32x64xf32, #tpu.memory_space<vmem>>, vector<32x64xf32>
      %c0_12 = arith.constant 0 : index
      %c0_13 = arith.constant 0 : index
      %13 = vector.load %arg5[%c0_12, %c0_13] : memref<1x64xf32, #tpu.memory_space<vmem>>, vector<1x64xf32>
      %14 = vector.broadcast %13 : vector<1x64xf32> to vector<32x64xf32>
      %15 = arith.addf %12, %14 : vector<32x64xf32>
      %c0_14 = arith.constant 0 : index
      %c0_15 = arith.constant 0 : index
      %16 = vector.load %arg6[%c0_14, %c0_15] : memref<32x64xf32, #tpu.memory_space<vmem>>, vector<32x64xf32>
      tpu.vector_store %arg6[%c0_14, %c0_15], %15 {strides = array<i32>} : memref<32x64xf32, #tpu.memory_space<vmem>>, vector<32x64xf32>,
    } else {
    }
    return
  }
  func.func @transform_0(%arg0: i32, %arg1: i32, %arg2: i32) -> (i32, i32) {
    %c0_i32 = arith.constant 0 : i32
    return %arg0, %arg2 : i32, i32
  }
  func.func @transform_1(%arg0: i32, %arg1: i32, %arg2: i32) -> (i32, i32) {
    %c0_i32 = arith.constant 0 : i32
    return %arg2, %arg1 : i32, i32
  }
  func.func @transform_2(%arg0: i32, %arg1: i32, %arg2: i32) -> (i32, i32) {
    %c0_i32 = arith.constant 0 : i32
    %c0_i32_0 = arith.constant 0 : i32
    return %c0_i32, %arg1 : i32, i32
  }
  func.func @transform_3(%arg0: i32, %arg1: i32, %arg2: i32) -> (i32, i32) {
    %c0_i32 = arith.constant 0 : i32
    return %arg0, %arg1 : i32, i32
  }
}

module attributes {stable_mosaic.version = 11 : i64} {
  func.func @_mha_cross_kernel(%arg0: i32, %arg1: memref<1x8x32xf32, #tpu.memory_space<vmem>>, %arg2: memref<1x16x64xf32, #tpu.memory_space<vmem>>, %arg3: memref<1x8x32xf32, #tpu.memory_space<vmem>>) attributes {dimension_semantics = [#tpu.dimension_semantics<parallel>], iteration_bounds = array<i64: 2>, scalar_prefetch = 0 : i64, scratch_operands = 0 : i64, tpu.core_type = #tpu.core_type<tc>, window_params = [{transform_indices = @transform_0, window_bounds = array<i64: 1, 8, 32>}, {transform_indices = @transform_1, window_bounds = array<i64: 1, 16, 64>}, {transform_indices = @transform_2, window_bounds = array<i64: 1, 8, 32>}]} {
    %c0 = arith.constant 0 : index
    %c0_0 = arith.constant 0 : index
    %c0_1 = arith.constant 0 : index
    %0 = vector.load %arg1[%c0, %c0_0, %c0_1] : memref<1x8x32xf32, #tpu.memory_space<vmem>>, vector<1x8x32xf32>
    %1 = vector.shape_cast %0 : vector<1x8x32xf32> to vector<8x32xf32>
    %c0_2 = arith.constant 0 : index
    %c0_3 = arith.constant 0 : index
    %c0_4 = arith.constant 0 : index
    %2 = vector.load %arg2[%c0_2, %c0_3, %c0_4] : memref<1x16x64xf32, #tpu.memory_space<vmem>>, vector<1x16x64xf32>
    %3 = vector.shape_cast %2 : vector<1x16x64xf32> to vector<16x64xf32>
    %4 = vector.extract_strided_slice %1 {offsets = [0, 0], sizes = [8, 8], strides = [1, 1]} : vector<8x32xf32> to vector<8x8xf32>
    %5 = vector.extract_strided_slice %3 {offsets = [0, 0], sizes = [16, 8], strides = [1, 1]} : vector<16x64xf32> to vector<16x8xf32>
    %6 = vector.extract_strided_slice %3 {offsets = [0, 32], sizes = [16, 8], strides = [1, 1]} : vector<16x64xf32> to vector<16x8xf32>
    %cst = arith.constant dense<0.000000e+00> : vector<8x16xf32>
    %7 = tpu.matmul %4, %5, %cst {dimension_numbers = #tpu.dot_dimension_numbers<[1], [1], [0], [0], [0, 0, 1, 0], [], []>} : vector<8x8xf32>, vector<16x8xf32>, vector<8x16xf32> -> vector<8x16xf32>
    %cst_5 = arith.constant dense<0xFF800000> : vector<8xf32>
    %8 = vector.multi_reduction <maximumf>, %7, %cst_5 [1] : vector<8x16xf32> to vector<8xf32>
    %9 = vector.shape_cast %8 : vector<8xf32> to vector<8x1xf32>
    %10 = vector.broadcast %9 : vector<8x1xf32> to vector<8x16xf32>
    %11 = arith.subf %7, %10 : vector<8x16xf32>
    %12 = math.exp %11 : vector<8x16xf32>
    %cst_6 = arith.constant dense<0.000000e+00> : vector<8xf32>
    %13 = vector.multi_reduction <add>, %12, %cst_6 [1] : vector<8x16xf32> to vector<8xf32>
    %14 = vector.shape_cast %13 : vector<8xf32> to vector<8x1xf32>
    %15 = tpu.reciprocal %14 {approx = true} : vector<8x1xf32> -> vector<8x1xf32>
    %16 = vector.broadcast %15 : vector<8x1xf32> to vector<8x16xf32>
    %17 = arith.mulf %12, %16 : vector<8x16xf32>
    %cst_7 = arith.constant dense<0.000000e+00> : vector<8x8xf32>
    %18 = tpu.matmul %17, %6, %cst_7 {dimension_numbers = #tpu.dot_dimension_numbers<[1], [0], [0], [1], [0, 0, 1, 1], [], []>} : vector<8x16xf32>, vector<16x8xf32>, vector<8x8xf32> -> vector<8x8xf32>
    %19 = vector.extract_strided_slice %1 {offsets = [0, 8], sizes = [8, 8], strides = [1, 1]} : vector<8x32xf32> to vector<8x8xf32>
    %20 = vector.extract_strided_slice %3 {offsets = [0, 8], sizes = [16, 8], strides = [1, 1]} : vector<16x64xf32> to vector<16x8xf32>
    %21 = vector.extract_strided_slice %3 {offsets = [0, 40], sizes = [16, 8], strides = [1, 1]} : vector<16x64xf32> to vector<16x8xf32>
    %cst_8 = arith.constant dense<0.000000e+00> : vector<8x16xf32>
    %22 = tpu.matmul %19, %20, %cst_8 {dimension_numbers = #tpu.dot_dimension_numbers<[1], [1], [0], [0], [0, 0, 1, 0], [], []>} : vector<8x8xf32>, vector<16x8xf32>, vector<8x16xf32> -> vector<8x16xf32>
    %cst_9 = arith.constant dense<0xFF800000> : vector<8xf32>
    %23 = vector.multi_reduction <maximumf>, %22, %cst_9 [1] : vector<8x16xf32> to vector<8xf32>
    %24 = vector.shape_cast %23 : vector<8xf32> to vector<8x1xf32>
    %25 = vector.broadcast %24 : vector<8x1xf32> to vector<8x16xf32>
    %26 = arith.subf %22, %25 : vector<8x16xf32>
    %27 = math.exp %26 : vector<8x16xf32>
    %cst_10 = arith.constant dense<0.000000e+00> : vector<8xf32>
    %28 = vector.multi_reduction <add>, %27, %cst_10 [1] : vector<8x16xf32> to vector<8xf32>
    %29 = vector.shape_cast %28 : vector<8xf32> to vector<8x1xf32>
    %30 = tpu.reciprocal %29 {approx = true} : vector<8x1xf32> -> vector<8x1xf32>
    %31 = vector.broadcast %30 : vector<8x1xf32> to vector<8x16xf32>
    %32 = arith.mulf %27, %31 : vector<8x16xf32>
    %cst_11 = arith.constant dense<0.000000e+00> : vector<8x8xf32>
    %33 = tpu.matmul %32, %21, %cst_11 {dimension_numbers = #tpu.dot_dimension_numbers<[1], [0], [0], [1], [0, 0, 1, 1], [], []>} : vector<8x16xf32>, vector<16x8xf32>, vector<8x8xf32> -> vector<8x8xf32>
    %34 = vector.extract_strided_slice %1 {offsets = [0, 16], sizes = [8, 8], strides = [1, 1]} : vector<8x32xf32> to vector<8x8xf32>
    %35 = vector.extract_strided_slice %3 {offsets = [0, 16], sizes = [16, 8], strides = [1, 1]} : vector<16x64xf32> to vector<16x8xf32>
    %36 = vector.extract_strided_slice %3 {offsets = [0, 48], sizes = [16, 8], strides = [1, 1]} : vector<16x64xf32> to vector<16x8xf32>
    %cst_12 = arith.constant dense<0.000000e+00> : vector<8x16xf32>
    %37 = tpu.matmul %34, %35, %cst_12 {dimension_numbers = #tpu.dot_dimension_numbers<[1], [1], [0], [0], [0, 0, 1, 0], [], []>} : vector<8x8xf32>, vector<16x8xf32>, vector<8x16xf32> -> vector<8x16xf32>
    %cst_13 = arith.constant dense<0xFF800000> : vector<8xf32>
    %38 = vector.multi_reduction <maximumf>, %37, %cst_13 [1] : vector<8x16xf32> to vector<8xf32>
    %39 = vector.shape_cast %38 : vector<8xf32> to vector<8x1xf32>
    %40 = vector.broadcast %39 : vector<8x1xf32> to vector<8x16xf32>
    %41 = arith.subf %37, %40 : vector<8x16xf32>
    %42 = math.exp %41 : vector<8x16xf32>
    %cst_14 = arith.constant dense<0.000000e+00> : vector<8xf32>
    %43 = vector.multi_reduction <add>, %42, %cst_14 [1] : vector<8x16xf32> to vector<8xf32>
    %44 = vector.shape_cast %43 : vector<8xf32> to vector<8x1xf32>
    %45 = tpu.reciprocal %44 {approx = true} : vector<8x1xf32> -> vector<8x1xf32>
    %46 = vector.broadcast %45 : vector<8x1xf32> to vector<8x16xf32>
    %47 = arith.mulf %42, %46 : vector<8x16xf32>
    %cst_15 = arith.constant dense<0.000000e+00> : vector<8x8xf32>
    %48 = tpu.matmul %47, %36, %cst_15 {dimension_numbers = #tpu.dot_dimension_numbers<[1], [0], [0], [1], [0, 0, 1, 1], [], []>} : vector<8x16xf32>, vector<16x8xf32>, vector<8x8xf32> -> vector<8x8xf32>
    %49 = vector.extract_strided_slice %1 {offsets = [0, 24], sizes = [8, 8], strides = [1, 1]} : vector<8x32xf32> to vector<8x8xf32>
    %50 = vector.extract_strided_slice %3 {offsets = [0, 24], sizes = [16, 8], strides = [1, 1]} : vector<16x64xf32> to vector<16x8xf32>
    %51 = vector.extract_strided_slice %3 {offsets = [0, 56], sizes = [16, 8], strides = [1, 1]} : vector<16x64xf32> to vector<16x8xf32>
    %cst_16 = arith.constant dense<0.000000e+00> : vector<8x16xf32>
    %52 = tpu.matmul %49, %50, %cst_16 {dimension_numbers = #tpu.dot_dimension_numbers<[1], [1], [0], [0], [0, 0, 1, 0], [], []>} : vector<8x8xf32>, vector<16x8xf32>, vector<8x16xf32> -> vector<8x16xf32>
    %cst_17 = arith.constant dense<0xFF800000> : vector<8xf32>
    %53 = vector.multi_reduction <maximumf>, %52, %cst_17 [1] : vector<8x16xf32> to vector<8xf32>
    %54 = vector.shape_cast %53 : vector<8xf32> to vector<8x1xf32>
    %55 = vector.broadcast %54 : vector<8x1xf32> to vector<8x16xf32>
    %56 = arith.subf %52, %55 : vector<8x16xf32>
    %57 = math.exp %56 : vector<8x16xf32>
    %cst_18 = arith.constant dense<0.000000e+00> : vector<8xf32>
    %58 = vector.multi_reduction <add>, %57, %cst_18 [1] : vector<8x16xf32> to vector<8xf32>
    %59 = vector.shape_cast %58 : vector<8xf32> to vector<8x1xf32>
    %60 = tpu.reciprocal %59 {approx = true} : vector<8x1xf32> -> vector<8x1xf32>
    %61 = vector.broadcast %60 : vector<8x1xf32> to vector<8x16xf32>
    %62 = arith.mulf %57, %61 : vector<8x16xf32>
    %cst_19 = arith.constant dense<0.000000e+00> : vector<8x8xf32>
    %63 = tpu.matmul %62, %51, %cst_19 {dimension_numbers = #tpu.dot_dimension_numbers<[1], [0], [0], [1], [0, 0, 1, 1], [], []>} : vector<8x16xf32>, vector<16x8xf32>, vector<8x8xf32> -> vector<8x8xf32>
    %64 = tpu.concatenate %18, %33, %48, %63 in 1 : vector<8x8xf32>, vector<8x8xf32>, vector<8x8xf32>, vector<8x8xf32> -> vector<8x32xf32>
    %c0_20 = arith.constant 0 : index
    %c0_21 = arith.constant 0 : index
    %c0_22 = arith.constant 0 : index
    %65 = vector.load %arg3[%c0_20, %c0_21, %c0_22] : memref<1x8x32xf32, #tpu.memory_space<vmem>>, vector<1x8x32xf32>
    %66 = vector.shape_cast %65 : vector<1x8x32xf32> to vector<8x32xf32>
    %67 = vector.shape_cast %64 : vector<8x32xf32> to vector<1x8x32xf32>
    tpu.vector_store %arg3[%c0_20, %c0_21, %c0_22], %67 {strides = array<i32>} : memref<1x8x32xf32, #tpu.memory_space<vmem>>, vector<1x8x32xf32>,
    return
  }
  func.func @transform_0(%arg0: i32) -> (i32, i32, i32) {
    %c0_i32 = arith.constant 0 : i32
    %c0_i32_0 = arith.constant 0 : i32
    %c0_i32_1 = arith.constant 0 : i32
    return %arg0, %c0_i32, %c0_i32_0 : i32, i32, i32
  }
  func.func @transform_1(%arg0: i32) -> (i32, i32, i32) {
    %c0_i32 = arith.constant 0 : i32
    %c0_i32_0 = arith.constant 0 : i32
    %c0_i32_1 = arith.constant 0 : i32
    return %arg0, %c0_i32, %c0_i32_0 : i32, i32, i32
  }
  func.func @transform_2(%arg0: i32) -> (i32, i32, i32) {
    %c0_i32 = arith.constant 0 : i32
    %c0_i32_0 = arith.constant 0 : i32
    %c0_i32_1 = arith.constant 0 : i32
    return %arg0, %c0_i32, %c0_i32_0 : i32, i32, i32
  }
}

module attributes {stable_mosaic.version = 11 : i64} {
  func.func @_linear_kernel(%arg0: i32, %arg1: i32, %arg2: i32, %arg3: memref<16x32xf32, #tpu.memory_space<vmem>>, %arg4: memref<32x64xf32, #tpu.memory_space<vmem>>, %arg5: memref<1x64xf32, #tpu.memory_space<vmem>>, %arg6: memref<16x64xf32, #tpu.memory_space<vmem>>, %arg7: memref<16x64xf32, #tpu.memory_space<vmem>>) attributes {dimension_semantics = [#tpu.dimension_semantics<parallel>, #tpu.dimension_semantics<parallel>, #tpu.dimension_semantics<arbitrary>], iteration_bounds = array<i64: 1, 1, 1>, scalar_prefetch = 0 : i64, scratch_operands = 1 : i64, tpu.core_type = #tpu.core_type<tc>, window_params = [{transform_indices = @transform_0, window_bounds = array<i64: 16, 32>}, {transform_indices = @transform_1, window_bounds = array<i64: 32, 64>}, {transform_indices = @transform_2, window_bounds = array<i64: 1, 64>}, {transform_indices = @transform_3, window_bounds = array<i64: 16, 64>}]} {
    %c0_i32 = arith.constant 0 : i32
    %0 = arith.cmpi eq, %arg2, %c0_i32 : i32
    %1 = arith.extui %0 : i1 to i32
    %c0_i32_0 = arith.constant 0 : i32
    %2 = arith.cmpi ne, %1, %c0_i32_0 : i32
    scf.if %2 {
      %cst_10 = arith.constant 0.000000e+00 : f32
      %12 = vector.broadcast %cst_10 : f32 to vector<16x64xf32>
      %c0_11 = arith.constant 0 : index
      %c0_12 = arith.constant 0 : index
      %13 = vector.load %arg7[%c0_11, %c0_12] : memref<16x64xf32, #tpu.memory_space<vmem>>, vector<16x64xf32>
      tpu.vector_store %arg7[%c0_11, %c0_12], %12 {strides = array<i32>} : memref<16x64xf32, #tpu.memory_space<vmem>>, vector<16x64xf32>,
    } else {
    }
    %c0 = arith.constant 0 : index
    %c0_1 = arith.constant 0 : index
    %3 = vector.load %arg7[%c0, %c0_1] : memref<16x64xf32, #tpu.memory_space<vmem>>, vector<16x64xf32>
    %c0_2 = arith.constant 0 : index
    %c0_3 = arith.constant 0 : index
    %4 = vector.load %arg3[%c0_2, %c0_3] : memref<16x32xf32, #tpu.memory_space<vmem>>, vector<16x32xf32>
    %c0_4 = arith.constant 0 : index
    %c0_5 = arith.constant 0 : index
    %5 = vector.load %arg4[%c0_4, %c0_5] : memref<32x64xf32, #tpu.memory_space<vmem>>, vector<32x64xf32>
    %cst = arith.constant dense<0.000000e+00> : vector<16x64xf32>
    %6 = tpu.matmul %4, %5, %cst {dimension_numbers = #tpu.dot_dimension_numbers<[1], [0], [0], [1], [0, 0, 1, 1], [], []>} : vector<16x32xf32>, vector<32x64xf32>, vector<16x64xf32> -> vector<16x64xf32>
    %7 = arith.addf %3, %6 : vector<16x64xf32>
    %c0_6 = arith.constant 0 : index
    %c0_7 = arith.constant 0 : index
    %8 = vector.load %arg7[%c0_6, %c0_7] : memref<16x64xf32, #tpu.memory_space<vmem>>, vector<16x64xf32>
    tpu.vector_store %arg7[%c0_6, %c0_7], %7 {strides = array<i32>} : memref<16x64xf32, #tpu.memory_space<vmem>>, vector<16x64xf32>,
    %c0_i32_8 = arith.constant 0 : i32
    %9 = arith.cmpi eq, %arg2, %c0_i32_8 : i32
    %10 = arith.extui %9 : i1 to i32
    %c0_i32_9 = arith.constant 0 : i32
    %11 = arith.cmpi ne, %10, %c0_i32_9 : i32
    scf.if %11 {
      %c0_10 = arith.constant 0 : index
      %c0_11 = arith.constant 0 : index
      %12 = vector.load %arg7[%c0_10, %c0_11] : memref<16x64xf32, #tpu.memory_space<vmem>>, vector<16x64xf32>
      %c0_12 = arith.constant 0 : index
      %c0_13 = arith.constant 0 : index
      %13 = vector.load %arg5[%c0_12, %c0_13] : memref<1x64xf32, #tpu.memory_space<vmem>>, vector<1x64xf32>
      %14 = vector.broadcast %13 : vector<1x64xf32> to vector<16x64xf32>
      %15 = arith.addf %12, %14 : vector<16x64xf32>
      %cst_14 = arith.constant 0.000000e+00 : f32
      %16 = vector.broadcast %cst_14 : f32 to vector<16x64xf32>
      %17 = arith.maximumf %15, %16 : vector<16x64xf32>
      %c0_15 = arith.constant 0 : index
      %c0_16 = arith.constant 0 : index
      %18 = vector.load %arg6[%c0_15, %c0_16] : memref<16x64xf32, #tpu.memory_space<vmem>>, vector<16x64xf32>
      tpu.vector_store %arg6[%c0_15, %c0_16], %17 {strides = array<i32>} : memref<16x64xf32, #tpu.memory_space<vmem>>, vector<16x64xf32>,
    } else {
    }
    return
  }
  func.func @transform_0(%arg0: i32, %arg1: i32, %arg2: i32) -> (i32, i32) {
    %c0_i32 = arith.constant 0 : i32
    return %arg0, %arg2 : i32, i32
  }
  func.func @transform_1(%arg0: i32, %arg1: i32, %arg2: i32) -> (i32, i32) {
    %c0_i32 = arith.constant 0 : i32
    return %arg2, %arg1 : i32, i32
  }
  func.func @transform_2(%arg0: i32, %arg1: i32, %arg2: i32) -> (i32, i32) {
    %c0_i32 = arith.constant 0 : i32
    %c0_i32_0 = arith.constant 0 : i32
    return %c0_i32, %arg1 : i32, i32
  }
  func.func @transform_3(%arg0: i32, %arg1: i32, %arg2: i32) -> (i32, i32) {
    %c0_i32 = arith.constant 0 : i32
    return %arg0, %arg1 : i32, i32
  }
}

module attributes {stable_mosaic.version = 11 : i64} {
  func.func @_linear_addln_kernel(%arg0: i32, %arg1: i32, %arg2: memref<16x64xf32, #tpu.memory_space<vmem>>, %arg3: memref<64x32xf32, #tpu.memory_space<vmem>>, %arg4: memref<1x32xf32, #tpu.memory_space<vmem>>, %arg5: memref<16x32xf32, #tpu.memory_space<vmem>>, %arg6: memref<1x32xf32, #tpu.memory_space<vmem>>, %arg7: memref<1x32xf32, #tpu.memory_space<vmem>>, %arg8: memref<16x32xf32, #tpu.memory_space<vmem>>, %arg9: memref<16x32xf32, #tpu.memory_space<vmem>>) attributes {dimension_semantics = [#tpu.dimension_semantics<parallel>, #tpu.dimension_semantics<arbitrary>], iteration_bounds = array<i64: 1, 1>, scalar_prefetch = 0 : i64, scratch_operands = 1 : i64, tpu.core_type = #tpu.core_type<tc>, window_params = [{transform_indices = @transform_0, window_bounds = array<i64: 16, 64>}, {transform_indices = @transform_1, window_bounds = array<i64: 64, 32>}, {pipeline_mode = #tpu.pipeline_mode<synchronous>, transform_indices = @transform_2, window_bounds = array<i64: 1, 32>}, {transform_indices = @transform_3, window_bounds = array<i64: 16, 32>}, {pipeline_mode = #tpu.pipeline_mode<synchronous>, transform_indices = @transform_4, window_bounds = array<i64: 1, 32>}, {pipeline_mode = #tpu.pipeline_mode<synchronous>, transform_indices = @transform_5, window_bounds = array<i64: 1, 32>}, {transform_indices = @transform_6, window_bounds = array<i64: 16, 32>}]} {
    %c0_i32 = arith.constant 0 : i32
    %0 = arith.cmpi eq, %arg1, %c0_i32 : i32
    %1 = arith.extui %0 : i1 to i32
    %c0_i32_0 = arith.constant 0 : i32
    %2 = arith.cmpi ne, %1, %c0_i32_0 : i32
    scf.if %2 {
      %cst_10 = arith.constant 0.000000e+00 : f32
      %12 = vector.broadcast %cst_10 : f32 to vector<16x32xf32>
      %c0_11 = arith.constant 0 : index
      %c0_12 = arith.constant 0 : index
      %13 = vector.load %arg9[%c0_11, %c0_12] : memref<16x32xf32, #tpu.memory_space<vmem>>, vector<16x32xf32>
      tpu.vector_store %arg9[%c0_11, %c0_12], %12 {strides = array<i32>} : memref<16x32xf32, #tpu.memory_space<vmem>>, vector<16x32xf32>,
    } else {
    }
    %c0 = arith.constant 0 : index
    %c0_1 = arith.constant 0 : index
    %3 = vector.load %arg9[%c0, %c0_1] : memref<16x32xf32, #tpu.memory_space<vmem>>, vector<16x32xf32>
    %c0_2 = arith.constant 0 : index
    %c0_3 = arith.constant 0 : index
    %4 = vector.load %arg2[%c0_2, %c0_3] : memref<16x64xf32, #tpu.memory_space<vmem>>, vector<16x64xf32>
    %c0_4 = arith.constant 0 : index
    %c0_5 = arith.constant 0 : index
    %5 = vector.load %arg3[%c0_4, %c0_5] : memref<64x32xf32, #tpu.memory_space<vmem>>, vector<64x32xf32>
    %cst = arith.constant dense<0.000000e+00> : vector<16x32xf32>
    %6 = tpu.matmul %4, %5, %cst {dimension_numbers = #tpu.dot_dimension_numbers<[1], [0], [0], [1], [0, 0, 1, 1], [], []>} : vector<16x64xf32>, vector<64x32xf32>, vector<16x32xf32> -> vector<16x32xf32>
    %7 = arith.addf %3, %6 : vector<16x32xf32>
    %c0_6 = arith.constant 0 : index
    %c0_7 = arith.constant 0 : index
    %8 = vector.load %arg9[%c0_6, %c0_7] : memref<16x32xf32, #tpu.memory_space<vmem>>, vector<16x32xf32>
    tpu.vector_store %arg9[%c0_6, %c0_7], %7 {strides = array<i32>} : memref<16x32xf32, #tpu.memory_space<vmem>>, vector<16x32xf32>,
    %c0_i32_8 = arith.constant 0 : i32
    %9 = arith.cmpi eq, %arg1, %c0_i32_8 : i32
    %10 = arith.extui %9 : i1 to i32
    %c0_i32_9 = arith.constant 0 : i32
    %11 = arith.cmpi ne, %10, %c0_i32_9 : i32
    scf.if %11 {
      %c0_10 = arith.constant 0 : index
      %c0_11 = arith.constant 0 : index
      %12 = vector.load %arg9[%c0_10, %c0_11] : memref<16x32xf32, #tpu.memory_space<vmem>>, vector<16x32xf32>
      %c0_12 = arith.constant 0 : index
      %c0_13 = arith.constant 0 : index
      %13 = vector.load %arg4[%c0_12, %c0_13] : memref<1x32xf32, #tpu.memory_space<vmem>>, vector<1x32xf32>
      %14 = vector.broadcast %13 : vector<1x32xf32> to vector<16x32xf32>
      %15 = arith.addf %12, %14 : vector<16x32xf32>
      %c0_14 = arith.constant 0 : index
      %c0_15 = arith.constant 0 : index
      %16 = vector.load %arg5[%c0_14, %c0_15] : memref<16x32xf32, #tpu.memory_space<vmem>>, vector<16x32xf32>
      %17 = arith.addf %15, %16 : vector<16x32xf32>
      %cst_16 = arith.constant dense<0.000000e+00> : vector<16xf32>
      %18 = vector.multi_reduction <add>, %17, %cst_16 [1] : vector<16x32xf32> to vector<16xf32>
      %19 = vector.shape_cast %18 : vector<16xf32> to vector<16x1xf32>
      %cst_17 = arith.constant 3.200000e+01 : f32
      %20 = vector.broadcast %cst_17 : f32 to vector<16x1xf32>
      %21 = arith.divf %19, %20 : vector<16x1xf32>
      %22 = vector.broadcast %21 : vector<16x1xf32> to vector<16x32xf32>
      %23 = arith.subf %17, %22 : vector<16x32xf32>
      %24 = arith.mulf %23, %23 : vector<16x32xf32>
      %cst_18 = arith.constant dense<0.000000e+00> : vector<16xf32>
      %25 = vector.multi_reduction <add>, %24, %cst_18 [1] : vector<16x32xf32> to vector<16xf32>
      %26 = vector.shape_cast %25 : vector<16xf32> to vector<16x1xf32>
      %cst_19 = arith.constant 3.200000e+01 : f32
      %27 = vector.broadcast %cst_19 : f32 to vector<16x1xf32>
      %28 = arith.divf %26, %27 : vector<16x1xf32>
      %cst_20 = arith.constant 9.99999974E-6 : f32
      %29 = vector.broadcast %cst_20 : f32 to vector<16x1xf32>
      %30 = arith.addf %28, %29 : vector<16x1xf32>
      %31 = math.rsqrt %30 : vector<16x1xf32>
      %32 = vector.broadcast %31 : vector<16x1xf32> to vector<16x32xf32>
      %33 = arith.mulf %23, %32 : vector<16x32xf32>
      %c0_21 = arith.constant 0 : index
      %c0_22 = arith.constant 0 : index
      %34 = vector.load %arg6[%c0_21, %c0_22] : memref<1x32xf32, #tpu.memory_space<vmem>>, vector<1x32xf32>
      %35 = vector.broadcast %34 : vector<1x32xf32> to vector<16x32xf32>
      %36 = arith.mulf %33, %35 : vector<16x32xf32>
      %c0_23 = arith.constant 0 : index
      %c0_24 = arith.constant 0 : index
      %37 = vector.load %arg7[%c0_23, %c0_24] : memref<1x32xf32, #tpu.memory_space<vmem>>, vector<1x32xf32>
      %38 = vector.broadcast %37 : vector<1x32xf32> to vector<16x32xf32>
      %39 = arith.addf %36, %38 : vector<16x32xf32>
      %c0_25 = arith.constant 0 : index
      %c0_26 = arith.constant 0 : index
      %40 = vector.load %arg8[%c0_25, %c0_26] : memref<16x32xf32, #tpu.memory_space<vmem>>, vector<16x32xf32>
      tpu.vector_store %arg8[%c0_25, %c0_26], %39 {strides = array<i32>} : memref<16x32xf32, #tpu.memory_space<vmem>>, vector<16x32xf32>,
    } else {
    }
    return
  }
  func.func @transform_0(%arg0: i32, %arg1: i32) -> (i32, i32) {
    %c0_i32 = arith.constant 0 : i32
    return %arg0, %arg1 : i32, i32
  }
  func.func @transform_1(%arg0: i32, %arg1: i32) -> (i32, i32) {
    %c0_i32 = arith.constant 0 : i32
    %c0_i32_0 = arith.constant 0 : i32
    return %arg1, %c0_i32 : i32, i32
  }
  func.func @transform_2(%arg0: i32, %arg1: i32) -> (i32, i32) {
    %c0_i32 = arith.constant 0 : i32
    %c0_i32_0 = arith.constant 0 : i32
    %c0_i32_1 = arith.constant 0 : i32
    return %c0_i32, %c0_i32_0 : i32, i32
  }
  func.func @transform_3(%arg0: i32, %arg1: i32) -> (i32, i32) {
    %c0_i32 = arith.constant 0 : i32
    %c0_i32_0 = arith.constant 0 : i32
    return %arg0, %c0_i32 : i32, i32
  }
  func.func @transform_4(%arg0: i32, %arg1: i32) -> (i32, i32) {
    %c0_i32 = arith.constant 0 : i32
    %c0_i32_0 = arith.constant 0 : i32
    %c0_i32_1 = arith.constant 0 : i32
    return %c0_i32, %c0_i32_0 : i32, i32
  }
  func.func @transform_5(%arg0: i32, %arg1: i32) -> (i32, i32) {
    %c0_i32 = arith.constant 0 : i32
    %c0_i32_0 = arith.constant 0 : i32
    %c0_i32_1 = arith.constant 0 : i32
    return %c0_i32, %c0_i32_0 : i32, i32
  }
  func.func @transform_6(%arg0: i32, %arg1: i32) -> (i32, i32) {
    %c0_i32 = arith.constant 0 : i32
    %c0_i32_0 = arith.constant 0 : i32
    return %arg0, %c0_i32 : i32, i32
  }
}

</mosaic_0001>

<llo_original>
// kernel: transformer_decoder_layer.11
$region0: #{transformer_decoder_layer.11}
  #allocation0 [shape = 'u32[]', space=smem, size = 0x4, offset = 0x4, fixed_abs, tag = 'smem constant byte address 0x4 - core index']
  #allocation1 [shape = 'u32[144,128]{1,0:T(1,128)}', space=vmem, size = 0x12000, scoped, tag = 'internal scratch']
  #allocation2 [shape = 'f32[16,32]{1,0:T(8,128)}', space=vmem, size = 0x2000, scoped, tag = 'scratch operand']
  %s0 = inlined_call_operand.vmem [shape: f32[16,32], index: 0, kind: input, shape index: {}]
  %s1 = inlined_call_operand.vmem [shape: f32[32,32], index: 1, kind: input, shape index: {}]
  %s2 = inlined_call_operand.vmem [shape: f32[1,32], index: 2, kind: input, shape index: {}]
  %s3 = inlined_call_operand.vmem [shape: f32[16,32], index: 3, kind: input, shape index: {}]
  %s4 = inlined_call_operand.vmem [shape: f32[1,32], index: 4, kind: input, shape index: {}]
  %s5 = inlined_call_operand.vmem [shape: f32[1,32], index: 5, kind: input, shape index: {}]
  %s6 = inlined_call_operand.vmem [shape: f32[16,32], index: 6, kind: output, shape index: {}]
  %s7 = sld [smem:[#allocation0]]
  $region42: #{transformer_decoder_layer.11} parent=0
    _
  %s9 = ssub.s32 1, %s7
  %s10 = scalar_select 0, %s9, %s7
  // Predicated region
  $region2: #{transformer_decoder_layer.11} parent=0 // pred_check
    _
  $region3: #{transformer_decoder_layer.11} parent=0 // pred_check_branch
    %12 = sbr.rel (0) target = $region5
  $region4: #{transformer_decoder_layer.11} parent=0 // pred_region
    _
  $region5: #{transformer_decoder_layer.11} parent=0 // pred_fallthru
    _
  // Predicated region
  $region6: #{transformer_decoder_layer.11} parent=0 // pred_check
    _
  $region7: #{transformer_decoder_layer.11} parent=0 // pred_check_branch
    %14 = sbr.rel (0) target = $region9
  $region8: #{transformer_decoder_layer.11} parent=0 // pred_region
    _
  $region9: #{transformer_decoder_layer.11} parent=0 // pred_fallthru
    _
  // Predicated region
  $region10: #{transformer_decoder_layer.11} parent=0 // pred_check
    _
  $region11: #{transformer_decoder_layer.11} parent=0 // pred_check_branch
    %16 = sbr.rel (0) target = $region13
  $region12: #{transformer_decoder_layer.11} parent=0 // pred_region
    _
  $region13: #{transformer_decoder_layer.11} parent=0 // pred_fallthru
    _
  // Predicated region
  $region14: #{transformer_decoder_layer.11} parent=0 // pred_check
    _
  $region15: #{transformer_decoder_layer.11} parent=0 // pred_check_branch
    %18 = sbr.rel (0) target = $region17
  $region16: #{transformer_decoder_layer.11} parent=0 // pred_region
    _
  $region17: #{transformer_decoder_layer.11} parent=0 // pred_fallthru
    _
  // Predicated region
  $region18: #{transformer_decoder_layer.11} parent=0 // pred_check
    _
  $region19: #{transformer_decoder_layer.11} parent=0 // pred_check_branch
    %20 = sbr.rel (0) target = $region21
  $region20: #{transformer_decoder_layer.11} parent=0 // pred_region
    _
  $region21: #{transformer_decoder_layer.11} parent=0 // pred_fallthru
    _
  // Predicated region
  $region22: #{transformer_decoder_layer.11} parent=0 // pred_check
    _
  $region23: #{transformer_decoder_layer.11} parent=0 // pred_check_branch
    %22 = sbr.rel (0) target = $region25
  $region24: #{transformer_decoder_layer.11} parent=0 // pred_region
    _
  $region25: #{transformer_decoder_layer.11} parent=0 // pred_fallthru
    _
  %p23 = scmp.eq.s32.totalorder 0, 0
  // Predicated region
  $region26: #{transformer_decoder_layer.11} parent=0 // pred_check
    %p24 = pneg %p23
  $region27: #{transformer_decoder_layer.11} parent=0 // pred_check_branch
    %26 = sbr.rel (%p24) target = $region29
  $region28: #{transformer_decoder_layer.11} parent=0 // pred_region
    %vm27 = vcmask 261120
    %28 = vst.msk [vmem:[#allocation2] sm:$0xff] %vm27, 0.0
    %29 = vst.msk [vmem:[#allocation2 + $0x8] sm:$0xff] %vm27, 0.0
  $region29: #{transformer_decoder_layer.11} parent=0 // pred_fallthru
    _
  %v30 = vld [vmem:[#allocation2] sm:$0xff]
  %v31 = vld [vmem:[#allocation2 + $0x8] sm:$0xff]
  %v32 = vld [vmem:[%s0] sm:$0xff]
  %v33 = vld [vmem:[%s0 + $0x8] sm:$0xff]
  %v34 = vld [vmem:[%s1] sm:$0xff]
  %v35 = vld [vmem:[%s1 + $0x8] sm:$0xff]
  %v36 = vld [vmem:[%s1 + $0x10] sm:$0xff]
  %v37 = vld [vmem:[%s1 + $0x18] sm:$0xff]
  %vm38 = vcmask 261120
  %v40 = vsel %vm38, %v32, 0
  %v43 = vsel %vm38, %v33, 0
  %45 = vmatprep.subr.mxu0 0.0
  %46 = vmatpush1.msra.mxu0 %v34
  %47 = vmatprep.subr.mxu0 0.0
  %48 = vmatpush1.msra.mxu0 %v35
  %49 = vmatprep.subr.mxu0 0.0
  %50 = vmatpush1.msra.mxu0 %v36
  %51 = vmatprep.subr.mxu0 0.0
  %52 = vmatpush1.msra.mxu0 %v37
  %53 = vmatprep.subr.mxu0 0.0
  %54 = vmatpush1.msra.mxu0 0.0
  %55 = vmatprep.subr.mxu0 0.0
  %56 = vmatpush1.msra.mxu0 0.0
  %57 = vmatprep.subr.mxu0 0.0
  %58 = vmatpush1.msra.mxu0 0.0
  %59 = vmatprep.subr.mxu0 0.0
  %60 = vmatpush1.msra.mxu0 0.0
  %61 = vmatprep.subr.mxu0 0.0
  %62 = vmatpush1.msra.mxu0 0.0
  %63 = vmatprep.subr.mxu0 0.0
  %64 = vmatpush1.msra.mxu0 0.0
  %65 = vmatprep.subr.mxu0 0.0
  %66 = vmatpush1.msra.mxu0 0.0
  %67 = vmatprep.subr.mxu0 0.0
  %68 = vmatpush1.msra.mxu0 0.0
  %69 = vmatprep.subr.mxu0 0.0
  %70 = vmatpush1.msra.mxu0 0.0
  %71 = vmatprep.subr.mxu0 0.0
  %72 = vmatpush1.msra.mxu0 0.0
  %73 = vmatprep.subr.mxu0 0.0
  %74 = vmatpush1.msra.mxu0 0.0
  %75 = vmatprep.subr.mxu0 0.0
  %76 = vmatpush1.msra.mxu0 0.0
  %77 = vmatprep.subr.mxu0 0.0
  %78 = vmatpush1.msra.mxu0 0.0
  %79 = vmatprep.subr.mxu0 0.0
  %80 = vmatpush1.msra.mxu0 0.0
  %81 = vmatprep.subr.mxu0 0.0
  %82 = vmatpush1.msra.mxu0 0.0
  %83 = vmatprep.subr.mxu0 0.0
  %84 = vmatpush1.msra.mxu0 0.0
  %85 = vmatprep.subr.mxu0 0.0
  %86 = vmatpush1.msra.mxu0 0.0
  %87 = vmatprep.subr.mxu0 0.0
  %88 = vmatpush1.msra.mxu0 0.0
  %89 = vmatprep.subr.mxu0 0.0
  %90 = vmatpush1.msra.mxu0 0.0
  %91 = vmatprep.subr.mxu0 0.0
  %92 = vmatpush1.msra.mxu0 0.0
  %93 = vmatprep.subr.mxu0 0.0
  %94 = vmatpush1.msra.mxu0 0.0
  %95 = vmatprep.subr.mxu0 0.0
  %96 = vmatpush1.msra.mxu0 0.0
  %97 = vmatprep.subr.mxu0 0.0
  %98 = vmatpush1.msra.mxu0 0.0
  %99 = vmatprep.subr.mxu0 0.0
  %100 = vmatpush1.msra.mxu0 0.0
  %101 = vmatprep.subr.mxu0 0.0
  %102 = vmatpush1.msra.mxu0 0.0
  %103 = vmatprep.subr.mxu0 0.0
  %104 = vmatpush1.msra.mxu0 0.0
  %105 = vmatprep.subr.mxu0 0.0
  %106 = vmatpush1.msra.mxu0 0.0
  %107 = vmatprep.subr.mxu0 0.0
  %108 = vmatpush1.msra.mxu0 0.0
  %109 = vmatprep.mubr.f32.mxu0 0.0
  %110 = vmatmul.mubr.f32.gmra.mrb[0].mxu0 %v40
  %v111 = vpop.f32.mrb[0].mxu0
  %v112 = vadd.f32 0.0, %v111
  %v113 = vpop.f32.mrb[0].mxu0
  %114 = vmatprep.mubr.f32.mxu0 0.0
  %115 = vmatmul.mubr.f32.gmra.mrb[0].mxu0 %v43
  %v116 = vpop.f32.mrb[0].mxu0
  %v117 = vadd.f32 0.0, %v116
  %v118 = vpop.f32.mrb[0].mxu0
  %119 = vdwg.mxu0
  %v120 = vadd.f32 %v30, %v112
  %v121 = vadd.f32 %v31, %v117
  %122 = vst.msk [vmem:[#allocation2] sm:$0xff] %vm38, %v120
  %123 = vst.msk [vmem:[#allocation2 + $0x8] sm:$0xff] %vm38, %v121
  // Predicated region
  $region30: #{transformer_decoder_layer.11} parent=0 // pred_check
    %p124 = pneg %p23
  $region31: #{transformer_decoder_layer.11} parent=0 // pred_check_branch
    %126 = sbr.rel (%p124) target = $region33
  $region32: #{transformer_decoder_layer.11} parent=0 // pred_region
    %v127 = vld [vmem:[#allocation2] sm:$0xff]
    %v128 = vld [vmem:[#allocation2 + $0x8] sm:$0xff]
    %v129 = vld [vmem:[%s2] sm:$0x1]
    %v131 = vlaneseq
    %v132 = vshrl.u32 %v131, 7
    %v133 = vsub.s32 0, %v132
    %v134 = vrot.slane %v129, %v133
    %v136 = vadd.f32 %v127, %v134
    %v137 = vadd.f32 %v128, %v134
    %v138 = vld [vmem:[%s3] sm:$0xff]
    %v139 = vld [vmem:[%s3 + $0x8] sm:$0xff]
    %v140 = vadd.f32 %v136, %v138
    %v141 = vadd.f32 %v137, %v139
    %v142 = vsel %vm38, %v140, 0.0
    %143 = vadd.xlane.f32.xlu0 %v142
    %v144 = vpop.xlane.xlu0 %143
    %v145 = vsel %vm38, %v141, 0.0
    %146 = vadd.xlane.f32.xlu0 %v145
    %v147 = vpop.xlane.xlu0 %146
    %v148 = vrcp.pop 32.0
    %v149 = vmul.f32 %v144, %v148
    %v150 = vmul.f32 %v147, %v148
    %v151 = vsub.f32 %v140, %v149
    %v152 = vsub.f32 %v141, %v150
    %v153 = vmul.f32 %v151, %v151
    %v154 = vmul.f32 %v152, %v152
    %v155 = vsel %vm38, %v153, 0.0
    %156 = vadd.xlane.f32.xlu0 %v155
    %v157 = vpop.xlane.xlu0 %156
    %v158 = vsel %vm38, %v154, 0.0
    %159 = vadd.xlane.f32.xlu0 %v158
    %v160 = vpop.xlane.xlu0 %159
    %v161 = vmul.f32 %v157, %v148
    %v162 = vmul.f32 %v160, %v148
    %v163 = vadd.f32 %v161, 1e-05
    %v164 = vadd.f32 %v162, 1e-05
    %v165 = vrsqrt.pop %v163
    %v166 = vrsqrt.pop %v164
    %v167 = vmul.f32 %v151, %v165
    %v168 = vmul.f32 %v152, %v166
    %v169 = vld [vmem:[%s4] sm:$0x1]
    %v171 = vlaneseq
    %v172 = vshrl.u32 %v171, 7
    %v173 = vsub.s32 0, %v172
    %v174 = vrot.slane %v169, %v173
    %v176 = vmul.f32 %v167, %v174
    %v177 = vmul.f32 %v168, %v174
    %v178 = vld [vmem:[%s5] sm:$0x1]
    %v180 = vlaneseq
    %v181 = vshrl.u32 %v180, 7
    %v182 = vsub.s32 0, %v181
    %v183 = vrot.slane %v178, %v182
    %v185 = vadd.f32 %v176, %v183
    %v186 = vadd.f32 %v177, %v183
    %187 = vst.msk [vmem:[%s6] sm:$0xff] %vm38, %v185
    %188 = vst.msk [vmem:[%s6 + $0x8] sm:$0xff] %vm38, %v186
  $region33: #{transformer_decoder_layer.11} parent=0 // pred_fallthru
    _
  // Predicated region
  $region34: #{transformer_decoder_layer.11} parent=0 // pred_check
    _
  $region35: #{transformer_decoder_layer.11} parent=0 // pred_check_branch
    %190 = sbr.rel (0) target = $region37
  $region36: #{transformer_decoder_layer.11} parent=0 // pred_region
    _
  $region37: #{transformer_decoder_layer.11} parent=0 // pred_fallthru
    _
  // Predicated region
  $region38: #{transformer_decoder_layer.11} parent=0 // pred_check
    _
  $region39: #{transformer_decoder_layer.11} parent=0 // pred_check_branch
    %192 = sbr.rel (0) target = $region41
  $region40: #{transformer_decoder_layer.11} parent=0 // pred_region
    _
  $region41: #{transformer_decoder_layer.11} parent=0 // pred_fallthru
    _

// kernel: transformer_decoder_layer.12
$region0: #{transformer_decoder_layer.12}
  #allocation0 [shape = 'u32[]', space=smem, size = 0x4, offset = 0x4, fixed_abs, tag = 'smem constant byte address 0x4 - core index']
  #allocation1 [shape = 'u32[144,128]{1,0:T(1,128)}', space=vmem, size = 0x12000, scoped, tag = 'internal scratch']
  #allocation2 [shape = 'f32[16,32]{1,0:T(8,128)}', space=vmem, size = 0x2000, scoped, tag = 'scratch operand']
  %s0 = inlined_call_operand.vmem [shape: f32[16,32], index: 0, kind: input, shape index: {}]
  %s1 = inlined_call_operand.vmem [shape: f32[32,32], index: 1, kind: input, shape index: {}]
  %s2 = inlined_call_operand.vmem [shape: f32[1,32], index: 2, kind: input, shape index: {}]
  %s3 = inlined_call_operand.vmem [shape: f32[16,32], index: 3, kind: output, shape index: {}]
  %s4 = sld [smem:[#allocation0]]
  $region30: #{transformer_decoder_layer.12} parent=0
    _
  %s6 = ssub.s32 1, %s4
  %s7 = scalar_select 0, %s6, %s4
  // Predicated region
  $region2: #{transformer_decoder_layer.12} parent=0 // pred_check
    _
  $region3: #{transformer_decoder_layer.12} parent=0 // pred_check_branch
    %9 = sbr.rel (0) target = $region5
  $region4: #{transformer_decoder_layer.12} parent=0 // pred_region
    _
  $region5: #{transformer_decoder_layer.12} parent=0 // pred_fallthru
    _
  // Predicated region
  $region6: #{transformer_decoder_layer.12} parent=0 // pred_check
    _
  $region7: #{transformer_decoder_layer.12} parent=0 // pred_check_branch
    %11 = sbr.rel (0) target = $region9
  $region8: #{transformer_decoder_layer.12} parent=0 // pred_region
    _
  $region9: #{transformer_decoder_layer.12} parent=0 // pred_fallthru
    _
  // Predicated region
  $region10: #{transformer_decoder_layer.12} parent=0 // pred_check
    _
  $region11: #{transformer_decoder_layer.12} parent=0 // pred_check_branch
    %13 = sbr.rel (0) target = $region13
  $region12: #{transformer_decoder_layer.12} parent=0 // pred_region
    _
  $region13: #{transformer_decoder_layer.12} parent=0 // pred_fallthru
    _
  %p14 = scmp.eq.s32.totalorder 0, 0
  // Predicated region
  $region14: #{transformer_decoder_layer.12} parent=0 // pred_check
    %p15 = pneg %p14
  $region15: #{transformer_decoder_layer.12} parent=0 // pred_check_branch
    %17 = sbr.rel (%p15) target = $region17
  $region16: #{transformer_decoder_layer.12} parent=0 // pred_region
    %vm18 = vcmask 261120
    %19 = vst.msk [vmem:[#allocation2] sm:$0xff] %vm18, 0.0
    %20 = vst.msk [vmem:[#allocation2 + $0x8] sm:$0xff] %vm18, 0.0
  $region17: #{transformer_decoder_layer.12} parent=0 // pred_fallthru
    _
  %v21 = vld [vmem:[#allocation2] sm:$0xff]
  %v22 = vld [vmem:[#allocation2 + $0x8] sm:$0xff]
  %v23 = vld [vmem:[%s0] sm:$0xff]
  %v24 = vld [vmem:[%s0 + $0x8] sm:$0xff]
  %v25 = vld [vmem:[%s1] sm:$0xff]
  %v26 = vld [vmem:[%s1 + $0x8] sm:$0xff]
  %v27 = vld [vmem:[%s1 + $0x10] sm:$0xff]
  %v28 = vld [vmem:[%s1 + $0x18] sm:$0xff]
  %vm29 = vcmask 261120
  %v31 = vsel %vm29, %v23, 0
  %v34 = vsel %vm29, %v24, 0
  %36 = vmatprep.subr.mxu0 0.0
  %37 = vmatpush1.msra.mxu0 %v25
  %38 = vmatprep.subr.mxu0 0.0
  %39 = vmatpush1.msra.mxu0 %v26
  %40 = vmatprep.subr.mxu0 0.0
  %41 = vmatpush1.msra.mxu0 %v27
  %42 = vmatprep.subr.mxu0 0.0
  %43 = vmatpush1.msra.mxu0 %v28
  %44 = vmatprep.subr.mxu0 0.0
  %45 = vmatpush1.msra.mxu0 0.0
  %46 = vmatprep.subr.mxu0 0.0
  %47 = vmatpush1.msra.mxu0 0.0
  %48 = vmatprep.subr.mxu0 0.0
  %49 = vmatpush1.msra.mxu0 0.0
  %50 = vmatprep.subr.mxu0 0.0
  %51 = vmatpush1.msra.mxu0 0.0
  %52 = vmatprep.subr.mxu0 0.0
  %53 = vmatpush1.msra.mxu0 0.0
  %54 = vmatprep.subr.mxu0 0.0
  %55 = vmatpush1.msra.mxu0 0.0
  %56 = vmatprep.subr.mxu0 0.0
  %57 = vmatpush1.msra.mxu0 0.0
  %58 = vmatprep.subr.mxu0 0.0
  %59 = vmatpush1.msra.mxu0 0.0
  %60 = vmatprep.subr.mxu0 0.0
  %61 = vmatpush1.msra.mxu0 0.0
  %62 = vmatprep.subr.mxu0 0.0
  %63 = vmatpush1.msra.mxu0 0.0
  %64 = vmatprep.subr.mxu0 0.0
  %65 = vmatpush1.msra.mxu0 0.0
  %66 = vmatprep.subr.mxu0 0.0
  %67 = vmatpush1.msra.mxu0 0.0
  %68 = vmatprep.subr.mxu0 0.0
  %69 = vmatpush1.msra.mxu0 0.0
  %70 = vmatprep.subr.mxu0 0.0
  %71 = vmatpush1.msra.mxu0 0.0
  %72 = vmatprep.subr.mxu0 0.0
  %73 = vmatpush1.msra.mxu0 0.0
  %74 = vmatprep.subr.mxu0 0.0
  %75 = vmatpush1.msra.mxu0 0.0
  %76 = vmatprep.subr.mxu0 0.0
  %77 = vmatpush1.msra.mxu0 0.0
  %78 = vmatprep.subr.mxu0 0.0
  %79 = vmatpush1.msra.mxu0 0.0
  %80 = vmatprep.subr.mxu0 0.0
  %81 = vmatpush1.msra.mxu0 0.0
  %82 = vmatprep.subr.mxu0 0.0
  %83 = vmatpush1.msra.mxu0 0.0
  %84 = vmatprep.subr.mxu0 0.0
  %85 = vmatpush1.msra.mxu0 0.0
  %86 = vmatprep.subr.mxu0 0.0
  %87 = vmatpush1.msra.mxu0 0.0
  %88 = vmatprep.subr.mxu0 0.0
  %89 = vmatpush1.msra.mxu0 0.0
  %90 = vmatprep.subr.mxu0 0.0
  %91 = vmatpush1.msra.mxu0 0.0
  %92 = vmatprep.subr.mxu0 0.0
  %93 = vmatpush1.msra.mxu0 0.0
  %94 = vmatprep.subr.mxu0 0.0
  %95 = vmatpush1.msra.mxu0 0.0
  %96 = vmatprep.subr.mxu0 0.0
  %97 = vmatpush1.msra.mxu0 0.0
  %98 = vmatprep.subr.mxu0 0.0
  %99 = vmatpush1.msra.mxu0 0.0
  %100 = vmatprep.mubr.f32.mxu0 0.0
  %101 = vmatmul.mubr.f32.gmra.mrb[0].mxu0 %v31
  %v102 = vpop.f32.mrb[0].mxu0
  %v103 = vadd.f32 0.0, %v102
  %v104 = vpop.f32.mrb[0].mxu0
  %105 = vmatprep.mubr.f32.mxu0 0.0
  %106 = vmatmul.mubr.f32.gmra.mrb[0].mxu0 %v34
  %v107 = vpop.f32.mrb[0].mxu0
  %v108 = vadd.f32 0.0, %v107
  %v109 = vpop.f32.mrb[0].mxu0
  %110 = vdwg.mxu0
  %v111 = vadd.f32 %v21, %v103
  %v112 = vadd.f32 %v22, %v108
  %113 = vst.msk [vmem:[#allocation2] sm:$0xff] %vm29, %v111
  %114 = vst.msk [vmem:[#allocation2 + $0x8] sm:$0xff] %vm29, %v112
  // Predicated region
  $region18: #{transformer_decoder_layer.12} parent=0 // pred_check
    %p115 = pneg %p14
  $region19: #{transformer_decoder_layer.12} parent=0 // pred_check_branch
    %117 = sbr.rel (%p115) target = $region21
  $region20: #{transformer_decoder_layer.12} parent=0 // pred_region
    %v118 = vld [vmem:[#allocation2] sm:$0xff]
    %v119 = vld [vmem:[#allocation2 + $0x8] sm:$0xff]
    %v120 = vld [vmem:[%s2] sm:$0x1]
    %v122 = vlaneseq
    %v123 = vshrl.u32 %v122, 7
    %v124 = vsub.s32 0, %v123
    %v125 = vrot.slane %v120, %v124
    %v127 = vadd.f32 %v118, %v125
    %v128 = vadd.f32 %v119, %v125
    %129 = vst.msk [vmem:[%s3] sm:$0xff] %vm29, %v127
    %130 = vst.msk [vmem:[%s3 + $0x8] sm:$0xff] %vm29, %v128
  $region21: #{transformer_decoder_layer.12} parent=0 // pred_fallthru
    _
  // Predicated region
  $region22: #{transformer_decoder_layer.12} parent=0 // pred_check
    _
  $region23: #{transformer_decoder_layer.12} parent=0 // pred_check_branch
    %132 = sbr.rel (0) target = $region25
  $region24: #{transformer_decoder_layer.12} parent=0 // pred_region
    _
  $region25: #{transformer_decoder_layer.12} parent=0 // pred_fallthru
    _
  // Predicated region
  $region26: #{transformer_decoder_layer.12} parent=0 // pred_check
    _
  $region27: #{transformer_decoder_layer.12} parent=0 // pred_check_branch
    %134 = sbr.rel (0) target = $region29
  $region28: #{transformer_decoder_layer.12} parent=0 // pred_region
    _
  $region29: #{transformer_decoder_layer.12} parent=0 // pred_fallthru
    _

// kernel: transformer_decoder_layer.9
$region0: #{transformer_decoder_layer.9}
  #allocation0 [shape = 'u32[]', space=smem, size = 0x4, offset = 0x4, fixed_abs, tag = 'smem constant byte address 0x4 - core index']
  #allocation1 [shape = 'u32[144,128]{1,0:T(1,128)}', space=vmem, size = 0x12000, scoped, tag = 'internal scratch']
  #allocation2 [shape = 'f32[16,96]{1,0:T(8,128)}', space=vmem, size = 0x2000, scoped, tag = 'scratch operand']
  %s0 = inlined_call_operand.hbm [shape: f32[16,32], index: 0, kind: input, shape index: {}]
  %s1 = inlined_call_operand.vmem [shape: f32[32,96], index: 1, kind: input, shape index: {}]
  %s2 = inlined_call_operand.vmem [shape: f32[1,96], index: 2, kind: input, shape index: {}]
  %s3 = inlined_call_operand.vmem [shape: f32[16,96], index: 3, kind: output, shape index: {}]
  %s4 = sld [smem:[#allocation0]]
  $region34: #{transformer_decoder_layer.9} parent=0
    _
  %s6 = ssub.s32 1, %s4
  %s7 = scalar_select 0, %s6, %s4
  $region1: #{transformer_decoder_layer.9} parent=0
    #allocation3 [shape = 'u8[8192]{0}', space=vmem, size = 0x2000, scoped, tag = 'input window, operand 0, single buffered']
    #allocation4 [shape = 's32[1]{0}', space=sflag, size = 0x4, scoped, tag = 'scoped memory for transformer_decoder_layer.9']
    %8 = vsyncpa [#allocation4], 0
    // Predicated region
    $region2: #{transformer_decoder_layer.9} parent=1 // pred_check
      _
    $region3: #{transformer_decoder_layer.9} parent=1 // pred_check_branch
      %10 = sbr.rel (0) target = $region5
    $region4: #{transformer_decoder_layer.9} parent=1 // pred_region
      %s12 = ssub.s32 256, 256
      %13 = vsyncadd [#allocation4], %s12
      %s14 = sshll.u32 [#allocation3], 4
      %s15 = int_to_ptr.vmem [resolvable:$true] %s14
      %20 = dma.hbm_to_vmem [thread:$0]  %s0, 256, %s15, [#allocation4], 128, 128, 8
    $region5: #{transformer_decoder_layer.9} parent=1 // pred_fallthru
      _
    // Predicated region
    $region6: #{transformer_decoder_layer.9} parent=1 // pred_check
      _
    $region7: #{transformer_decoder_layer.9} parent=1 // pred_check_branch
      %22 = sbr.rel (0) target = $region9
    $region8: #{transformer_decoder_layer.9} parent=1 // pred_region
      _
    $region9: #{transformer_decoder_layer.9} parent=1 // pred_fallthru
      _
    // Predicated region
    $region10: #{transformer_decoder_layer.9} parent=1 // pred_check
      _
    $region11: #{transformer_decoder_layer.9} parent=1 // pred_check_branch
      %24 = sbr.rel (0) target = $region13
    $region12: #{transformer_decoder_layer.9} parent=1 // pred_region
      _
    $region13: #{transformer_decoder_layer.9} parent=1 // pred_fallthru
      _
    // Predicated region
    $region14: #{transformer_decoder_layer.9} parent=1 // pred_check
      _
    $region15: #{transformer_decoder_layer.9} parent=1 // pred_check_branch
      %26 = sbr.rel (0) target = $region17
    $region16: #{transformer_decoder_layer.9} parent=1 // pred_region
      %27 = dma.done [#allocation4], 256
    $region17: #{transformer_decoder_layer.9} parent=1 // pred_fallthru
      _
    %p28 = scmp.eq.s32.totalorder 0, 0
    // Predicated region
    $region18: #{transformer_decoder_layer.9} parent=1 // pred_check
      %p29 = pneg %p28
    $region19: #{transformer_decoder_layer.9} parent=1 // pred_check_branch
      %31 = sbr.rel (%p29) target = $region21
    $region20: #{transformer_decoder_layer.9} parent=1 // pred_region
      %vm32 = vcmask 785408
      %33 = vst.msk [vmem:[#allocation2] sm:$0xff] %vm32, 0.0
      %34 = vst.msk [vmem:[#allocation2 + $0x8] sm:$0xff] %vm32, 0.0
    $region21: #{transformer_decoder_layer.9} parent=1 // pred_fallthru
      _
    %v35 = vld [vmem:[#allocation2] sm:$0xff]
    %v36 = vld [vmem:[#allocation2 + $0x8] sm:$0xff]
    %v37 = vld [vmem:[#allocation3] sm:$0xff]
    %v38 = vld [vmem:[#allocation3 + $0x8] sm:$0xff]
    %v39 = vld [vmem:[%s1] sm:$0xff]
    %v40 = vld [vmem:[%s1 + $0x8] sm:$0xff]
    %v41 = vld [vmem:[%s1 + $0x10] sm:$0xff]
    %v42 = vld [vmem:[%s1 + $0x18] sm:$0xff]
    %vm43 = vcmask 261120
    %v45 = vsel %vm43, %v37, 0
    %v48 = vsel %vm43, %v38, 0
    %50 = vmatprep.subr.mxu0 0.0
    %51 = vmatpush1.msra.mxu0 %v39
    %52 = vmatprep.subr.mxu0 0.0
    %53 = vmatpush1.msra.mxu0 %v40
    %54 = vmatprep.subr.mxu0 0.0
    %55 = vmatpush1.msra.mxu0 %v41
    %56 = vmatprep.subr.mxu0 0.0
    %57 = vmatpush1.msra.mxu0 %v42
    %58 = vmatprep.subr.mxu0 0.0
    %59 = vmatpush1.msra.mxu0 0.0
    %60 = vmatprep.subr.mxu0 0.0
    %61 = vmatpush1.msra.mxu0 0.0
    %62 = vmatprep.subr.mxu0 0.0
    %63 = vmatpush1.msra.mxu0 0.0
    %64 = vmatprep.subr.mxu0 0.0
    %65 = vmatpush1.msra.mxu0 0.0
    %66 = vmatprep.subr.mxu0 0.0
    %67 = vmatpush1.msra.mxu0 0.0
    %68 = vmatprep.subr.mxu0 0.0
    %69 = vmatpush1.msra.mxu0 0.0
    %70 = vmatprep.subr.mxu0 0.0
    %71 = vmatpush1.msra.mxu0 0.0
    %72 = vmatprep.subr.mxu0 0.0
    %73 = vmatpush1.msra.mxu0 0.0
    %74 = vmatprep.subr.mxu0 0.0
    %75 = vmatpush1.msra.mxu0 0.0
    %76 = vmatprep.subr.mxu0 0.0
    %77 = vmatpush1.msra.mxu0 0.0
    %78 = vmatprep.subr.mxu0 0.0
    %79 = vmatpush1.msra.mxu0 0.0
    %80 = vmatprep.subr.mxu0 0.0
    %81 = vmatpush1.msra.mxu0 0.0
    %82 = vmatprep.subr.mxu0 0.0
    %83 = vmatpush1.msra.mxu0 0.0
    %84 = vmatprep.subr.mxu0 0.0
    %85 = vmatpush1.msra.mxu0 0.0
    %86 = vmatprep.subr.mxu0 0.0
    %87 = vmatpush1.msra.mxu0 0.0
    %88 = vmatprep.subr.mxu0 0.0
    %89 = vmatpush1.msra.mxu0 0.0
    %90 = vmatprep.subr.mxu0 0.0
    %91 = vmatpush1.msra.mxu0 0.0
    %92 = vmatprep.subr.mxu0 0.0
    %93 = vmatpush1.msra.mxu0 0.0
    %94 = vmatprep.subr.mxu0 0.0
    %95 = vmatpush1.msra.mxu0 0.0
    %96 = vmatprep.subr.mxu0 0.0
    %97 = vmatpush1.msra.mxu0 0.0
    %98 = vmatprep.subr.mxu0 0.0
    %99 = vmatpush1.msra.mxu0 0.0
    %100 = vmatprep.subr.mxu0 0.0
    %101 = vmatpush1.msra.mxu0 0.0
    %102 = vmatprep.subr.mxu0 0.0
    %103 = vmatpush1.msra.mxu0 0.0
    %104 = vmatprep.subr.mxu0 0.0
    %105 = vmatpush1.msra.mxu0 0.0
    %106 = vmatprep.subr.mxu0 0.0
    %107 = vmatpush1.msra.mxu0 0.0
    %108 = vmatprep.subr.mxu0 0.0
    %109 = vmatpush1.msra.mxu0 0.0
    %110 = vmatprep.subr.mxu0 0.0
    %111 = vmatpush1.msra.mxu0 0.0
    %112 = vmatprep.subr.mxu0 0.0
    %113 = vmatpush1.msra.mxu0 0.0
    %114 = vmatprep.mubr.f32.mxu0 0.0
    %115 = vmatmul.mubr.f32.gmra.mrb[0].mxu0 %v45
    %v116 = vpop.f32.mrb[0].mxu0
    %v117 = vadd.f32 0.0, %v116
    %v118 = vpop.f32.mrb[0].mxu0
    %119 = vmatprep.mubr.f32.mxu0 0.0
    %120 = vmatmul.mubr.f32.gmra.mrb[0].mxu0 %v48
    %v121 = vpop.f32.mrb[0].mxu0
    %v122 = vadd.f32 0.0, %v121
    %v123 = vpop.f32.mrb[0].mxu0
    %124 = vdwg.mxu0
    %v125 = vadd.f32 %v35, %v117
    %v126 = vadd.f32 %v36, %v122
    %vm127 = vcmask 785408
    %128 = vst.msk [vmem:[#allocation2] sm:$0xff] %vm127, %v125
    %129 = vst.msk [vmem:[#allocation2 + $0x8] sm:$0xff] %vm127, %v126
    // Predicated region
    $region22: #{transformer_decoder_layer.9} parent=1 // pred_check
      %p130 = pneg %p28
    $region23: #{transformer_decoder_layer.9} parent=1 // pred_check_branch
      %132 = sbr.rel (%p130) target = $region25
    $region24: #{transformer_decoder_layer.9} parent=1 // pred_region
      %v133 = vld [vmem:[#allocation2] sm:$0xff]
      %v134 = vld [vmem:[#allocation2 + $0x8] sm:$0xff]
      %v135 = vld [vmem:[%s2] sm:$0x1]
      %v137 = vlaneseq
      %v138 = vshrl.u32 %v137, 7
      %v139 = vsub.s32 0, %v138
      %v140 = vrot.slane %v135, %v139
      %v142 = vadd.f32 %v133, %v140
      %v143 = vadd.f32 %v134, %v140
      %144 = vst.msk [vmem:[%s3] sm:$0xff] %vm127, %v142
      %145 = vst.msk [vmem:[%s3 + $0x8] sm:$0xff] %vm127, %v143
    $region25: #{transformer_decoder_layer.9} parent=1 // pred_fallthru
      _
    // Predicated region
    $region26: #{transformer_decoder_layer.9} parent=1 // pred_check
      _
    $region27: #{transformer_decoder_layer.9} parent=1 // pred_check_branch
      %147 = sbr.rel (0) target = $region29
    $region28: #{transformer_decoder_layer.9} parent=1 // pred_region
      _
    $region29: #{transformer_decoder_layer.9} parent=1 // pred_fallthru
      _
    // Predicated region
    $region30: #{transformer_decoder_layer.9} parent=1 // pred_check
      _
    $region31: #{transformer_decoder_layer.9} parent=1 // pred_check_branch
      %149 = sbr.rel (0) target = $region33
    $region32: #{transformer_decoder_layer.9} parent=1 // pred_region
      _
    $region33: #{transformer_decoder_layer.9} parent=1 // pred_fallthru
      _
    %150 = vsyncpa [#allocation4], 1

// kernel: transformer_decoder_layer.10
$region0: #{transformer_decoder_layer.10}
  #allocation0 [shape = 'u32[]', space=smem, size = 0x4, offset = 0x4, fixed_abs, tag = 'smem constant byte address 0x4 - core index']
  #allocation1 [shape = 'u32[144,128]{1,0:T(1,128)}', space=vmem, size = 0x12000, scoped, tag = 'internal scratch']
  %s0 = inlined_call_operand.vmem [shape: f32[2,8,96], index: 0, kind: input, shape index: {}]
  %s1 = inlined_call_operand.vmem [shape: f32[2,8,32], index: 1, kind: output, shape index: {}]
  %s2 = sld [smem:[#allocation0]]
  $region37: #{transformer_decoder_layer.10} parent=0
    _
  %s4 = ssub.s32 1, %s2
  %s5 = scalar_select 0, %s4, %s2
  loop: start=0, step=1, limit=4
  $region2: #{transformer_decoder_layer.10} parent=0 // loop_pre_header
    _
  $region3: #{transformer_decoder_layer.10} parent=0 // loop_header
    %s7 = sphi 0, %s11
    %p8 = scmp.ge.s32.totalorder %s7, 4
    %s17 = sphi 0, %s19
    %s20 = sphi 0, %s17
    %s21 = sphi 0, %s20
    %s37 = sphi 0, %s21
    %s43 = sphi 0, %s45
    %s46 = sphi 0, %s43
    %s47 = sphi 0, %s46
    %s63 = sphi 0, %s47
  $region4: #{transformer_decoder_layer.10} parent=0 // loop_header_branch
    %10 = sbr.rel (%p8) target = $region8
  $region5: #{transformer_decoder_layer.10} parent=0 // loop_body
    %s12 = ssub.s32 %s7, 1
    %s13 = ssub.s32 %s7, 2
    %s14 = sadd.s32 %s7, 1
    %s15 = ssub.s32 %s7, %s14
    %p16 = scmp.eq.s32.totalorder %s15, 0
    %s18 = sadd.s32 %s17, 1
    %s19 = scalar_select %p16, %s17, %s18
    %p22 = pneg %p16
    %p23 = scmp.eq.s32.totalorder %s7, 1
    %p24 = por %p22, %p23
    %p25 = scmp.ne.s32.totalorder %s17, %s20
    %p26 = scmp.eq.s32.totalorder %s7, 0
    %p27 = por %p25, %p26
    %p28 = scmp.ne.s32.totalorder %s17, %s20
    %p29 = scmp.eq.s32.totalorder %s12, 1
    %p30 = por %p28, %p29
    %p31 = scmp.ne.s32.totalorder %s20, %s21
    %p32 = scmp.eq.s32.totalorder %s12, 0
    %p33 = por %p31, %p32
    %p34 = scmp.ne.s32.totalorder %s20, %s21
    %p35 = scmp.eq.s32.totalorder %s13, 1
    %p36 = por %p34, %p35
    %p38 = scmp.ne.s32.totalorder %s21, %s37
    %p39 = scmp.eq.s32.totalorder %s13, 0
    %p40 = por %p38, %p39
    %s41 = ssub.s32 %s7, %s14
    %p42 = scmp.eq.s32.totalorder %s41, 0
    %s44 = sadd.s32 %s43, 1
    %s45 = scalar_select %p42, %s43, %s44
    %p48 = pneg %p42
    %p49 = scmp.eq.s32.totalorder %s7, 1
    %p50 = por %p48, %p49
    %p51 = scmp.ne.s32.totalorder %s43, %s46
    %p52 = scmp.eq.s32.totalorder %s7, 0
    %p53 = por %p51, %p52
    %p54 = scmp.ne.s32.totalorder %s43, %s46
    %p55 = scmp.eq.s32.totalorder %s12, 1
    %p56 = por %p54, %p55
    %p57 = scmp.ne.s32.totalorder %s46, %s47
    %p58 = scmp.eq.s32.totalorder %s12, 0
    %p59 = por %p57, %p58
    %p60 = scmp.ne.s32.totalorder %s46, %s47
    %p61 = scmp.eq.s32.totalorder %s13, 1
    %p62 = por %p60, %p61
    %p64 = scmp.ne.s32.totalorder %s47, %s63
    %p65 = scmp.eq.s32.totalorder %s13, 0
    %p66 = por %p64, %p65
    %p67 = scmp.le.s32.totalorder 1, %s7
    %p68 = scmp.lt.s32.totalorder %s7, 3
    %p69 = pnand %p67, %p68
    %p70 = pneg %p69
    // Predicated region
    $region9: #{transformer_decoder_layer.10} parent=5 // pred_check
      _
    $region10: #{transformer_decoder_layer.10} parent=5 // pred_check_branch
      %72 = sbr.rel (%p69) target = $region12
    $region11: #{transformer_decoder_layer.10} parent=5 // pred_region
      %s73 = ssub.s32 %s7, 1
    $region12: #{transformer_decoder_layer.10} parent=5 // pred_fallthru
      _
    %p74 = scmp.lt.s32.totalorder %s7, 2
    // Predicated region
    $region13: #{transformer_decoder_layer.10} parent=5 // pred_check
      %p75 = pneg %p74
    $region14: #{transformer_decoder_layer.10} parent=5 // pred_check_branch
      %77 = sbr.rel (%p75) target = $region16
    $region15: #{transformer_decoder_layer.10} parent=5 // pred_region
      // Predicated region
      $region17: #{transformer_decoder_layer.10} parent=15 // pred_check
        %p78 = pneg %p27
      $region18: #{transformer_decoder_layer.10} parent=15 // pred_check_branch
        %80 = sbr.rel (%p78) target = $region20
      $region19: #{transformer_decoder_layer.10} parent=15 // pred_region
        %p81 = scmp.lt.s32.totalorder %s7, 1
        %s82 = scalar_select %p81, %s7, 1
        %s83 = smul.addr %s82, 8
        %s84 = scalar_lea.vmem %s0, %s83
      $region20: #{transformer_decoder_layer.10} parent=15 // pred_fallthru
        _
    $region16: #{transformer_decoder_layer.10} parent=5 // pred_fallthru
      _
    %p85 = scmp.le.s32.totalorder 1, %s7
    %p86 = scmp.lt.s32.totalorder %s7, 3
    %p87 = pnand %p85, %p86
    %p88 = pneg %p87
    // Predicated region
    $region21: #{transformer_decoder_layer.10} parent=5 // pred_check
      _
    $region22: #{transformer_decoder_layer.10} parent=5 // pred_check_branch
      %90 = sbr.rel (%p87) target = $region24
    $region23: #{transformer_decoder_layer.10} parent=5 // pred_region
      %s91 = ssub.s32 %s7, 1
      %p92 = scmp.lt.s32.totalorder %s12, 1
      %s93 = scalar_select %p92, %s12, 1
      %s94 = smul.addr %s93, 8
      %s95 = scalar_lea.vmem %s0, %s94
      %p96 = pneg %p33
      %p97 = pneg %p30
      %p98 = pneg %p59
      %p99 = pneg %p56
      %p100 = scmp.lt.s32.totalorder %s12, 1
      %s101 = scalar_select %p100, %s12, 1
      %s102 = smul.addr %s101, 8
      %s103 = scalar_lea.vmem %s1, %s102
      %p104 = scmp.lt.s32.totalorder %s12, 1
      %s105 = scalar_select %p104, %s12, 1
      %s106 = smul.addr %s105, 8
      %s107 = scalar_lea.vmem %s0, %s106
      %p108 = scmp.lt.s32.totalorder %s12, 1
      %s109 = scalar_select %p108, %s12, 1
      %s110 = smul.addr %s109, 8
      %s111 = scalar_lea.vmem %s1, %s110
      %v112 = vld [vmem:[%s107] sm:$0xff]
      %114 = vrot.lane.b32.xlu0 %v112, 96
      %v115 = vpop.permute.xlu0 %114
      %vm116 = vcmask 64512
      %v117 = vsel %vm116, %v112, 0
      %v119 = vsel %vm116, %v115, 0
      %121 = vmatprep.subr.mxu0 0.0
      %122 = vmatpush1.xpose.msra.mxu0 %v119
      %123 = vmatprep.subr.mxu0 0.0
      %124 = vmatpush1.xpose.msra.mxu0 0.0
      %125 = vmatprep.subr.mxu0 0.0
      %126 = vmatpush1.xpose.msra.mxu0 0.0
      %127 = vmatprep.subr.mxu0 0.0
      %128 = vmatpush1.xpose.msra.mxu0 0.0
      %129 = vmatprep.subr.mxu0 0.0
      %130 = vmatpush1.xpose.msra.mxu0 0.0
      %131 = vmatprep.subr.mxu0 0.0
      %132 = vmatpush1.xpose.msra.mxu0 0.0
      %133 = vmatprep.subr.mxu0 0.0
      %134 = vmatpush1.xpose.msra.mxu0 0.0
      %135 = vmatprep.subr.mxu0 0.0
      %136 = vmatpush1.xpose.msra.mxu0 0.0
      %137 = vmatprep.subr.mxu0 0.0
      %138 = vmatpush1.xpose.msra.mxu0 0.0
      %139 = vmatprep.subr.mxu0 0.0
      %140 = vmatpush1.xpose.msra.mxu0 0.0
      %141 = vmatprep.subr.mxu0 0.0
      %142 = vmatpush1.xpose.msra.mxu0 0.0
      %143 = vmatprep.subr.mxu0 0.0
      %144 = vmatpush1.xpose.msra.mxu0 0.0
      %145 = vmatprep.subr.mxu0 0.0
      %146 = vmatpush1.xpose.msra.mxu0 0.0
      %147 = vmatprep.subr.mxu0 0.0
      %148 = vmatpush1.xpose.msra.mxu0 0.0
      %149 = vmatprep.subr.mxu0 0.0
      %150 = vmatpush1.xpose.msra.mxu0 0.0
      %151 = vmatprep.subr.mxu0 0.0
      %152 = vmatpush1.xpose.msra.mxu0 0.0
      %153 = vmatprep.subr.mxu0 0.0
      %154 = vmatpush1.xpose.msra.mxu0 0.0
      %155 = vmatprep.subr.mxu0 0.0
      %156 = vmatpush1.xpose.msra.mxu0 0.0
      %157 = vmatprep.subr.mxu0 0.0
      %158 = vmatpush1.xpose.msra.mxu0 0.0
      %159 = vmatprep.subr.mxu0 0.0
      %160 = vmatpush1.xpose.msra.mxu0 0.0
      %161 = vmatprep.subr.mxu0 0.0
      %162 = vmatpush1.xpose.msra.mxu0 0.0
      %163 = vmatprep.subr.mxu0 0.0
      %164 = vmatpush1.xpose.msra.mxu0 0.0
      %165 = vmatprep.subr.mxu0 0.0
      %166 = vmatpush1.xpose.msra.mxu0 0.0
      %167 = vmatprep.subr.mxu0 0.0
      %168 = vmatpush1.xpose.msra.mxu0 0.0
      %169 = vmatprep.subr.mxu0 0.0
      %170 = vmatpush1.xpose.msra.mxu0 0.0
      %171 = vmatprep.subr.mxu0 0.0
      %172 = vmatpush1.xpose.msra.mxu0 0.0
      %173 = vmatprep.subr.mxu0 0.0
      %174 = vmatpush1.xpose.msra.mxu0 0.0
      %175 = vmatprep.subr.mxu0 0.0
      %176 = vmatpush1.xpose.msra.mxu0 0.0
      %177 = vmatprep.subr.mxu0 0.0
      %178 = vmatpush1.xpose.msra.mxu0 0.0
      %179 = vmatprep.subr.mxu0 0.0
      %180 = vmatpush1.xpose.msra.mxu0 0.0
      %181 = vmatprep.subr.mxu0 0.0
      %182 = vmatpush1.xpose.msra.mxu0 0.0
      %183 = vmatprep.subr.mxu0 0.0
      %184 = vmatpush1.xpose.msra.mxu0 0.0
      %185 = vmatprep.mubr.f32.mxu0 0.0
      %186 = vmatmul.mubr.f32.gmra.mrb[0].mxu0 %v117
      %v187 = vpop.f32.mrb[0].mxu0
      %v188 = vadd.f32 0.0, %v187
      %v189 = vpop.f32.mrb[0].mxu0
      %190 = vdwg.mxu0
      %v191 = vsel %vm116, %v188, -inf
      %192 = vmax.xlane.f32.xlu0 %v191
      %v193 = vpop.xlane.xlu0 %192
      %v194 = vsub.f32 %v188, %v193
      %v195 = vmul.f32 %v194, 1.442695
      %v196 = vpow.pop %v195
      %v197 = vsel %vm116, %v196, 0.0
      %198 = vadd.xlane.f32.xlu0 %v197
      %v199 = vpop.xlane.xlu0 %198
      %v200 = vrcp.pop %v199
      %v201 = vmul.f32 %v196, %v200
      %202 = vrot.lane.b32.xlu0 %v112, 64
      %v203 = vpop.permute.xlu0 %202
      %v206 = vsel %vm116, %v201, 0
      %208 = vmatprep.subr.mxu0 0.0
      %209 = vmatpush1.msra.mxu0 %v203
      %210 = vmatprep.subr.mxu0 0.0
      %211 = vmatpush1.msra.mxu0 0.0
      %212 = vmatprep.subr.mxu0 0.0
      %213 = vmatpush1.msra.mxu0 0.0
      %214 = vmatprep.subr.mxu0 0.0
      %215 = vmatpush1.msra.mxu0 0.0
      %216 = vmatprep.subr.mxu0 0.0
      %217 = vmatpush1.msra.mxu0 0.0
      %218 = vmatprep.subr.mxu0 0.0
      %219 = vmatpush1.msra.mxu0 0.0
      %220 = vmatprep.subr.mxu0 0.0
      %221 = vmatpush1.msra.mxu0 0.0
      %222 = vmatprep.subr.mxu0 0.0
      %223 = vmatpush1.msra.mxu0 0.0
      %224 = vmatprep.subr.mxu0 0.0
      %225 = vmatpush1.msra.mxu0 0.0
      %226 = vmatprep.subr.mxu0 0.0
      %227 = vmatpush1.msra.mxu0 0.0
      %228 = vmatprep.subr.mxu0 0.0
      %229 = vmatpush1.msra.mxu0 0.0
      %230 = vmatprep.subr.mxu0 0.0
      %231 = vmatpush1.msra.mxu0 0.0
      %232 = vmatprep.subr.mxu0 0.0
      %233 = vmatpush1.msra.mxu0 0.0
      %234 = vmatprep.subr.mxu0 0.0
      %235 = vmatpush1.msra.mxu0 0.0
      %236 = vmatprep.subr.mxu0 0.0
      %237 = vmatpush1.msra.mxu0 0.0
      %238 = vmatprep.subr.mxu0 0.0
      %239 = vmatpush1.msra.mxu0 0.0
      %240 = vmatprep.subr.mxu0 0.0
      %241 = vmatpush1.msra.mxu0 0.0
      %242 = vmatprep.subr.mxu0 0.0
      %243 = vmatpush1.msra.mxu0 0.0
      %244 = vmatprep.subr.mxu0 0.0
      %245 = vmatpush1.msra.mxu0 0.0
      %246 = vmatprep.subr.mxu0 0.0
      %247 = vmatpush1.msra.mxu0 0.0
      %248 = vmatprep.subr.mxu0 0.0
      %249 = vmatpush1.msra.mxu0 0.0
      %250 = vmatprep.subr.mxu0 0.0
      %251 = vmatpush1.msra.mxu0 0.0
      %252 = vmatprep.subr.mxu0 0.0
      %253 = vmatpush1.msra.mxu0 0.0
      %254 = vmatprep.subr.mxu0 0.0
      %255 = vmatpush1.msra.mxu0 0.0
      %256 = vmatprep.subr.mxu0 0.0
      %257 = vmatpush1.msra.mxu0 0.0
      %258 = vmatprep.subr.mxu0 0.0
      %259 = vmatpush1.msra.mxu0 0.0
      %260 = vmatprep.subr.mxu0 0.0
      %261 = vmatpush1.msra.mxu0 0.0
      %262 = vmatprep.subr.mxu0 0.0
      %263 = vmatpush1.msra.mxu0 0.0
      %264 = vmatprep.subr.mxu0 0.0
      %265 = vmatpush1.msra.mxu0 0.0
      %266 = vmatprep.subr.mxu0 0.0
      %267 = vmatpush1.msra.mxu0 0.0
      %268 = vmatprep.subr.mxu0 0.0
      %269 = vmatpush1.msra.mxu0 0.0
      %270 = vmatprep.subr.mxu0 0.0
      %271 = vmatpush1.msra.mxu0 0.0
      %272 = vmatprep.mubr.f32.mxu0 0.0
      %273 = vmatmul.mubr.f32.gmra.mrb[0].mxu0 %v206
      %v274 = vpop.f32.mrb[0].mxu0
      %v275 = vadd.f32 0.0, %v274
      %v276 = vpop.f32.mrb[0].mxu0
      %277 = vdwg.mxu0
      %278 = vrot.lane.b32.xlu0 %v112, 120
      %v279 = vpop.permute.xlu0 %278
      %280 = vrot.lane.b32.xlu0 %v112, 88
      %v281 = vpop.permute.xlu0 %280
      %v282 = vsel %vm116, %v279, 0
      %v284 = vsel %vm116, %v281, 0
      %286 = vmatprep.subr.mxu0 0.0
      %287 = vmatpush1.xpose.msra.mxu0 %v284
      %288 = vmatprep.subr.mxu0 0.0
      %289 = vmatpush1.xpose.msra.mxu0 0.0
      %290 = vmatprep.subr.mxu0 0.0
      %291 = vmatpush1.xpose.msra.mxu0 0.0
      %292 = vmatprep.subr.mxu0 0.0
      %293 = vmatpush1.xpose.msra.mxu0 0.0
      %294 = vmatprep.subr.mxu0 0.0
      %295 = vmatpush1.xpose.msra.mxu0 0.0
      %296 = vmatprep.subr.mxu0 0.0
      %297 = vmatpush1.xpose.msra.mxu0 0.0
      %298 = vmatprep.subr.mxu0 0.0
      %299 = vmatpush1.xpose.msra.mxu0 0.0
      %300 = vmatprep.subr.mxu0 0.0
      %301 = vmatpush1.xpose.msra.mxu0 0.0
      %302 = vmatprep.subr.mxu0 0.0
      %303 = vmatpush1.xpose.msra.mxu0 0.0
      %304 = vmatprep.subr.mxu0 0.0
      %305 = vmatpush1.xpose.msra.mxu0 0.0
      %306 = vmatprep.subr.mxu0 0.0
      %307 = vmatpush1.xpose.msra.mxu0 0.0
      %308 = vmatprep.subr.mxu0 0.0
      %309 = vmatpush1.xpose.msra.mxu0 0.0
      %310 = vmatprep.subr.mxu0 0.0
      %311 = vmatpush1.xpose.msra.mxu0 0.0
      %312 = vmatprep.subr.mxu0 0.0
      %313 = vmatpush1.xpose.msra.mxu0 0.0
      %314 = vmatprep.subr.mxu0 0.0
      %315 = vmatpush1.xpose.msra.mxu0 0.0
      %316 = vmatprep.subr.mxu0 0.0
      %317 = vmatpush1.xpose.msra.mxu0 0.0
      %318 = vmatprep.subr.mxu0 0.0
      %319 = vmatpush1.xpose.msra.mxu0 0.0
      %320 = vmatprep.subr.mxu0 0.0
      %321 = vmatpush1.xpose.msra.mxu0 0.0
      %322 = vmatprep.subr.mxu0 0.0
      %323 = vmatpush1.xpose.msra.mxu0 0.0
      %324 = vmatprep.subr.mxu0 0.0
      %325 = vmatpush1.xpose.msra.mxu0 0.0
      %326 = vmatprep.subr.mxu0 0.0
      %327 = vmatpush1.xpose.msra.mxu0 0.0
      %328 = vmatprep.subr.mxu0 0.0
      %329 = vmatpush1.xpose.msra.mxu0 0.0
      %330 = vmatprep.subr.mxu0 0.0
      %331 = vmatpush1.xpose.msra.mxu0 0.0
      %332 = vmatprep.subr.mxu0 0.0
      %333 = vmatpush1.xpose.msra.mxu0 0.0
      %334 = vmatprep.subr.mxu0 0.0
      %335 = vmatpush1.xpose.msra.mxu0 0.0
      %336 = vmatprep.subr.mxu0 0.0
      %337 = vmatpush1.xpose.msra.mxu0 0.0
      %338 = vmatprep.subr.mxu0 0.0
      %339 = vmatpush1.xpose.msra.mxu0 0.0
      %340 = vmatprep.subr.mxu0 0.0
      %341 = vmatpush1.xpose.msra.mxu0 0.0
      %342 = vmatprep.subr.mxu0 0.0
      %343 = vmatpush1.xpose.msra.mxu0 0.0
      %344 = vmatprep.subr.mxu0 0.0
      %345 = vmatpush1.xpose.msra.mxu0 0.0
      %346 = vmatprep.subr.mxu0 0.0
      %347 = vmatpush1.xpose.msra.mxu0 0.0
      %348 = vmatprep.subr.mxu0 0.0
      %349 = vmatpush1.xpose.msra.mxu0 0.0
      %350 = vmatprep.mubr.f32.mxu0 0.0
      %351 = vmatmul.mubr.f32.gmra.mrb[0].mxu0 %v282
      %v352 = vpop.f32.mrb[0].mxu0
      %v353 = vadd.f32 0.0, %v352
      %v354 = vpop.f32.mrb[0].mxu0
      %355 = vdwg.mxu0
      %v356 = vsel %vm116, %v353, -inf
      %357 = vmax.xlane.f32.xlu0 %v356
      %v358 = vpop.xlane.xlu0 %357
      %v359 = vsub.f32 %v353, %v358
      %v360 = vmul.f32 %v359, 1.442695
      %v361 = vpow.pop %v360
      %v362 = vsel %vm116, %v361, 0.0
      %363 = vadd.xlane.f32.xlu0 %v362
      %v364 = vpop.xlane.xlu0 %363
      %v365 = vrcp.pop %v364
      %v366 = vmul.f32 %v361, %v365
      %367 = vrot.lane.b32.xlu0 %v112, 56
      %v368 = vpop.permute.xlu0 %367
      %v371 = vsel %vm116, %v366, 0
      %373 = vmatprep.subr.mxu0 0.0
      %374 = vmatpush1.msra.mxu0 %v368
      %375 = vmatprep.subr.mxu0 0.0
      %376 = vmatpush1.msra.mxu0 0.0
      %377 = vmatprep.subr.mxu0 0.0
      %378 = vmatpush1.msra.mxu0 0.0
      %379 = vmatprep.subr.mxu0 0.0
      %380 = vmatpush1.msra.mxu0 0.0
      %381 = vmatprep.subr.mxu0 0.0
      %382 = vmatpush1.msra.mxu0 0.0
      %383 = vmatprep.subr.mxu0 0.0
      %384 = vmatpush1.msra.mxu0 0.0
      %385 = vmatprep.subr.mxu0 0.0
      %386 = vmatpush1.msra.mxu0 0.0
      %387 = vmatprep.subr.mxu0 0.0
      %388 = vmatpush1.msra.mxu0 0.0
      %389 = vmatprep.subr.mxu0 0.0
      %390 = vmatpush1.msra.mxu0 0.0
      %391 = vmatprep.subr.mxu0 0.0
      %392 = vmatpush1.msra.mxu0 0.0
      %393 = vmatprep.subr.mxu0 0.0
      %394 = vmatpush1.msra.mxu0 0.0
      %395 = vmatprep.subr.mxu0 0.0
      %396 = vmatpush1.msra.mxu0 0.0
      %397 = vmatprep.subr.mxu0 0.0
      %398 = vmatpush1.msra.mxu0 0.0
      %399 = vmatprep.subr.mxu0 0.0
      %400 = vmatpush1.msra.mxu0 0.0
      %401 = vmatprep.subr.mxu0 0.0
      %402 = vmatpush1.msra.mxu0 0.0
      %403 = vmatprep.subr.mxu0 0.0
      %404 = vmatpush1.msra.mxu0 0.0
      %405 = vmatprep.subr.mxu0 0.0
      %406 = vmatpush1.msra.mxu0 0.0
      %407 = vmatprep.subr.mxu0 0.0
      %408 = vmatpush1.msra.mxu0 0.0
      %409 = vmatprep.subr.mxu0 0.0
      %410 = vmatpush1.msra.mxu0 0.0
      %411 = vmatprep.subr.mxu0 0.0
      %412 = vmatpush1.msra.mxu0 0.0
      %413 = vmatprep.subr.mxu0 0.0
      %414 = vmatpush1.msra.mxu0 0.0
      %415 = vmatprep.subr.mxu0 0.0
      %416 = vmatpush1.msra.mxu0 0.0
      %417 = vmatprep.subr.mxu0 0.0
      %418 = vmatpush1.msra.mxu0 0.0
      %419 = vmatprep.subr.mxu0 0.0
      %420 = vmatpush1.msra.mxu0 0.0
      %421 = vmatprep.subr.mxu0 0.0
      %422 = vmatpush1.msra.mxu0 0.0
      %423 = vmatprep.subr.mxu0 0.0
      %424 = vmatpush1.msra.mxu0 0.0
      %425 = vmatprep.subr.mxu0 0.0
      %426 = vmatpush1.msra.mxu0 0.0
      %427 = vmatprep.subr.mxu0 0.0
      %428 = vmatpush1.msra.mxu0 0.0
      %429 = vmatprep.subr.mxu0 0.0
      %430 = vmatpush1.msra.mxu0 0.0
      %431 = vmatprep.subr.mxu0 0.0
      %432 = vmatpush1.msra.mxu0 0.0
      %433 = vmatprep.subr.mxu0 0.0
      %434 = vmatpush1.msra.mxu0 0.0
      %435 = vmatprep.subr.mxu0 0.0
      %436 = vmatpush1.msra.mxu0 0.0
      %437 = vmatprep.mubr.f32.mxu0 0.0
      %438 = vmatmul.mubr.f32.gmra.mrb[0].mxu0 %v371
      %v439 = vpop.f32.mrb[0].mxu0
      %v440 = vadd.f32 0.0, %v439
      %v441 = vpop.f32.mrb[0].mxu0
      %442 = vdwg.mxu0
      %443 = vrot.lane.b32.xlu0 %v112, 112
      %v444 = vpop.permute.xlu0 %443
      %445 = vrot.lane.b32.xlu0 %v112, 80
      %v446 = vpop.permute.xlu0 %445
      %v447 = vsel %vm116, %v444, 0
      %v449 = vsel %vm116, %v446, 0
      %451 = vmatprep.subr.mxu0 0.0
      %452 = vmatpush1.xpose.msra.mxu0 %v449
      %453 = vmatprep.subr.mxu0 0.0
      %454 = vmatpush1.xpose.msra.mxu0 0.0
      %455 = vmatprep.subr.mxu0 0.0
      %456 = vmatpush1.xpose.msra.mxu0 0.0
      %457 = vmatprep.subr.mxu0 0.0
      %458 = vmatpush1.xpose.msra.mxu0 0.0
      %459 = vmatprep.subr.mxu0 0.0
      %460 = vmatpush1.xpose.msra.mxu0 0.0
      %461 = vmatprep.subr.mxu0 0.0
      %462 = vmatpush1.xpose.msra.mxu0 0.0
      %463 = vmatprep.subr.mxu0 0.0
      %464 = vmatpush1.xpose.msra.mxu0 0.0
      %465 = vmatprep.subr.mxu0 0.0
      %466 = vmatpush1.xpose.msra.mxu0 0.0
      %467 = vmatprep.subr.mxu0 0.0
      %468 = vmatpush1.xpose.msra.mxu0 0.0
      %469 = vmatprep.subr.mxu0 0.0
      %470 = vmatpush1.xpose.msra.mxu0 0.0
      %471 = vmatprep.subr.mxu0 0.0
      %472 = vmatpush1.xpose.msra.mxu0 0.0
      %473 = vmatprep.subr.mxu0 0.0
      %474 = vmatpush1.xpose.msra.mxu0 0.0
      %475 = vmatprep.subr.mxu0 0.0
      %476 = vmatpush1.xpose.msra.mxu0 0.0
      %477 = vmatprep.subr.mxu0 0.0
      %478 = vmatpush1.xpose.msra.mxu0 0.0
      %479 = vmatprep.subr.mxu0 0.0
      %480 = vmatpush1.xpose.msra.mxu0 0.0
      %481 = vmatprep.subr.mxu0 0.0
      %482 = vmatpush1.xpose.msra.mxu0 0.0
      %483 = vmatprep.subr.mxu0 0.0
      %484 = vmatpush1.xpose.msra.mxu0 0.0
      %485 = vmatprep.subr.mxu0 0.0
      %486 = vmatpush1.xpose.msra.mxu0 0.0
      %487 = vmatprep.subr.mxu0 0.0
      %488 = vmatpush1.xpose.msra.mxu0 0.0
      %489 = vmatprep.subr.mxu0 0.0
      %490 = vmatpush1.xpose.msra.mxu0 0.0
      %491 = vmatprep.subr.mxu0 0.0
      %492 = vmatpush1.xpose.msra.mxu0 0.0
      %493 = vmatprep.subr.mxu0 0.0
      %494 = vmatpush1.xpose.msra.mxu0 0.0
      %495 = vmatprep.subr.mxu0 0.0
      %496 = vmatpush1.xpose.msra.mxu0 0.0
      %497 = vmatprep.subr.mxu0 0.0
      %498 = vmatpush1.xpose.msra.mxu0 0.0
      %499 = vmatprep.subr.mxu0 0.0
      %500 = vmatpush1.xpose.msra.mxu0 0.0
      %501 = vmatprep.subr.mxu0 0.0
      %502 = vmatpush1.xpose.msra.mxu0 0.0
      %503 = vmatprep.subr.mxu0 0.0
      %504 = vmatpush1.xpose.msra.mxu0 0.0
      %505 = vmatprep.subr.mxu0 0.0
      %506 = vmatpush1.xpose.msra.mxu0 0.0
      %507 = vmatprep.subr.mxu0 0.0
      %508 = vmatpush1.xpose.msra.mxu0 0.0
      %509 = vmatprep.subr.mxu0 0.0
      %510 = vmatpush1.xpose.msra.mxu0 0.0
      %511 = vmatprep.subr.mxu0 0.0
      %512 = vmatpush1.xpose.msra.mxu0 0.0
      %513 = vmatprep.subr.mxu0 0.0
      %514 = vmatpush1.xpose.msra.mxu0 0.0
      %515 = vmatprep.mubr.f32.mxu0 0.0
      %516 = vmatmul.mubr.f32.gmra.mrb[0].mxu0 %v447
      %v517 = vpop.f32.mrb[0].mxu0
      %v518 = vadd.f32 0.0, %v517
      %v519 = vpop.f32.mrb[0].mxu0
      %520 = vdwg.mxu0
      %v521 = vsel %vm116, %v518, -inf
      %522 = vmax.xlane.f32.xlu0 %v521
      %v523 = vpop.xlane.xlu0 %522
      %v524 = vsub.f32 %v518, %v523
      %v525 = vmul.f32 %v524, 1.442695
      %v526 = vpow.pop %v525
      %v527 = vsel %vm116, %v526, 0.0
      %528 = vadd.xlane.f32.xlu0 %v527
      %v529 = vpop.xlane.xlu0 %528
      %v530 = vrcp.pop %v529
      %v531 = vmul.f32 %v526, %v530
      %532 = vrot.lane.b32.xlu0 %v112, 48
      %v533 = vpop.permute.xlu0 %532
      %v536 = vsel %vm116, %v531, 0
      %538 = vmatprep.subr.mxu0 0.0
      %539 = vmatpush1.msra.mxu0 %v533
      %540 = vmatprep.subr.mxu0 0.0
      %541 = vmatpush1.msra.mxu0 0.0
      %542 = vmatprep.subr.mxu0 0.0
      %543 = vmatpush1.msra.mxu0 0.0
      %544 = vmatprep.subr.mxu0 0.0
      %545 = vmatpush1.msra.mxu0 0.0
      %546 = vmatprep.subr.mxu0 0.0
      %547 = vmatpush1.msra.mxu0 0.0
      %548 = vmatprep.subr.mxu0 0.0
      %549 = vmatpush1.msra.mxu0 0.0
      %550 = vmatprep.subr.mxu0 0.0
      %551 = vmatpush1.msra.mxu0 0.0
      %552 = vmatprep.subr.mxu0 0.0
      %553 = vmatpush1.msra.mxu0 0.0
      %554 = vmatprep.subr.mxu0 0.0
      %555 = vmatpush1.msra.mxu0 0.0
      %556 = vmatprep.subr.mxu0 0.0
      %557 = vmatpush1.msra.mxu0 0.0
      %558 = vmatprep.subr.mxu0 0.0
      %559 = vmatpush1.msra.mxu0 0.0
      %560 = vmatprep.subr.mxu0 0.0
      %561 = vmatpush1.msra.mxu0 0.0
      %562 = vmatprep.subr.mxu0 0.0
      %563 = vmatpush1.msra.mxu0 0.0
      %564 = vmatprep.subr.mxu0 0.0
      %565 = vmatpush1.msra.mxu0 0.0
      %566 = vmatprep.subr.mxu0 0.0
      %567 = vmatpush1.msra.mxu0 0.0
      %568 = vmatprep.subr.mxu0 0.0
      %569 = vmatpush1.msra.mxu0 0.0
      %570 = vmatprep.subr.mxu0 0.0
      %571 = vmatpush1.msra.mxu0 0.0
      %572 = vmatprep.subr.mxu0 0.0
      %573 = vmatpush1.msra.mxu0 0.0
      %574 = vmatprep.subr.mxu0 0.0
      %575 = vmatpush1.msra.mxu0 0.0
      %576 = vmatprep.subr.mxu0 0.0
      %577 = vmatpush1.msra.mxu0 0.0
      %578 = vmatprep.subr.mxu0 0.0
      %579 = vmatpush1.msra.mxu0 0.0
      %580 = vmatprep.subr.mxu0 0.0
      %581 = vmatpush1.msra.mxu0 0.0
      %582 = vmatprep.subr.mxu0 0.0
      %583 = vmatpush1.msra.mxu0 0.0
      %584 = vmatprep.subr.mxu0 0.0
      %585 = vmatpush1.msra.mxu0 0.0
      %586 = vmatprep.subr.mxu0 0.0
      %587 = vmatpush1.msra.mxu0 0.0
      %588 = vmatprep.subr.mxu0 0.0
      %589 = vmatpush1.msra.mxu0 0.0
      %590 = vmatprep.subr.mxu0 0.0
      %591 = vmatpush1.msra.mxu0 0.0
      %592 = vmatprep.subr.mxu0 0.0
      %593 = vmatpush1.msra.mxu0 0.0
      %594 = vmatprep.subr.mxu0 0.0
      %595 = vmatpush1.msra.mxu0 0.0
      %596 = vmatprep.subr.mxu0 0.0
      %597 = vmatpush1.msra.mxu0 0.0
      %598 = vmatprep.subr.mxu0 0.0
      %599 = vmatpush1.msra.mxu0 0.0
      %600 = vmatprep.subr.mxu0 0.0
      %601 = vmatpush1.msra.mxu0 0.0
      %602 = vmatprep.mubr.f32.mxu0 0.0
      %603 = vmatmul.mubr.f32.gmra.mrb[0].mxu0 %v536
      %v604 = vpop.f32.mrb[0].mxu0
      %v605 = vadd.f32 0.0, %v604
      %v606 = vpop.f32.mrb[0].mxu0
      %607 = vdwg.mxu0
      %608 = vrot.lane.b32.xlu0 %v112, 104
      %v609 = vpop.permute.xlu0 %608
      %610 = vrot.lane.b32.xlu0 %v112, 72
      %v611 = vpop.permute.xlu0 %610
      %v612 = vsel %vm116, %v609, 0
      %v614 = vsel %vm116, %v611, 0
      %616 = vmatprep.subr.mxu0 0.0
      %617 = vmatpush1.xpose.msra.mxu0 %v614
      %618 = vmatprep.subr.mxu0 0.0
      %619 = vmatpush1.xpose.msra.mxu0 0.0
      %620 = vmatprep.subr.mxu0 0.0
      %621 = vmatpush1.xpose.msra.mxu0 0.0
      %622 = vmatprep.subr.mxu0 0.0
      %623 = vmatpush1.xpose.msra.mxu0 0.0
      %624 = vmatprep.subr.mxu0 0.0
      %625 = vmatpush1.xpose.msra.mxu0 0.0
      %626 = vmatprep.subr.mxu0 0.0
      %627 = vmatpush1.xpose.msra.mxu0 0.0
      %628 = vmatprep.subr.mxu0 0.0
      %629 = vmatpush1.xpose.msra.mxu0 0.0
      %630 = vmatprep.subr.mxu0 0.0
      %631 = vmatpush1.xpose.msra.mxu0 0.0
      %632 = vmatprep.subr.mxu0 0.0
      %633 = vmatpush1.xpose.msra.mxu0 0.0
      %634 = vmatprep.subr.mxu0 0.0
      %635 = vmatpush1.xpose.msra.mxu0 0.0
      %636 = vmatprep.subr.mxu0 0.0
      %637 = vmatpush1.xpose.msra.mxu0 0.0
      %638 = vmatprep.subr.mxu0 0.0
      %639 = vmatpush1.xpose.msra.mxu0 0.0
      %640 = vmatprep.subr.mxu0 0.0
      %641 = vmatpush1.xpose.msra.mxu0 0.0
      %642 = vmatprep.subr.mxu0 0.0
      %643 = vmatpush1.xpose.msra.mxu0 0.0
      %644 = vmatprep.subr.mxu0 0.0
      %645 = vmatpush1.xpose.msra.mxu0 0.0
      %646 = vmatprep.subr.mxu0 0.0
      %647 = vmatpush1.xpose.msra.mxu0 0.0
      %648 = vmatprep.subr.mxu0 0.0
      %649 = vmatpush1.xpose.msra.mxu0 0.0
      %650 = vmatprep.subr.mxu0 0.0
      %651 = vmatpush1.xpose.msra.mxu0 0.0
      %652 = vmatprep.subr.mxu0 0.0
      %653 = vmatpush1.xpose.msra.mxu0 0.0
      %654 = vmatprep.subr.mxu0 0.0
      %655 = vmatpush1.xpose.msra.mxu0 0.0
      %656 = vmatprep.subr.mxu0 0.0
      %657 = vmatpush1.xpose.msra.mxu0 0.0
      %658 = vmatprep.subr.mxu0 0.0
      %659 = vmatpush1.xpose.msra.mxu0 0.0
      %660 = vmatprep.subr.mxu0 0.0
      %661 = vmatpush1.xpose.msra.mxu0 0.0
      %662 = vmatprep.subr.mxu0 0.0
      %663 = vmatpush1.xpose.msra.mxu0 0.0
      %664 = vmatprep.subr.mxu0 0.0
      %665 = vmatpush1.xpose.msra.mxu0 0.0
      %666 = vmatprep.subr.mxu0 0.0
      %667 = vmatpush1.xpose.msra.mxu0 0.0
      %668 = vmatprep.subr.mxu0 0.0
      %669 = vmatpush1.xpose.msra.mxu0 0.0
      %670 = vmatprep.subr.mxu0 0.0
      %671 = vmatpush1.xpose.msra.mxu0 0.0
      %672 = vmatprep.subr.mxu0 0.0
      %673 = vmatpush1.xpose.msra.mxu0 0.0
      %674 = vmatprep.subr.mxu0 0.0
      %675 = vmatpush1.xpose.msra.mxu0 0.0
      %676 = vmatprep.subr.mxu0 0.0
      %677 = vmatpush1.xpose.msra.mxu0 0.0
      %678 = vmatprep.subr.mxu0 0.0
      %679 = vmatpush1.xpose.msra.mxu0 0.0
      %680 = vmatprep.mubr.f32.mxu0 0.0
      %681 = vmatmul.mubr.f32.gmra.mrb[0].mxu0 %v612
      %v682 = vpop.f32.mrb[0].mxu0
      %v683 = vadd.f32 0.0, %v682
      %v684 = vpop.f32.mrb[0].mxu0
      %685 = vdwg.mxu0
      %v686 = vsel %vm116, %v683, -inf
      %687 = vmax.xlane.f32.xlu0 %v686
      %v688 = vpop.xlane.xlu0 %687
      %v689 = vsub.f32 %v683, %v688
      %v690 = vmul.f32 %v689, 1.442695
      %v691 = vpow.pop %v690
      %v692 = vsel %vm116, %v691, 0.0
      %693 = vadd.xlane.f32.xlu0 %v692
      %v694 = vpop.xlane.xlu0 %693
      %v695 = vrcp.pop %v694
      %v696 = vmul.f32 %v691, %v695
      %697 = vrot.lane.b32.xlu0 %v112, 40
      %v698 = vpop.permute.xlu0 %697
      %v701 = vsel %vm116, %v696, 0
      %703 = vmatprep.subr.mxu0 0.0
      %704 = vmatpush1.msra.mxu0 %v698
      %705 = vmatprep.subr.mxu0 0.0
      %706 = vmatpush1.msra.mxu0 0.0
      %707 = vmatprep.subr.mxu0 0.0
      %708 = vmatpush1.msra.mxu0 0.0
      %709 = vmatprep.subr.mxu0 0.0
      %710 = vmatpush1.msra.mxu0 0.0
      %711 = vmatprep.subr.mxu0 0.0
      %712 = vmatpush1.msra.mxu0 0.0
      %713 = vmatprep.subr.mxu0 0.0
      %714 = vmatpush1.msra.mxu0 0.0
      %715 = vmatprep.subr.mxu0 0.0
      %716 = vmatpush1.msra.mxu0 0.0
      %717 = vmatprep.subr.mxu0 0.0
      %718 = vmatpush1.msra.mxu0 0.0
      %719 = vmatprep.subr.mxu0 0.0
      %720 = vmatpush1.msra.mxu0 0.0
      %721 = vmatprep.subr.mxu0 0.0
      %722 = vmatpush1.msra.mxu0 0.0
      %723 = vmatprep.subr.mxu0 0.0
      %724 = vmatpush1.msra.mxu0 0.0
      %725 = vmatprep.subr.mxu0 0.0
      %726 = vmatpush1.msra.mxu0 0.0
      %727 = vmatprep.subr.mxu0 0.0
      %728 = vmatpush1.msra.mxu0 0.0
      %729 = vmatprep.subr.mxu0 0.0
      %730 = vmatpush1.msra.mxu0 0.0
      %731 = vmatprep.subr.mxu0 0.0
      %732 = vmatpush1.msra.mxu0 0.0
      %733 = vmatprep.subr.mxu0 0.0
      %734 = vmatpush1.msra.mxu0 0.0
      %735 = vmatprep.subr.mxu0 0.0
      %736 = vmatpush1.msra.mxu0 0.0
      %737 = vmatprep.subr.mxu0 0.0
      %738 = vmatpush1.msra.mxu0 0.0
      %739 = vmatprep.subr.mxu0 0.0
      %740 = vmatpush1.msra.mxu0 0.0
      %741 = vmatprep.subr.mxu0 0.0
      %742 = vmatpush1.msra.mxu0 0.0
      %743 = vmatprep.subr.mxu0 0.0
      %744 = vmatpush1.msra.mxu0 0.0
      %745 = vmatprep.subr.mxu0 0.0
      %746 = vmatpush1.msra.mxu0 0.0
      %747 = vmatprep.subr.mxu0 0.0
      %748 = vmatpush1.msra.mxu0 0.0
      %749 = vmatprep.subr.mxu0 0.0
      %750 = vmatpush1.msra.mxu0 0.0
      %751 = vmatprep.subr.mxu0 0.0
      %752 = vmatpush1.msra.mxu0 0.0
      %753 = vmatprep.subr.mxu0 0.0
      %754 = vmatpush1.msra.mxu0 0.0
      %755 = vmatprep.subr.mxu0 0.0
      %756 = vmatpush1.msra.mxu0 0.0
      %757 = vmatprep.subr.mxu0 0.0
      %758 = vmatpush1.msra.mxu0 0.0
      %759 = vmatprep.subr.mxu0 0.0
      %760 = vmatpush1.msra.mxu0 0.0
      %761 = vmatprep.subr.mxu0 0.0
      %762 = vmatpush1.msra.mxu0 0.0
      %763 = vmatprep.subr.mxu0 0.0
      %764 = vmatpush1.msra.mxu0 0.0
      %765 = vmatprep.subr.mxu0 0.0
      %766 = vmatpush1.msra.mxu0 0.0
      %767 = vmatprep.mubr.f32.mxu0 0.0
      %768 = vmatmul.mubr.f32.gmra.mrb[0].mxu0 %v701
      %v769 = vpop.f32.mrb[0].mxu0
      %v770 = vadd.f32 0.0, %v769
      %v771 = vpop.f32.mrb[0].mxu0
      %772 = vdwg.mxu0
      %774 = vrot.lane.b32.xlu0 %v440, 8
      %v775 = vpop.permute.xlu0 %774
      %778 = vrot.lane.b32.xlu0 %v605, 16
      %v779 = vpop.permute.xlu0 %778
      %782 = vrot.lane.b32.xlu0 %v770, 24
      %v783 = vpop.permute.xlu0 %782
      %v785 = vsel %vm116, %v275, %v775
      %vm786 = vcmask 130048
      %v787 = vsel %vm786, %v785, %v779
      %vm788 = vcmask 195584
      %v789 = vsel %vm788, %v787, %v783
      %vm790 = vcmask 261120
      %791 = vst.msk [vmem:[%s111] sm:$0xff] %vm790, %v789
      %p792 = scmp.lt.s32.totalorder %s12, 1
      %s793 = scalar_select %p792, %s12, 1
      %s794 = smul.addr %s793, 8
      %s795 = scalar_lea.vmem %s1, %s794
      // Predicated region
      $region25: #{transformer_decoder_layer.10} parent=23 // pred_check
        %p796 = pneg %p56
      $region26: #{transformer_decoder_layer.10} parent=23 // pred_check_branch
        %798 = sbr.rel (%p796) target = $region28
      $region27: #{transformer_decoder_layer.10} parent=23 // pred_region
        _
      $region28: #{transformer_decoder_layer.10} parent=23 // pred_fallthru
        _
    $region24: #{transformer_decoder_layer.10} parent=5 // pred_fallthru
      _
    %p799 = scmp.le.s32.totalorder 2, %s7
    // Predicated region
    $region29: #{transformer_decoder_layer.10} parent=5 // pred_check
      %p800 = pneg %p799
    $region30: #{transformer_decoder_layer.10} parent=5 // pred_check_branch
      %802 = sbr.rel (%p800) target = $region32
    $region31: #{transformer_decoder_layer.10} parent=5 // pred_region
      %s803 = ssub.s32 %s7, 2
      // Predicated region
      $region33: #{transformer_decoder_layer.10} parent=31 // pred_check
        %p804 = pneg %p62
      $region34: #{transformer_decoder_layer.10} parent=31 // pred_check_branch
        %806 = sbr.rel (%p804) target = $region36
      $region35: #{transformer_decoder_layer.10} parent=31 // pred_region
        %p807 = scmp.lt.s32.totalorder %s13, 1
        %s808 = scalar_select %p807, %s13, 1
        %s809 = smul.addr %s808, 8
        %s810 = scalar_lea.vmem %s1, %s809
      $region36: #{transformer_decoder_layer.10} parent=31 // pred_fallthru
        _
    $region32: #{transformer_decoder_layer.10} parent=5 // pred_fallthru
      _
  $region6: #{transformer_decoder_layer.10} parent=0 // loop_footer
    %s11 = sadd.s32 1, %s7
  $region7: #{transformer_decoder_layer.10} parent=0 // loop_footer_branch
    %6 = sbr.rel target = $region3
  $region8: #{transformer_decoder_layer.10} parent=0 // loop_exit
    _

// kernel: transformer_decoder_layer.13
$region0: #{transformer_decoder_layer.13}
  #allocation0 [shape = 'u32[]', space=smem, size = 0x4, offset = 0x4, fixed_abs, tag = 'smem constant byte address 0x4 - core index']
  #allocation1 [shape = 'u32[144,128]{1,0:T(1,128)}', space=vmem, size = 0x12000, scoped, tag = 'internal scratch']
  #allocation2 [shape = 'f32[32,64]{1,0:T(8,128)}', space=vmem, size = 0x4000, scoped, tag = 'scratch operand']
  %s0 = inlined_call_operand.vmem [shape: f32[32,32], index: 0, kind: input, shape index: {}]
  %s1 = inlined_call_operand.vmem [shape: f32[32,64], index: 1, kind: input, shape index: {}]
  %s2 = inlined_call_operand.vmem [shape: f32[1,64], index: 2, kind: input, shape index: {}]
  %s3 = inlined_call_operand.vmem [shape: f32[32,64], index: 3, kind: output, shape index: {}]
  %s4 = sld [smem:[#allocation0]]
  $region30: #{transformer_decoder_layer.13} parent=0
    _
  %s6 = ssub.s32 1, %s4
  %s7 = scalar_select 0, %s6, %s4
  // Predicated region
  $region2: #{transformer_decoder_layer.13} parent=0 // pred_check
    _
  $region3: #{transformer_decoder_layer.13} parent=0 // pred_check_branch
    %9 = sbr.rel (0) target = $region5
  $region4: #{transformer_decoder_layer.13} parent=0 // pred_region
    _
  $region5: #{transformer_decoder_layer.13} parent=0 // pred_fallthru
    _
  // Predicated region
  $region6: #{transformer_decoder_layer.13} parent=0 // pred_check
    _
  $region7: #{transformer_decoder_layer.13} parent=0 // pred_check_branch
    %11 = sbr.rel (0) target = $region9
  $region8: #{transformer_decoder_layer.13} parent=0 // pred_region
    _
  $region9: #{transformer_decoder_layer.13} parent=0 // pred_fallthru
    _
  // Predicated region
  $region10: #{transformer_decoder_layer.13} parent=0 // pred_check
    _
  $region11: #{transformer_decoder_layer.13} parent=0 // pred_check_branch
    %13 = sbr.rel (0) target = $region13
  $region12: #{transformer_decoder_layer.13} parent=0 // pred_region
    _
  $region13: #{transformer_decoder_layer.13} parent=0 // pred_fallthru
    _
  %p14 = scmp.eq.s32.totalorder 0, 0
  // Predicated region
  $region14: #{transformer_decoder_layer.13} parent=0 // pred_check
    %p15 = pneg %p14
  $region15: #{transformer_decoder_layer.13} parent=0 // pred_check_branch
    %17 = sbr.rel (%p15) target = $region17
  $region16: #{transformer_decoder_layer.13} parent=0 // pred_region
    %vm18 = vcmask 523264
    %19 = vst.msk [vmem:[#allocation2] sm:$0xff] %vm18, 0.0
    %20 = vst.msk [vmem:[#allocation2 + $0x8] sm:$0xff] %vm18, 0.0
    %21 = vst.msk [vmem:[#allocation2 + $0x10] sm:$0xff] %vm18, 0.0
    %22 = vst.msk [vmem:[#allocation2 + $0x18] sm:$0xff] %vm18, 0.0
  $region17: #{transformer_decoder_layer.13} parent=0 // pred_fallthru
    _
  %v23 = vld [vmem:[#allocation2] sm:$0xff]
  %v24 = vld [vmem:[#allocation2 + $0x8] sm:$0xff]
  %v25 = vld [vmem:[#allocation2 + $0x10] sm:$0xff]
  %v26 = vld [vmem:[#allocation2 + $0x18] sm:$0xff]
  %v27 = vld [vmem:[%s0] sm:$0xff]
  %v28 = vld [vmem:[%s0 + $0x8] sm:$0xff]
  %v29 = vld [vmem:[%s0 + $0x10] sm:$0xff]
  %v30 = vld [vmem:[%s0 + $0x18] sm:$0xff]
  %v31 = vld [vmem:[%s1] sm:$0xff]
  %v32 = vld [vmem:[%s1 + $0x8] sm:$0xff]
  %v33 = vld [vmem:[%s1 + $0x10] sm:$0xff]
  %v34 = vld [vmem:[%s1 + $0x18] sm:$0xff]
  %vm35 = vcmask 261120
  %v37 = vsel %vm35, %v27, 0
  %v40 = vsel %vm35, %v28, 0
  %v43 = vsel %vm35, %v29, 0
  %v46 = vsel %vm35, %v30, 0
  %48 = vmatprep.subr.mxu0 0.0
  %49 = vmatpush1.msra.mxu0 %v31
  %50 = vmatprep.subr.mxu0 0.0
  %51 = vmatpush1.msra.mxu0 %v32
  %52 = vmatprep.subr.mxu0 0.0
  %53 = vmatpush1.msra.mxu0 %v33
  %54 = vmatprep.subr.mxu0 0.0
  %55 = vmatpush1.msra.mxu0 %v34
  %56 = vmatprep.subr.mxu0 0.0
  %57 = vmatpush1.msra.mxu0 0.0
  %58 = vmatprep.subr.mxu0 0.0
  %59 = vmatpush1.msra.mxu0 0.0
  %60 = vmatprep.subr.mxu0 0.0
  %61 = vmatpush1.msra.mxu0 0.0
  %62 = vmatprep.subr.mxu0 0.0
  %63 = vmatpush1.msra.mxu0 0.0
  %64 = vmatprep.subr.mxu0 0.0
  %65 = vmatpush1.msra.mxu0 0.0
  %66 = vmatprep.subr.mxu0 0.0
  %67 = vmatpush1.msra.mxu0 0.0
  %68 = vmatprep.subr.mxu0 0.0
  %69 = vmatpush1.msra.mxu0 0.0
  %70 = vmatprep.subr.mxu0 0.0
  %71 = vmatpush1.msra.mxu0 0.0
  %72 = vmatprep.subr.mxu0 0.0
  %73 = vmatpush1.msra.mxu0 0.0
  %74 = vmatprep.subr.mxu0 0.0
  %75 = vmatpush1.msra.mxu0 0.0
  %76 = vmatprep.subr.mxu0 0.0
  %77 = vmatpush1.msra.mxu0 0.0
  %78 = vmatprep.subr.mxu0 0.0
  %79 = vmatpush1.msra.mxu0 0.0
  %80 = vmatprep.subr.mxu0 0.0
  %81 = vmatpush1.msra.mxu0 0.0
  %82 = vmatprep.subr.mxu0 0.0
  %83 = vmatpush1.msra.mxu0 0.0
  %84 = vmatprep.subr.mxu0 0.0
  %85 = vmatpush1.msra.mxu0 0.0
  %86 = vmatprep.subr.mxu0 0.0
  %87 = vmatpush1.msra.mxu0 0.0
  %88 = vmatprep.subr.mxu0 0.0
  %89 = vmatpush1.msra.mxu0 0.0
  %90 = vmatprep.subr.mxu0 0.0
  %91 = vmatpush1.msra.mxu0 0.0
  %92 = vmatprep.subr.mxu0 0.0
  %93 = vmatpush1.msra.mxu0 0.0
  %94 = vmatprep.subr.mxu0 0.0
  %95 = vmatpush1.msra.mxu0 0.0
  %96 = vmatprep.subr.mxu0 0.0
  %97 = vmatpush1.msra.mxu0 0.0
  %98 = vmatprep.subr.mxu0 0.0
  %99 = vmatpush1.msra.mxu0 0.0
  %100 = vmatprep.subr.mxu0 0.0
  %101 = vmatpush1.msra.mxu0 0.0
  %102 = vmatprep.subr.mxu0 0.0
  %103 = vmatpush1.msra.mxu0 0.0
  %104 = vmatprep.subr.mxu0 0.0
  %105 = vmatpush1.msra.mxu0 0.0
  %106 = vmatprep.subr.mxu0 0.0
  %107 = vmatpush1.msra.mxu0 0.0
  %108 = vmatprep.subr.mxu0 0.0
  %109 = vmatpush1.msra.mxu0 0.0
  %110 = vmatprep.subr.mxu0 0.0
  %111 = vmatpush1.msra.mxu0 0.0
  %112 = vmatprep.mubr.f32.mxu0 0.0
  %113 = vmatmul.mubr.f32.gmra.mrb[0].mxu0 %v37
  %v114 = vpop.f32.mrb[0].mxu0
  %v115 = vadd.f32 0.0, %v114
  %v116 = vpop.f32.mrb[0].mxu0
  %117 = vmatprep.mubr.f32.mxu0 0.0
  %118 = vmatmul.mubr.f32.gmra.mrb[0].mxu0 %v40
  %v119 = vpop.f32.mrb[0].mxu0
  %v120 = vadd.f32 0.0, %v119
  %v121 = vpop.f32.mrb[0].mxu0
  %122 = vmatprep.mubr.f32.mxu0 0.0
  %123 = vmatmul.mubr.f32.gmra.mrb[0].mxu0 %v43
  %v124 = vpop.f32.mrb[0].mxu0
  %v125 = vadd.f32 0.0, %v124
  %v126 = vpop.f32.mrb[0].mxu0
  %127 = vmatprep.mubr.f32.mxu0 0.0
  %128 = vmatmul.mubr.f32.gmra.mrb[0].mxu0 %v46
  %v129 = vpop.f32.mrb[0].mxu0
  %v130 = vadd.f32 0.0, %v129
  %v131 = vpop.f32.mrb[0].mxu0
  %132 = vdwg.mxu0
  %v133 = vadd.f32 %v23, %v115
  %v134 = vadd.f32 %v24, %v120
  %v135 = vadd.f32 %v25, %v125
  %v136 = vadd.f32 %v26, %v130
  %vm137 = vcmask 523264
  %138 = vst.msk [vmem:[#allocation2] sm:$0xff] %vm137, %v133
  %139 = vst.msk [vmem:[#allocation2 + $0x8] sm:$0xff] %vm137, %v134
  %140 = vst.msk [vmem:[#allocation2 + $0x10] sm:$0xff] %vm137, %v135
  %141 = vst.msk [vmem:[#allocation2 + $0x18] sm:$0xff] %vm137, %v136
  // Predicated region
  $region18: #{transformer_decoder_layer.13} parent=0 // pred_check
    %p142 = pneg %p14
  $region19: #{transformer_decoder_layer.13} parent=0 // pred_check_branch
    %144 = sbr.rel (%p142) target = $region21
  $region20: #{transformer_decoder_layer.13} parent=0 // pred_region
    %v145 = vld [vmem:[#allocation2] sm:$0xff]
    %v146 = vld [vmem:[#allocation2 + $0x8] sm:$0xff]
    %v147 = vld [vmem:[#allocation2 + $0x10] sm:$0xff]
    %v148 = vld [vmem:[#allocation2 + $0x18] sm:$0xff]
    %v149 = vld [vmem:[%s2] sm:$0x1]
    %v151 = vlaneseq
    %v152 = vshrl.u32 %v151, 7
    %v153 = vsub.s32 0, %v152
    %v154 = vrot.slane %v149, %v153
    %v156 = vadd.f32 %v145, %v154
    %v157 = vadd.f32 %v146, %v154
    %v158 = vadd.f32 %v147, %v154
    %v159 = vadd.f32 %v148, %v154
    %160 = vst.msk [vmem:[%s3] sm:$0xff] %vm137, %v156
    %161 = vst.msk [vmem:[%s3 + $0x8] sm:$0xff] %vm137, %v157
    %162 = vst.msk [vmem:[%s3 + $0x10] sm:$0xff] %vm137, %v158
    %163 = vst.msk [vmem:[%s3 + $0x18] sm:$0xff] %vm137, %v159
  $region21: #{transformer_decoder_layer.13} parent=0 // pred_fallthru
    _
  // Predicated region
  $region22: #{transformer_decoder_layer.13} parent=0 // pred_check
    _
  $region23: #{transformer_decoder_layer.13} parent=0 // pred_check_branch
    %165 = sbr.rel (0) target = $region25
  $region24: #{transformer_decoder_layer.13} parent=0 // pred_region
    _
  $region25: #{transformer_decoder_layer.13} parent=0 // pred_fallthru
    _
  // Predicated region
  $region26: #{transformer_decoder_layer.13} parent=0 // pred_check
    _
  $region27: #{transformer_decoder_layer.13} parent=0 // pred_check_branch
    %167 = sbr.rel (0) target = $region29
  $region28: #{transformer_decoder_layer.13} parent=0 // pred_region
    _
  $region29: #{transformer_decoder_layer.13} parent=0 // pred_fallthru
    _

// kernel: transformer_decoder_layer.16
$region0: #{transformer_decoder_layer.16}
  #allocation0 [shape = 'u32[]', space=smem, size = 0x4, offset = 0x4, fixed_abs, tag = 'smem constant byte address 0x4 - core index']
  #allocation1 [shape = 'u32[144,128]{1,0:T(1,128)}', space=vmem, size = 0x12000, scoped, tag = 'internal scratch']
  #allocation2 [shape = 'f32[16,64]{1,0:T(8,128)}', space=vmem, size = 0x2000, scoped, tag = 'scratch operand']
  %s0 = inlined_call_operand.vmem [shape: f32[16,32], index: 0, kind: input, shape index: {}]
  %s1 = inlined_call_operand.vmem [shape: f32[32,64], index: 1, kind: input, shape index: {}]
  %s2 = inlined_call_operand.vmem [shape: f32[1,64], index: 2, kind: input, shape index: {}]
  %s3 = inlined_call_operand.vmem [shape: f32[16,64], index: 3, kind: output, shape index: {}]
  %s4 = sld [smem:[#allocation0]]
  $region30: #{transformer_decoder_layer.16} parent=0
    _
  %s6 = ssub.s32 1, %s4
  %s7 = scalar_select 0, %s6, %s4
  // Predicated region
  $region2: #{transformer_decoder_layer.16} parent=0 // pred_check
    _
  $region3: #{transformer_decoder_layer.16} parent=0 // pred_check_branch
    %9 = sbr.rel (0) target = $region5
  $region4: #{transformer_decoder_layer.16} parent=0 // pred_region
    _
  $region5: #{transformer_decoder_layer.16} parent=0 // pred_fallthru
    _
  // Predicated region
  $region6: #{transformer_decoder_layer.16} parent=0 // pred_check
    _
  $region7: #{transformer_decoder_layer.16} parent=0 // pred_check_branch
    %11 = sbr.rel (0) target = $region9
  $region8: #{transformer_decoder_layer.16} parent=0 // pred_region
    _
  $region9: #{transformer_decoder_layer.16} parent=0 // pred_fallthru
    _
  // Predicated region
  $region10: #{transformer_decoder_layer.16} parent=0 // pred_check
    _
  $region11: #{transformer_decoder_layer.16} parent=0 // pred_check_branch
    %13 = sbr.rel (0) target = $region13
  $region12: #{transformer_decoder_layer.16} parent=0 // pred_region
    _
  $region13: #{transformer_decoder_layer.16} parent=0 // pred_fallthru
    _
  %p14 = scmp.eq.s32.totalorder 0, 0
  // Predicated region
  $region14: #{transformer_decoder_layer.16} parent=0 // pred_check
    %p15 = pneg %p14
  $region15: #{transformer_decoder_layer.16} parent=0 // pred_check_branch
    %17 = sbr.rel (%p15) target = $region17
  $region16: #{transformer_decoder_layer.16} parent=0 // pred_region
    %vm18 = vcmask 523264
    %19 = vst.msk [vmem:[#allocation2] sm:$0xff] %vm18, 0.0
    %20 = vst.msk [vmem:[#allocation2 + $0x8] sm:$0xff] %vm18, 0.0
  $region17: #{transformer_decoder_layer.16} parent=0 // pred_fallthru
    _
  %v21 = vld [vmem:[#allocation2] sm:$0xff]
  %v22 = vld [vmem:[#allocation2 + $0x8] sm:$0xff]
  %v23 = vld [vmem:[%s0] sm:$0xff]
  %v24 = vld [vmem:[%s0 + $0x8] sm:$0xff]
  %v25 = vld [vmem:[%s1] sm:$0xff]
  %v26 = vld [vmem:[%s1 + $0x8] sm:$0xff]
  %v27 = vld [vmem:[%s1 + $0x10] sm:$0xff]
  %v28 = vld [vmem:[%s1 + $0x18] sm:$0xff]
  %vm29 = vcmask 261120
  %v31 = vsel %vm29, %v23, 0
  %v34 = vsel %vm29, %v24, 0
  %36 = vmatprep.subr.mxu0 0.0
  %37 = vmatpush1.msra.mxu0 %v25
  %38 = vmatprep.subr.mxu0 0.0
  %39 = vmatpush1.msra.mxu0 %v26
  %40 = vmatprep.subr.mxu0 0.0
  %41 = vmatpush1.msra.mxu0 %v27
  %42 = vmatprep.subr.mxu0 0.0
  %43 = vmatpush1.msra.mxu0 %v28
  %44 = vmatprep.subr.mxu0 0.0
  %45 = vmatpush1.msra.mxu0 0.0
  %46 = vmatprep.subr.mxu0 0.0
  %47 = vmatpush1.msra.mxu0 0.0
  %48 = vmatprep.subr.mxu0 0.0
  %49 = vmatpush1.msra.mxu0 0.0
  %50 = vmatprep.subr.mxu0 0.0
  %51 = vmatpush1.msra.mxu0 0.0
  %52 = vmatprep.subr.mxu0 0.0
  %53 = vmatpush1.msra.mxu0 0.0
  %54 = vmatprep.subr.mxu0 0.0
  %55 = vmatpush1.msra.mxu0 0.0
  %56 = vmatprep.subr.mxu0 0.0
  %57 = vmatpush1.msra.mxu0 0.0
  %58 = vmatprep.subr.mxu0 0.0
  %59 = vmatpush1.msra.mxu0 0.0
  %60 = vmatprep.subr.mxu0 0.0
  %61 = vmatpush1.msra.mxu0 0.0
  %62 = vmatprep.subr.mxu0 0.0
  %63 = vmatpush1.msra.mxu0 0.0
  %64 = vmatprep.subr.mxu0 0.0
  %65 = vmatpush1.msra.mxu0 0.0
  %66 = vmatprep.subr.mxu0 0.0
  %67 = vmatpush1.msra.mxu0 0.0
  %68 = vmatprep.subr.mxu0 0.0
  %69 = vmatpush1.msra.mxu0 0.0
  %70 = vmatprep.subr.mxu0 0.0
  %71 = vmatpush1.msra.mxu0 0.0
  %72 = vmatprep.subr.mxu0 0.0
  %73 = vmatpush1.msra.mxu0 0.0
  %74 = vmatprep.subr.mxu0 0.0
  %75 = vmatpush1.msra.mxu0 0.0
  %76 = vmatprep.subr.mxu0 0.0
  %77 = vmatpush1.msra.mxu0 0.0
  %78 = vmatprep.subr.mxu0 0.0
  %79 = vmatpush1.msra.mxu0 0.0
  %80 = vmatprep.subr.mxu0 0.0
  %81 = vmatpush1.msra.mxu0 0.0
  %82 = vmatprep.subr.mxu0 0.0
  %83 = vmatpush1.msra.mxu0 0.0
  %84 = vmatprep.subr.mxu0 0.0
  %85 = vmatpush1.msra.mxu0 0.0
  %86 = vmatprep.subr.mxu0 0.0
  %87 = vmatpush1.msra.mxu0 0.0
  %88 = vmatprep.subr.mxu0 0.0
  %89 = vmatpush1.msra.mxu0 0.0
  %90 = vmatprep.subr.mxu0 0.0
  %91 = vmatpush1.msra.mxu0 0.0
  %92 = vmatprep.subr.mxu0 0.0
  %93 = vmatpush1.msra.mxu0 0.0
  %94 = vmatprep.subr.mxu0 0.0
  %95 = vmatpush1.msra.mxu0 0.0
  %96 = vmatprep.subr.mxu0 0.0
  %97 = vmatpush1.msra.mxu0 0.0
  %98 = vmatprep.subr.mxu0 0.0
  %99 = vmatpush1.msra.mxu0 0.0
  %100 = vmatprep.mubr.f32.mxu0 0.0
  %101 = vmatmul.mubr.f32.gmra.mrb[0].mxu0 %v31
  %v102 = vpop.f32.mrb[0].mxu0
  %v103 = vadd.f32 0.0, %v102
  %v104 = vpop.f32.mrb[0].mxu0
  %105 = vmatprep.mubr.f32.mxu0 0.0
  %106 = vmatmul.mubr.f32.gmra.mrb[0].mxu0 %v34
  %v107 = vpop.f32.mrb[0].mxu0
  %v108 = vadd.f32 0.0, %v107
  %v109 = vpop.f32.mrb[0].mxu0
  %110 = vdwg.mxu0
  %v111 = vadd.f32 %v21, %v103
  %v112 = vadd.f32 %v22, %v108
  %vm113 = vcmask 523264
  %114 = vst.msk [vmem:[#allocation2] sm:$0xff] %vm113, %v111
  %115 = vst.msk [vmem:[#allocation2 + $0x8] sm:$0xff] %vm113, %v112
  // Predicated region
  $region18: #{transformer_decoder_layer.16} parent=0 // pred_check
    %p116 = pneg %p14
  $region19: #{transformer_decoder_layer.16} parent=0 // pred_check_branch
    %118 = sbr.rel (%p116) target = $region21
  $region20: #{transformer_decoder_layer.16} parent=0 // pred_region
    %v119 = vld [vmem:[#allocation2] sm:$0xff]
    %v120 = vld [vmem:[#allocation2 + $0x8] sm:$0xff]
    %v121 = vld [vmem:[%s2] sm:$0x1]
    %v123 = vlaneseq
    %v124 = vshrl.u32 %v123, 7
    %v125 = vsub.s32 0, %v124
    %v126 = vrot.slane %v121, %v125
    %v128 = vadd.f32 %v119, %v126
    %v129 = vadd.f32 %v120, %v126
    %v130 = vmax.f32 %v128, 0.0
    %v131 = vmax.f32 %v129, 0.0
    %132 = vst.msk [vmem:[%s3] sm:$0xff] %vm113, %v130
    %133 = vst.msk [vmem:[%s3 + $0x8] sm:$0xff] %vm113, %v131
  $region21: #{transformer_decoder_layer.16} parent=0 // pred_fallthru
    _
  // Predicated region
  $region22: #{transformer_decoder_layer.16} parent=0 // pred_check
    _
  $region23: #{transformer_decoder_layer.16} parent=0 // pred_check_branch
    %135 = sbr.rel (0) target = $region25
  $region24: #{transformer_decoder_layer.16} parent=0 // pred_region
    _
  $region25: #{transformer_decoder_layer.16} parent=0 // pred_fallthru
    _
  // Predicated region
  $region26: #{transformer_decoder_layer.16} parent=0 // pred_check
    _
  $region27: #{transformer_decoder_layer.16} parent=0 // pred_check_branch
    %137 = sbr.rel (0) target = $region29
  $region28: #{transformer_decoder_layer.16} parent=0 // pred_region
    _
  $region29: #{transformer_decoder_layer.16} parent=0 // pred_fallthru
    _

// kernel: transformer_decoder_layer.14
$region0: #{transformer_decoder_layer.14}
  #allocation0 [shape = 'u32[]', space=smem, size = 0x4, offset = 0x4, fixed_abs, tag = 'smem constant byte address 0x4 - core index']
  #allocation1 [shape = 'u32[144,128]{1,0:T(1,128)}', space=vmem, size = 0x12000, scoped, tag = 'internal scratch']
  %s0 = inlined_call_operand.vmem [shape: f32[2,8,32], index: 0, kind: input, shape index: {}]
  %s1 = inlined_call_operand.vmem [shape: f32[2,16,64], index: 1, kind: input, shape index: {}]
  %s2 = inlined_call_operand.vmem [shape: f32[2,8,32], index: 2, kind: output, shape index: {}]
  %s3 = sld [smem:[#allocation0]]
  $region41: #{transformer_decoder_layer.14} parent=0
    _
  %s5 = ssub.s32 1, %s3
  %s6 = scalar_select 0, %s5, %s3
  loop: start=0, step=1, limit=4
  $region2: #{transformer_decoder_layer.14} parent=0 // loop_pre_header
    _
  $region3: #{transformer_decoder_layer.14} parent=0 // loop_header
    %s8 = sphi 0, %s12
    %p9 = scmp.ge.s32.totalorder %s8, 4
    %s18 = sphi 0, %s20
    %s21 = sphi 0, %s18
    %s22 = sphi 0, %s21
    %s38 = sphi 0, %s22
    %s44 = sphi 0, %s46
    %s47 = sphi 0, %s44
    %s48 = sphi 0, %s47
    %s64 = sphi 0, %s48
    %s70 = sphi 0, %s72
    %s73 = sphi 0, %s70
    %s74 = sphi 0, %s73
    %s90 = sphi 0, %s74
  $region4: #{transformer_decoder_layer.14} parent=0 // loop_header_branch
    %11 = sbr.rel (%p9) target = $region8
  $region5: #{transformer_decoder_layer.14} parent=0 // loop_body
    %s13 = ssub.s32 %s8, 1
    %s14 = ssub.s32 %s8, 2
    %s15 = sadd.s32 %s8, 1
    %s16 = ssub.s32 %s8, %s15
    %p17 = scmp.eq.s32.totalorder %s16, 0
    %s19 = sadd.s32 %s18, 1
    %s20 = scalar_select %p17, %s18, %s19
    %p23 = pneg %p17
    %p24 = scmp.eq.s32.totalorder %s8, 1
    %p25 = por %p23, %p24
    %p26 = scmp.ne.s32.totalorder %s18, %s21
    %p27 = scmp.eq.s32.totalorder %s8, 0
    %p28 = por %p26, %p27
    %p29 = scmp.ne.s32.totalorder %s18, %s21
    %p30 = scmp.eq.s32.totalorder %s13, 1
    %p31 = por %p29, %p30
    %p32 = scmp.ne.s32.totalorder %s21, %s22
    %p33 = scmp.eq.s32.totalorder %s13, 0
    %p34 = por %p32, %p33
    %p35 = scmp.ne.s32.totalorder %s21, %s22
    %p36 = scmp.eq.s32.totalorder %s14, 1
    %p37 = por %p35, %p36
    %p39 = scmp.ne.s32.totalorder %s22, %s38
    %p40 = scmp.eq.s32.totalorder %s14, 0
    %p41 = por %p39, %p40
    %s42 = ssub.s32 %s8, %s15
    %p43 = scmp.eq.s32.totalorder %s42, 0
    %s45 = sadd.s32 %s44, 1
    %s46 = scalar_select %p43, %s44, %s45
    %p49 = pneg %p43
    %p50 = scmp.eq.s32.totalorder %s8, 1
    %p51 = por %p49, %p50
    %p52 = scmp.ne.s32.totalorder %s44, %s47
    %p53 = scmp.eq.s32.totalorder %s8, 0
    %p54 = por %p52, %p53
    %p55 = scmp.ne.s32.totalorder %s44, %s47
    %p56 = scmp.eq.s32.totalorder %s13, 1
    %p57 = por %p55, %p56
    %p58 = scmp.ne.s32.totalorder %s47, %s48
    %p59 = scmp.eq.s32.totalorder %s13, 0
    %p60 = por %p58, %p59
    %p61 = scmp.ne.s32.totalorder %s47, %s48
    %p62 = scmp.eq.s32.totalorder %s14, 1
    %p63 = por %p61, %p62
    %p65 = scmp.ne.s32.totalorder %s48, %s64
    %p66 = scmp.eq.s32.totalorder %s14, 0
    %p67 = por %p65, %p66
    %s68 = ssub.s32 %s8, %s15
    %p69 = scmp.eq.s32.totalorder %s68, 0
    %s71 = sadd.s32 %s70, 1
    %s72 = scalar_select %p69, %s70, %s71
    %p75 = pneg %p69
    %p76 = scmp.eq.s32.totalorder %s8, 1
    %p77 = por %p75, %p76
    %p78 = scmp.ne.s32.totalorder %s70, %s73
    %p79 = scmp.eq.s32.totalorder %s8, 0
    %p80 = por %p78, %p79
    %p81 = scmp.ne.s32.totalorder %s70, %s73
    %p82 = scmp.eq.s32.totalorder %s13, 1
    %p83 = por %p81, %p82
    %p84 = scmp.ne.s32.totalorder %s73, %s74
    %p85 = scmp.eq.s32.totalorder %s13, 0
    %p86 = por %p84, %p85
    %p87 = scmp.ne.s32.totalorder %s73, %s74
    %p88 = scmp.eq.s32.totalorder %s14, 1
    %p89 = por %p87, %p88
    %p91 = scmp.ne.s32.totalorder %s74, %s90
    %p92 = scmp.eq.s32.totalorder %s14, 0
    %p93 = por %p91, %p92
    %p94 = scmp.le.s32.totalorder 1, %s8
    %p95 = scmp.lt.s32.totalorder %s8, 3
    %p96 = pnand %p94, %p95
    %p97 = pneg %p96
    // Predicated region
    $region9: #{transformer_decoder_layer.14} parent=5 // pred_check
      _
    $region10: #{transformer_decoder_layer.14} parent=5 // pred_check_branch
      %99 = sbr.rel (%p96) target = $region12
    $region11: #{transformer_decoder_layer.14} parent=5 // pred_region
      %s100 = ssub.s32 %s8, 1
    $region12: #{transformer_decoder_layer.14} parent=5 // pred_fallthru
      _
    %p101 = scmp.lt.s32.totalorder %s8, 2
    // Predicated region
    $region13: #{transformer_decoder_layer.14} parent=5 // pred_check
      %p102 = pneg %p101
    $region14: #{transformer_decoder_layer.14} parent=5 // pred_check_branch
      %104 = sbr.rel (%p102) target = $region16
    $region15: #{transformer_decoder_layer.14} parent=5 // pred_region
      // Predicated region
      $region17: #{transformer_decoder_layer.14} parent=15 // pred_check
        %p105 = pneg %p28
      $region18: #{transformer_decoder_layer.14} parent=15 // pred_check_branch
        %107 = sbr.rel (%p105) target = $region20
      $region19: #{transformer_decoder_layer.14} parent=15 // pred_region
        %p108 = scmp.lt.s32.totalorder %s8, 1
        %s109 = scalar_select %p108, %s8, 1
        %s110 = smul.addr %s109, 8
        %s111 = scalar_lea.vmem %s0, %s110
      $region20: #{transformer_decoder_layer.14} parent=15 // pred_fallthru
        _
      // Predicated region
      $region21: #{transformer_decoder_layer.14} parent=15 // pred_check
        %p112 = pneg %p54
      $region22: #{transformer_decoder_layer.14} parent=15 // pred_check_branch
        %114 = sbr.rel (%p112) target = $region24
      $region23: #{transformer_decoder_layer.14} parent=15 // pred_region
        %p115 = scmp.lt.s32.totalorder %s8, 1
        %s116 = scalar_select %p115, %s8, 1
        %s117 = smul.addr %s116, 2
        %s118 = smul.addr %s117, 8
        %s119 = scalar_lea.vmem %s1, %s118
      $region24: #{transformer_decoder_layer.14} parent=15 // pred_fallthru
        _
    $region16: #{transformer_decoder_layer.14} parent=5 // pred_fallthru
      _
    %p120 = scmp.le.s32.totalorder 1, %s8
    %p121 = scmp.lt.s32.totalorder %s8, 3
    %p122 = pnand %p120, %p121
    %p123 = pneg %p122
    // Predicated region
    $region25: #{transformer_decoder_layer.14} parent=5 // pred_check
      _
    $region26: #{transformer_decoder_layer.14} parent=5 // pred_check_branch
      %125 = sbr.rel (%p122) target = $region28
    $region27: #{transformer_decoder_layer.14} parent=5 // pred_region
      %s126 = ssub.s32 %s8, 1
      %p127 = scmp.lt.s32.totalorder %s13, 1
      %s128 = scalar_select %p127, %s13, 1
      %s129 = smul.addr %s128, 8
      %s130 = scalar_lea.vmem %s0, %s129
      %p131 = pneg %p34
      %p132 = pneg %p31
      %p133 = scmp.lt.s32.totalorder %s13, 1
      %s134 = scalar_select %p133, %s13, 1
      %s135 = smul.addr %s134, 2
      %s136 = smul.addr %s135, 8
      %s137 = scalar_lea.vmem %s1, %s136
      %p138 = pneg %p60
      %p139 = pneg %p57
      %p140 = pneg %p86
      %p141 = pneg %p83
      %p142 = scmp.lt.s32.totalorder %s13, 1
      %s143 = scalar_select %p142, %s13, 1
      %s144 = smul.addr %s143, 8
      %s145 = scalar_lea.vmem %s2, %s144
      %p146 = scmp.lt.s32.totalorder %s13, 1
      %s147 = scalar_select %p146, %s13, 1
      %s148 = smul.addr %s147, 8
      %s149 = scalar_lea.vmem %s0, %s148
      %p150 = scmp.lt.s32.totalorder %s13, 1
      %s151 = scalar_select %p150, %s13, 1
      %s152 = smul.addr %s151, 2
      %s153 = smul.addr %s152, 8
      %s154 = scalar_lea.vmem %s1, %s153
      %p155 = scmp.lt.s32.totalorder %s13, 1
      %s156 = scalar_select %p155, %s13, 1
      %s157 = smul.addr %s156, 8
      %s158 = scalar_lea.vmem %s2, %s157
      %v159 = vld [vmem:[%s149] sm:$0xff]
      %v160 = vld [vmem:[%s154] sm:$0xff]
      %v161 = vld [vmem:[%s154 + $0x8] sm:$0xff]
      %vm162 = vcmask 64512
      %v164 = vsel %vm162, %v159, 0
      %v167 = vsel %vm162, %v160, 0
      %v170 = vsel %vm162, %v161, 0
      %172 = vmatprep.subr.mxu0 0.0
      %173 = vmatpush1.xpose.msra.mxu0 %v167
      %174 = vmatprep.subr.mxu0 0.0
      %175 = vmatpush1.xpose.msra.mxu0 %v170
      %176 = vmatprep.subr.mxu0 0.0
      %177 = vmatpush1.xpose.msra.mxu0 0.0
      %178 = vmatprep.subr.mxu0 0.0
      %179 = vmatpush1.xpose.msra.mxu0 0.0
      %180 = vmatprep.subr.mxu0 0.0
      %181 = vmatpush1.xpose.msra.mxu0 0.0
      %182 = vmatprep.subr.mxu0 0.0
      %183 = vmatpush1.xpose.msra.mxu0 0.0
      %184 = vmatprep.subr.mxu0 0.0
      %185 = vmatpush1.xpose.msra.mxu0 0.0
      %186 = vmatprep.subr.mxu0 0.0
      %187 = vmatpush1.xpose.msra.mxu0 0.0
      %188 = vmatprep.subr.mxu0 0.0
      %189 = vmatpush1.xpose.msra.mxu0 0.0
      %190 = vmatprep.subr.mxu0 0.0
      %191 = vmatpush1.xpose.msra.mxu0 0.0
      %192 = vmatprep.subr.mxu0 0.0
      %193 = vmatpush1.xpose.msra.mxu0 0.0
      %194 = vmatprep.subr.mxu0 0.0
      %195 = vmatpush1.xpose.msra.mxu0 0.0
      %196 = vmatprep.subr.mxu0 0.0
      %197 = vmatpush1.xpose.msra.mxu0 0.0
      %198 = vmatprep.subr.mxu0 0.0
      %199 = vmatpush1.xpose.msra.mxu0 0.0
      %200 = vmatprep.subr.mxu0 0.0
      %201 = vmatpush1.xpose.msra.mxu0 0.0
      %202 = vmatprep.subr.mxu0 0.0
      %203 = vmatpush1.xpose.msra.mxu0 0.0
      %204 = vmatprep.subr.mxu0 0.0
      %205 = vmatpush1.xpose.msra.mxu0 0.0
      %206 = vmatprep.subr.mxu0 0.0
      %207 = vmatpush1.xpose.msra.mxu0 0.0
      %208 = vmatprep.subr.mxu0 0.0
      %209 = vmatpush1.xpose.msra.mxu0 0.0
      %210 = vmatprep.subr.mxu0 0.0
      %211 = vmatpush1.xpose.msra.mxu0 0.0
      %212 = vmatprep.subr.mxu0 0.0
      %213 = vmatpush1.xpose.msra.mxu0 0.0
      %214 = vmatprep.subr.mxu0 0.0
      %215 = vmatpush1.xpose.msra.mxu0 0.0
      %216 = vmatprep.subr.mxu0 0.0
      %217 = vmatpush1.xpose.msra.mxu0 0.0
      %218 = vmatprep.subr.mxu0 0.0
      %219 = vmatpush1.xpose.msra.mxu0 0.0
      %220 = vmatprep.subr.mxu0 0.0
      %221 = vmatpush1.xpose.msra.mxu0 0.0
      %222 = vmatprep.subr.mxu0 0.0
      %223 = vmatpush1.xpose.msra.mxu0 0.0
      %224 = vmatprep.subr.mxu0 0.0
      %225 = vmatpush1.xpose.msra.mxu0 0.0
      %226 = vmatprep.subr.mxu0 0.0
      %227 = vmatpush1.xpose.msra.mxu0 0.0
      %228 = vmatprep.subr.mxu0 0.0
      %229 = vmatpush1.xpose.msra.mxu0 0.0
      %230 = vmatprep.subr.mxu0 0.0
      %231 = vmatpush1.xpose.msra.mxu0 0.0
      %232 = vmatprep.subr.mxu0 0.0
      %233 = vmatpush1.xpose.msra.mxu0 0.0
      %234 = vmatprep.subr.mxu0 0.0
      %235 = vmatpush1.xpose.msra.mxu0 0.0
      %236 = vmatprep.mubr.f32.mxu0 0.0
      %237 = vmatmul.mubr.f32.gmra.mrb[0].mxu0 %v164
      %v238 = vpop.f32.mrb[0].mxu0
      %v239 = vadd.f32 0.0, %v238
      %v240 = vpop.f32.mrb[0].mxu0
      %241 = vdwg.mxu0
      %vm242 = vcmask 130048
      %v243 = vsel %vm242, %v239, -inf
      %244 = vmax.xlane.f32.xlu0 %v243
      %v245 = vpop.xlane.xlu0 %244
      %v246 = vsub.f32 %v239, %v245
      %v247 = vmul.f32 %v246, 1.442695
      %v248 = vpow.pop %v247
      %v249 = vsel %vm242, %v248, 0.0
      %250 = vadd.xlane.f32.xlu0 %v249
      %v251 = vpop.xlane.xlu0 %250
      %v252 = vrcp.pop %v251
      %v253 = vmul.f32 %v248, %v252
      %254 = vrot.lane.b32.xlu0 %v160, 96
      %v255 = vpop.permute.xlu0 %254
      %256 = vrot.lane.b32.xlu0 %v161, 96
      %v257 = vpop.permute.xlu0 %256
      %v261 = vsel %vm242, %v253, 0
      %263 = vmatprep.subr.mxu0 0.0
      %264 = vmatpush1.msra.mxu0 %v255
      %265 = vmatprep.subr.mxu0 0.0
      %266 = vmatpush1.msra.mxu0 %v257
      %267 = vmatprep.subr.mxu0 0.0
      %268 = vmatpush1.msra.mxu0 0.0
      %269 = vmatprep.subr.mxu0 0.0
      %270 = vmatpush1.msra.mxu0 0.0
      %271 = vmatprep.subr.mxu0 0.0
      %272 = vmatpush1.msra.mxu0 0.0
      %273 = vmatprep.subr.mxu0 0.0
      %274 = vmatpush1.msra.mxu0 0.0
      %275 = vmatprep.subr.mxu0 0.0
      %276 = vmatpush1.msra.mxu0 0.0
      %277 = vmatprep.subr.mxu0 0.0
      %278 = vmatpush1.msra.mxu0 0.0
      %279 = vmatprep.subr.mxu0 0.0
      %280 = vmatpush1.msra.mxu0 0.0
      %281 = vmatprep.subr.mxu0 0.0
      %282 = vmatpush1.msra.mxu0 0.0
      %283 = vmatprep.subr.mxu0 0.0
      %284 = vmatpush1.msra.mxu0 0.0
      %285 = vmatprep.subr.mxu0 0.0
      %286 = vmatpush1.msra.mxu0 0.0
      %287 = vmatprep.subr.mxu0 0.0
      %288 = vmatpush1.msra.mxu0 0.0
      %289 = vmatprep.subr.mxu0 0.0
      %290 = vmatpush1.msra.mxu0 0.0
      %291 = vmatprep.subr.mxu0 0.0
      %292 = vmatpush1.msra.mxu0 0.0
      %293 = vmatprep.subr.mxu0 0.0
      %294 = vmatpush1.msra.mxu0 0.0
      %295 = vmatprep.subr.mxu0 0.0
      %296 = vmatpush1.msra.mxu0 0.0
      %297 = vmatprep.subr.mxu0 0.0
      %298 = vmatpush1.msra.mxu0 0.0
      %299 = vmatprep.subr.mxu0 0.0
      %300 = vmatpush1.msra.mxu0 0.0
      %301 = vmatprep.subr.mxu0 0.0
      %302 = vmatpush1.msra.mxu0 0.0
      %303 = vmatprep.subr.mxu0 0.0
      %304 = vmatpush1.msra.mxu0 0.0
      %305 = vmatprep.subr.mxu0 0.0
      %306 = vmatpush1.msra.mxu0 0.0
      %307 = vmatprep.subr.mxu0 0.0
      %308 = vmatpush1.msra.mxu0 0.0
      %309 = vmatprep.subr.mxu0 0.0
      %310 = vmatpush1.msra.mxu0 0.0
      %311 = vmatprep.subr.mxu0 0.0
      %312 = vmatpush1.msra.mxu0 0.0
      %313 = vmatprep.subr.mxu0 0.0
      %314 = vmatpush1.msra.mxu0 0.0
      %315 = vmatprep.subr.mxu0 0.0
      %316 = vmatpush1.msra.mxu0 0.0
      %317 = vmatprep.subr.mxu0 0.0
      %318 = vmatpush1.msra.mxu0 0.0
      %319 = vmatprep.subr.mxu0 0.0
      %320 = vmatpush1.msra.mxu0 0.0
      %321 = vmatprep.subr.mxu0 0.0
      %322 = vmatpush1.msra.mxu0 0.0
      %323 = vmatprep.subr.mxu0 0.0
      %324 = vmatpush1.msra.mxu0 0.0
      %325 = vmatprep.subr.mxu0 0.0
      %326 = vmatpush1.msra.mxu0 0.0
      %327 = vmatprep.mubr.f32.mxu0 0.0
      %328 = vmatmul.mubr.f32.gmra.mrb[0].mxu0 %v261
      %v329 = vpop.f32.mrb[0].mxu0
      %v330 = vadd.f32 0.0, %v329
      %v331 = vpop.f32.mrb[0].mxu0
      %332 = vdwg.mxu0
      %333 = vrot.lane.b32.xlu0 %v159, 120
      %v334 = vpop.permute.xlu0 %333
      %335 = vrot.lane.b32.xlu0 %v160, 120
      %v336 = vpop.permute.xlu0 %335
      %337 = vrot.lane.b32.xlu0 %v161, 120
      %v338 = vpop.permute.xlu0 %337
      %v339 = vsel %vm162, %v334, 0
      %v341 = vsel %vm162, %v336, 0
      %v343 = vsel %vm162, %v338, 0
      %345 = vmatprep.subr.mxu0 0.0
      %346 = vmatpush1.xpose.msra.mxu0 %v341
      %347 = vmatprep.subr.mxu0 0.0
      %348 = vmatpush1.xpose.msra.mxu0 %v343
      %349 = vmatprep.subr.mxu0 0.0
      %350 = vmatpush1.xpose.msra.mxu0 0.0
      %351 = vmatprep.subr.mxu0 0.0
      %352 = vmatpush1.xpose.msra.mxu0 0.0
      %353 = vmatprep.subr.mxu0 0.0
      %354 = vmatpush1.xpose.msra.mxu0 0.0
      %355 = vmatprep.subr.mxu0 0.0
      %356 = vmatpush1.xpose.msra.mxu0 0.0
      %357 = vmatprep.subr.mxu0 0.0
      %358 = vmatpush1.xpose.msra.mxu0 0.0
      %359 = vmatprep.subr.mxu0 0.0
      %360 = vmatpush1.xpose.msra.mxu0 0.0
      %361 = vmatprep.subr.mxu0 0.0
      %362 = vmatpush1.xpose.msra.mxu0 0.0
      %363 = vmatprep.subr.mxu0 0.0
      %364 = vmatpush1.xpose.msra.mxu0 0.0
      %365 = vmatprep.subr.mxu0 0.0
      %366 = vmatpush1.xpose.msra.mxu0 0.0
      %367 = vmatprep.subr.mxu0 0.0
      %368 = vmatpush1.xpose.msra.mxu0 0.0
      %369 = vmatprep.subr.mxu0 0.0
      %370 = vmatpush1.xpose.msra.mxu0 0.0
      %371 = vmatprep.subr.mxu0 0.0
      %372 = vmatpush1.xpose.msra.mxu0 0.0
      %373 = vmatprep.subr.mxu0 0.0
      %374 = vmatpush1.xpose.msra.mxu0 0.0
      %375 = vmatprep.subr.mxu0 0.0
      %376 = vmatpush1.xpose.msra.mxu0 0.0
      %377 = vmatprep.subr.mxu0 0.0
      %378 = vmatpush1.xpose.msra.mxu0 0.0
      %379 = vmatprep.subr.mxu0 0.0
      %380 = vmatpush1.xpose.msra.mxu0 0.0
      %381 = vmatprep.subr.mxu0 0.0
      %382 = vmatpush1.xpose.msra.mxu0 0.0
      %383 = vmatprep.subr.mxu0 0.0
      %384 = vmatpush1.xpose.msra.mxu0 0.0
      %385 = vmatprep.subr.mxu0 0.0
      %386 = vmatpush1.xpose.msra.mxu0 0.0
      %387 = vmatprep.subr.mxu0 0.0
      %388 = vmatpush1.xpose.msra.mxu0 0.0
      %389 = vmatprep.subr.mxu0 0.0
      %390 = vmatpush1.xpose.msra.mxu0 0.0
      %391 = vmatprep.subr.mxu0 0.0
      %392 = vmatpush1.xpose.msra.mxu0 0.0
      %393 = vmatprep.subr.mxu0 0.0
      %394 = vmatpush1.xpose.msra.mxu0 0.0
      %395 = vmatprep.subr.mxu0 0.0
      %396 = vmatpush1.xpose.msra.mxu0 0.0
      %397 = vmatprep.subr.mxu0 0.0
      %398 = vmatpush1.xpose.msra.mxu0 0.0
      %399 = vmatprep.subr.mxu0 0.0
      %400 = vmatpush1.xpose.msra.mxu0 0.0
      %401 = vmatprep.subr.mxu0 0.0
      %402 = vmatpush1.xpose.msra.mxu0 0.0
      %403 = vmatprep.subr.mxu0 0.0
      %404 = vmatpush1.xpose.msra.mxu0 0.0
      %405 = vmatprep.subr.mxu0 0.0
      %406 = vmatpush1.xpose.msra.mxu0 0.0
      %407 = vmatprep.subr.mxu0 0.0
      %408 = vmatpush1.xpose.msra.mxu0 0.0
      %409 = vmatprep.mubr.f32.mxu0 0.0
      %410 = vmatmul.mubr.f32.gmra.mrb[0].mxu0 %v339
      %v411 = vpop.f32.mrb[0].mxu0
      %v412 = vadd.f32 0.0, %v411
      %v413 = vpop.f32.mrb[0].mxu0
      %414 = vdwg.mxu0
      %v415 = vsel %vm242, %v412, -inf
      %416 = vmax.xlane.f32.xlu0 %v415
      %v417 = vpop.xlane.xlu0 %416
      %v418 = vsub.f32 %v412, %v417
      %v419 = vmul.f32 %v418, 1.442695
      %v420 = vpow.pop %v419
      %v421 = vsel %vm242, %v420, 0.0
      %422 = vadd.xlane.f32.xlu0 %v421
      %v423 = vpop.xlane.xlu0 %422
      %v424 = vrcp.pop %v423
      %v425 = vmul.f32 %v420, %v424
      %426 = vrot.lane.b32.xlu0 %v160, 88
      %v427 = vpop.permute.xlu0 %426
      %428 = vrot.lane.b32.xlu0 %v161, 88
      %v429 = vpop.permute.xlu0 %428
      %v433 = vsel %vm242, %v425, 0
      %435 = vmatprep.subr.mxu0 0.0
      %436 = vmatpush1.msra.mxu0 %v427
      %437 = vmatprep.subr.mxu0 0.0
      %438 = vmatpush1.msra.mxu0 %v429
      %439 = vmatprep.subr.mxu0 0.0
      %440 = vmatpush1.msra.mxu0 0.0
      %441 = vmatprep.subr.mxu0 0.0
      %442 = vmatpush1.msra.mxu0 0.0
      %443 = vmatprep.subr.mxu0 0.0
      %444 = vmatpush1.msra.mxu0 0.0
      %445 = vmatprep.subr.mxu0 0.0
      %446 = vmatpush1.msra.mxu0 0.0
      %447 = vmatprep.subr.mxu0 0.0
      %448 = vmatpush1.msra.mxu0 0.0
      %449 = vmatprep.subr.mxu0 0.0
      %450 = vmatpush1.msra.mxu0 0.0
      %451 = vmatprep.subr.mxu0 0.0
      %452 = vmatpush1.msra.mxu0 0.0
      %453 = vmatprep.subr.mxu0 0.0
      %454 = vmatpush1.msra.mxu0 0.0
      %455 = vmatprep.subr.mxu0 0.0
      %456 = vmatpush1.msra.mxu0 0.0
      %457 = vmatprep.subr.mxu0 0.0
      %458 = vmatpush1.msra.mxu0 0.0
      %459 = vmatprep.subr.mxu0 0.0
      %460 = vmatpush1.msra.mxu0 0.0
      %461 = vmatprep.subr.mxu0 0.0
      %462 = vmatpush1.msra.mxu0 0.0
      %463 = vmatprep.subr.mxu0 0.0
      %464 = vmatpush1.msra.mxu0 0.0
      %465 = vmatprep.subr.mxu0 0.0
      %466 = vmatpush1.msra.mxu0 0.0
      %467 = vmatprep.subr.mxu0 0.0
      %468 = vmatpush1.msra.mxu0 0.0
      %469 = vmatprep.subr.mxu0 0.0
      %470 = vmatpush1.msra.mxu0 0.0
      %471 = vmatprep.subr.mxu0 0.0
      %472 = vmatpush1.msra.mxu0 0.0
      %473 = vmatprep.subr.mxu0 0.0
      %474 = vmatpush1.msra.mxu0 0.0
      %475 = vmatprep.subr.mxu0 0.0
      %476 = vmatpush1.msra.mxu0 0.0
      %477 = vmatprep.subr.mxu0 0.0
      %478 = vmatpush1.msra.mxu0 0.0
      %479 = vmatprep.subr.mxu0 0.0
      %480 = vmatpush1.msra.mxu0 0.0
      %481 = vmatprep.subr.mxu0 0.0
      %482 = vmatpush1.msra.mxu0 0.0
      %483 = vmatprep.subr.mxu0 0.0
      %484 = vmatpush1.msra.mxu0 0.0
      %485 = vmatprep.subr.mxu0 0.0
      %486 = vmatpush1.msra.mxu0 0.0
      %487 = vmatprep.subr.mxu0 0.0
      %488 = vmatpush1.msra.mxu0 0.0
      %489 = vmatprep.subr.mxu0 0.0
      %490 = vmatpush1.msra.mxu0 0.0
      %491 = vmatprep.subr.mxu0 0.0
      %492 = vmatpush1.msra.mxu0 0.0
      %493 = vmatprep.subr.mxu0 0.0
      %494 = vmatpush1.msra.mxu0 0.0
      %495 = vmatprep.subr.mxu0 0.0
      %496 = vmatpush1.msra.mxu0 0.0
      %497 = vmatprep.subr.mxu0 0.0
      %498 = vmatpush1.msra.mxu0 0.0
      %499 = vmatprep.mubr.f32.mxu0 0.0
      %500 = vmatmul.mubr.f32.gmra.mrb[0].mxu0 %v433
      %v501 = vpop.f32.mrb[0].mxu0
      %v502 = vadd.f32 0.0, %v501
      %v503 = vpop.f32.mrb[0].mxu0
      %504 = vdwg.mxu0
      %505 = vrot.lane.b32.xlu0 %v159, 112
      %v506 = vpop.permute.xlu0 %505
      %507 = vrot.lane.b32.xlu0 %v160, 112
      %v508 = vpop.permute.xlu0 %507
      %509 = vrot.lane.b32.xlu0 %v161, 112
      %v510 = vpop.permute.xlu0 %509
      %v511 = vsel %vm162, %v506, 0
      %v513 = vsel %vm162, %v508, 0
      %v515 = vsel %vm162, %v510, 0
      %517 = vmatprep.subr.mxu0 0.0
      %518 = vmatpush1.xpose.msra.mxu0 %v513
      %519 = vmatprep.subr.mxu0 0.0
      %520 = vmatpush1.xpose.msra.mxu0 %v515
      %521 = vmatprep.subr.mxu0 0.0
      %522 = vmatpush1.xpose.msra.mxu0 0.0
      %523 = vmatprep.subr.mxu0 0.0
      %524 = vmatpush1.xpose.msra.mxu0 0.0
      %525 = vmatprep.subr.mxu0 0.0
      %526 = vmatpush1.xpose.msra.mxu0 0.0
      %527 = vmatprep.subr.mxu0 0.0
      %528 = vmatpush1.xpose.msra.mxu0 0.0
      %529 = vmatprep.subr.mxu0 0.0
      %530 = vmatpush1.xpose.msra.mxu0 0.0
      %531 = vmatprep.subr.mxu0 0.0
      %532 = vmatpush1.xpose.msra.mxu0 0.0
      %533 = vmatprep.subr.mxu0 0.0
      %534 = vmatpush1.xpose.msra.mxu0 0.0
      %535 = vmatprep.subr.mxu0 0.0
      %536 = vmatpush1.xpose.msra.mxu0 0.0
      %537 = vmatprep.subr.mxu0 0.0
      %538 = vmatpush1.xpose.msra.mxu0 0.0
      %539 = vmatprep.subr.mxu0 0.0
      %540 = vmatpush1.xpose.msra.mxu0 0.0
      %541 = vmatprep.subr.mxu0 0.0
      %542 = vmatpush1.xpose.msra.mxu0 0.0
      %543 = vmatprep.subr.mxu0 0.0
      %544 = vmatpush1.xpose.msra.mxu0 0.0
      %545 = vmatprep.subr.mxu0 0.0
      %546 = vmatpush1.xpose.msra.mxu0 0.0
      %547 = vmatprep.subr.mxu0 0.0
      %548 = vmatpush1.xpose.msra.mxu0 0.0
      %549 = vmatprep.subr.mxu0 0.0
      %550 = vmatpush1.xpose.msra.mxu0 0.0
      %551 = vmatprep.subr.mxu0 0.0
      %552 = vmatpush1.xpose.msra.mxu0 0.0
      %553 = vmatprep.subr.mxu0 0.0
      %554 = vmatpush1.xpose.msra.mxu0 0.0
      %555 = vmatprep.subr.mxu0 0.0
      %556 = vmatpush1.xpose.msra.mxu0 0.0
      %557 = vmatprep.subr.mxu0 0.0
      %558 = vmatpush1.xpose.msra.mxu0 0.0
      %559 = vmatprep.subr.mxu0 0.0
      %560 = vmatpush1.xpose.msra.mxu0 0.0
      %561 = vmatprep.subr.mxu0 0.0
      %562 = vmatpush1.xpose.msra.mxu0 0.0
      %563 = vmatprep.subr.mxu0 0.0
      %564 = vmatpush1.xpose.msra.mxu0 0.0
      %565 = vmatprep.subr.mxu0 0.0
      %566 = vmatpush1.xpose.msra.mxu0 0.0
      %567 = vmatprep.subr.mxu0 0.0
      %568 = vmatpush1.xpose.msra.mxu0 0.0
      %569 = vmatprep.subr.mxu0 0.0
      %570 = vmatpush1.xpose.msra.mxu0 0.0
      %571 = vmatprep.subr.mxu0 0.0
      %572 = vmatpush1.xpose.msra.mxu0 0.0
      %573 = vmatprep.subr.mxu0 0.0
      %574 = vmatpush1.xpose.msra.mxu0 0.0
      %575 = vmatprep.subr.mxu0 0.0
      %576 = vmatpush1.xpose.msra.mxu0 0.0
      %577 = vmatprep.subr.mxu0 0.0
      %578 = vmatpush1.xpose.msra.mxu0 0.0
      %579 = vmatprep.subr.mxu0 0.0
      %580 = vmatpush1.xpose.msra.mxu0 0.0
      %581 = vmatprep.mubr.f32.mxu0 0.0
      %582 = vmatmul.mubr.f32.gmra.mrb[0].mxu0 %v511
      %v583 = vpop.f32.mrb[0].mxu0
      %v584 = vadd.f32 0.0, %v583
      %v585 = vpop.f32.mrb[0].mxu0
      %586 = vdwg.mxu0
      %v587 = vsel %vm242, %v584, -inf
      %588 = vmax.xlane.f32.xlu0 %v587
      %v589 = vpop.xlane.xlu0 %588
      %v590 = vsub.f32 %v584, %v589
      %v591 = vmul.f32 %v590, 1.442695
      %v592 = vpow.pop %v591
      %v593 = vsel %vm242, %v592, 0.0
      %594 = vadd.xlane.f32.xlu0 %v593
      %v595 = vpop.xlane.xlu0 %594
      %v596 = vrcp.pop %v595
      %v597 = vmul.f32 %v592, %v596
      %598 = vrot.lane.b32.xlu0 %v160, 80
      %v599 = vpop.permute.xlu0 %598
      %600 = vrot.lane.b32.xlu0 %v161, 80
      %v601 = vpop.permute.xlu0 %600
      %v605 = vsel %vm242, %v597, 0
      %607 = vmatprep.subr.mxu0 0.0
      %608 = vmatpush1.msra.mxu0 %v599
      %609 = vmatprep.subr.mxu0 0.0
      %610 = vmatpush1.msra.mxu0 %v601
      %611 = vmatprep.subr.mxu0 0.0
      %612 = vmatpush1.msra.mxu0 0.0
      %613 = vmatprep.subr.mxu0 0.0
      %614 = vmatpush1.msra.mxu0 0.0
      %615 = vmatprep.subr.mxu0 0.0
      %616 = vmatpush1.msra.mxu0 0.0
      %617 = vmatprep.subr.mxu0 0.0
      %618 = vmatpush1.msra.mxu0 0.0
      %619 = vmatprep.subr.mxu0 0.0
      %620 = vmatpush1.msra.mxu0 0.0
      %621 = vmatprep.subr.mxu0 0.0
      %622 = vmatpush1.msra.mxu0 0.0
      %623 = vmatprep.subr.mxu0 0.0
      %624 = vmatpush1.msra.mxu0 0.0
      %625 = vmatprep.subr.mxu0 0.0
      %626 = vmatpush1.msra.mxu0 0.0
      %627 = vmatprep.subr.mxu0 0.0
      %628 = vmatpush1.msra.mxu0 0.0
      %629 = vmatprep.subr.mxu0 0.0
      %630 = vmatpush1.msra.mxu0 0.0
      %631 = vmatprep.subr.mxu0 0.0
      %632 = vmatpush1.msra.mxu0 0.0
      %633 = vmatprep.subr.mxu0 0.0
      %634 = vmatpush1.msra.mxu0 0.0
      %635 = vmatprep.subr.mxu0 0.0
      %636 = vmatpush1.msra.mxu0 0.0
      %637 = vmatprep.subr.mxu0 0.0
      %638 = vmatpush1.msra.mxu0 0.0
      %639 = vmatprep.subr.mxu0 0.0
      %640 = vmatpush1.msra.mxu0 0.0
      %641 = vmatprep.subr.mxu0 0.0
      %642 = vmatpush1.msra.mxu0 0.0
      %643 = vmatprep.subr.mxu0 0.0
      %644 = vmatpush1.msra.mxu0 0.0
      %645 = vmatprep.subr.mxu0 0.0
      %646 = vmatpush1.msra.mxu0 0.0
      %647 = vmatprep.subr.mxu0 0.0
      %648 = vmatpush1.msra.mxu0 0.0
      %649 = vmatprep.subr.mxu0 0.0
      %650 = vmatpush1.msra.mxu0 0.0
      %651 = vmatprep.subr.mxu0 0.0
      %652 = vmatpush1.msra.mxu0 0.0
      %653 = vmatprep.subr.mxu0 0.0
      %654 = vmatpush1.msra.mxu0 0.0
      %655 = vmatprep.subr.mxu0 0.0
      %656 = vmatpush1.msra.mxu0 0.0
      %657 = vmatprep.subr.mxu0 0.0
      %658 = vmatpush1.msra.mxu0 0.0
      %659 = vmatprep.subr.mxu0 0.0
      %660 = vmatpush1.msra.mxu0 0.0
      %661 = vmatprep.subr.mxu0 0.0
      %662 = vmatpush1.msra.mxu0 0.0
      %663 = vmatprep.subr.mxu0 0.0
      %664 = vmatpush1.msra.mxu0 0.0
      %665 = vmatprep.subr.mxu0 0.0
      %666 = vmatpush1.msra.mxu0 0.0
      %667 = vmatprep.subr.mxu0 0.0
      %668 = vmatpush1.msra.mxu0 0.0
      %669 = vmatprep.subr.mxu0 0.0
      %670 = vmatpush1.msra.mxu0 0.0
      %671 = vmatprep.mubr.f32.mxu0 0.0
      %672 = vmatmul.mubr.f32.gmra.mrb[0].mxu0 %v605
      %v673 = vpop.f32.mrb[0].mxu0
      %v674 = vadd.f32 0.0, %v673
      %v675 = vpop.f32.mrb[0].mxu0
      %676 = vdwg.mxu0
      %677 = vrot.lane.b32.xlu0 %v159, 104
      %v678 = vpop.permute.xlu0 %677
      %679 = vrot.lane.b32.xlu0 %v160, 104
      %v680 = vpop.permute.xlu0 %679
      %681 = vrot.lane.b32.xlu0 %v161, 104
      %v682 = vpop.permute.xlu0 %681
      %v683 = vsel %vm162, %v678, 0
      %v685 = vsel %vm162, %v680, 0
      %v687 = vsel %vm162, %v682, 0
      %689 = vmatprep.subr.mxu0 0.0
      %690 = vmatpush1.xpose.msra.mxu0 %v685
      %691 = vmatprep.subr.mxu0 0.0
      %692 = vmatpush1.xpose.msra.mxu0 %v687
      %693 = vmatprep.subr.mxu0 0.0
      %694 = vmatpush1.xpose.msra.mxu0 0.0
      %695 = vmatprep.subr.mxu0 0.0
      %696 = vmatpush1.xpose.msra.mxu0 0.0
      %697 = vmatprep.subr.mxu0 0.0
      %698 = vmatpush1.xpose.msra.mxu0 0.0
      %699 = vmatprep.subr.mxu0 0.0
      %700 = vmatpush1.xpose.msra.mxu0 0.0
      %701 = vmatprep.subr.mxu0 0.0
      %702 = vmatpush1.xpose.msra.mxu0 0.0
      %703 = vmatprep.subr.mxu0 0.0
      %704 = vmatpush1.xpose.msra.mxu0 0.0
      %705 = vmatprep.subr.mxu0 0.0
      %706 = vmatpush1.xpose.msra.mxu0 0.0
      %707 = vmatprep.subr.mxu0 0.0
      %708 = vmatpush1.xpose.msra.mxu0 0.0
      %709 = vmatprep.subr.mxu0 0.0
      %710 = vmatpush1.xpose.msra.mxu0 0.0
      %711 = vmatprep.subr.mxu0 0.0
      %712 = vmatpush1.xpose.msra.mxu0 0.0
      %713 = vmatprep.subr.mxu0 0.0
      %714 = vmatpush1.xpose.msra.mxu0 0.0
      %715 = vmatprep.subr.mxu0 0.0
      %716 = vmatpush1.xpose.msra.mxu0 0.0
      %717 = vmatprep.subr.mxu0 0.0
      %718 = vmatpush1.xpose.msra.mxu0 0.0
      %719 = vmatprep.subr.mxu0 0.0
      %720 = vmatpush1.xpose.msra.mxu0 0.0
      %721 = vmatprep.subr.mxu0 0.0
      %722 = vmatpush1.xpose.msra.mxu0 0.0
      %723 = vmatprep.subr.mxu0 0.0
      %724 = vmatpush1.xpose.msra.mxu0 0.0
      %725 = vmatprep.subr.mxu0 0.0
      %726 = vmatpush1.xpose.msra.mxu0 0.0
      %727 = vmatprep.subr.mxu0 0.0
      %728 = vmatpush1.xpose.msra.mxu0 0.0
      %729 = vmatprep.subr.mxu0 0.0
      %730 = vmatpush1.xpose.msra.mxu0 0.0
      %731 = vmatprep.subr.mxu0 0.0
      %732 = vmatpush1.xpose.msra.mxu0 0.0
      %733 = vmatprep.subr.mxu0 0.0
      %734 = vmatpush1.xpose.msra.mxu0 0.0
      %735 = vmatprep.subr.mxu0 0.0
      %736 = vmatpush1.xpose.msra.mxu0 0.0
      %737 = vmatprep.subr.mxu0 0.0
      %738 = vmatpush1.xpose.msra.mxu0 0.0
      %739 = vmatprep.subr.mxu0 0.0
      %740 = vmatpush1.xpose.msra.mxu0 0.0
      %741 = vmatprep.subr.mxu0 0.0
      %742 = vmatpush1.xpose.msra.mxu0 0.0
      %743 = vmatprep.subr.mxu0 0.0
      %744 = vmatpush1.xpose.msra.mxu0 0.0
      %745 = vmatprep.subr.mxu0 0.0
      %746 = vmatpush1.xpose.msra.mxu0 0.0
      %747 = vmatprep.subr.mxu0 0.0
      %748 = vmatpush1.xpose.msra.mxu0 0.0
      %749 = vmatprep.subr.mxu0 0.0
      %750 = vmatpush1.xpose.msra.mxu0 0.0
      %751 = vmatprep.subr.mxu0 0.0
      %752 = vmatpush1.xpose.msra.mxu0 0.0
      %753 = vmatprep.mubr.f32.mxu0 0.0
      %754 = vmatmul.mubr.f32.gmra.mrb[0].mxu0 %v683
      %v755 = vpop.f32.mrb[0].mxu0
      %v756 = vadd.f32 0.0, %v755
      %v757 = vpop.f32.mrb[0].mxu0
      %758 = vdwg.mxu0
      %v759 = vsel %vm242, %v756, -inf
      %760 = vmax.xlane.f32.xlu0 %v759
      %v761 = vpop.xlane.xlu0 %760
      %v762 = vsub.f32 %v756, %v761
      %v763 = vmul.f32 %v762, 1.442695
      %v764 = vpow.pop %v763
      %v765 = vsel %vm242, %v764, 0.0
      %766 = vadd.xlane.f32.xlu0 %v765
      %v767 = vpop.xlane.xlu0 %766
      %v768 = vrcp.pop %v767
      %v769 = vmul.f32 %v764, %v768
      %770 = vrot.lane.b32.xlu0 %v160, 72
      %v771 = vpop.permute.xlu0 %770
      %772 = vrot.lane.b32.xlu0 %v161, 72
      %v773 = vpop.permute.xlu0 %772
      %v777 = vsel %vm242, %v769, 0
      %779 = vmatprep.subr.mxu0 0.0
      %780 = vmatpush1.msra.mxu0 %v771
      %781 = vmatprep.subr.mxu0 0.0
      %782 = vmatpush1.msra.mxu0 %v773
      %783 = vmatprep.subr.mxu0 0.0
      %784 = vmatpush1.msra.mxu0 0.0
      %785 = vmatprep.subr.mxu0 0.0
      %786 = vmatpush1.msra.mxu0 0.0
      %787 = vmatprep.subr.mxu0 0.0
      %788 = vmatpush1.msra.mxu0 0.0
      %789 = vmatprep.subr.mxu0 0.0
      %790 = vmatpush1.msra.mxu0 0.0
      %791 = vmatprep.subr.mxu0 0.0
      %792 = vmatpush1.msra.mxu0 0.0
      %793 = vmatprep.subr.mxu0 0.0
      %794 = vmatpush1.msra.mxu0 0.0
      %795 = vmatprep.subr.mxu0 0.0
      %796 = vmatpush1.msra.mxu0 0.0
      %797 = vmatprep.subr.mxu0 0.0
      %798 = vmatpush1.msra.mxu0 0.0
      %799 = vmatprep.subr.mxu0 0.0
      %800 = vmatpush1.msra.mxu0 0.0
      %801 = vmatprep.subr.mxu0 0.0
      %802 = vmatpush1.msra.mxu0 0.0
      %803 = vmatprep.subr.mxu0 0.0
      %804 = vmatpush1.msra.mxu0 0.0
      %805 = vmatprep.subr.mxu0 0.0
      %806 = vmatpush1.msra.mxu0 0.0
      %807 = vmatprep.subr.mxu0 0.0
      %808 = vmatpush1.msra.mxu0 0.0
      %809 = vmatprep.subr.mxu0 0.0
      %810 = vmatpush1.msra.mxu0 0.0
      %811 = vmatprep.subr.mxu0 0.0
      %812 = vmatpush1.msra.mxu0 0.0
      %813 = vmatprep.subr.mxu0 0.0
      %814 = vmatpush1.msra.mxu0 0.0
      %815 = vmatprep.subr.mxu0 0.0
      %816 = vmatpush1.msra.mxu0 0.0
      %817 = vmatprep.subr.mxu0 0.0
      %818 = vmatpush1.msra.mxu0 0.0
      %819 = vmatprep.subr.mxu0 0.0
      %820 = vmatpush1.msra.mxu0 0.0
      %821 = vmatprep.subr.mxu0 0.0
      %822 = vmatpush1.msra.mxu0 0.0
      %823 = vmatprep.subr.mxu0 0.0
      %824 = vmatpush1.msra.mxu0 0.0
      %825 = vmatprep.subr.mxu0 0.0
      %826 = vmatpush1.msra.mxu0 0.0
      %827 = vmatprep.subr.mxu0 0.0
      %828 = vmatpush1.msra.mxu0 0.0
      %829 = vmatprep.subr.mxu0 0.0
      %830 = vmatpush1.msra.mxu0 0.0
      %831 = vmatprep.subr.mxu0 0.0
      %832 = vmatpush1.msra.mxu0 0.0
      %833 = vmatprep.subr.mxu0 0.0
      %834 = vmatpush1.msra.mxu0 0.0
      %835 = vmatprep.subr.mxu0 0.0
      %836 = vmatpush1.msra.mxu0 0.0
      %837 = vmatprep.subr.mxu0 0.0
      %838 = vmatpush1.msra.mxu0 0.0
      %839 = vmatprep.subr.mxu0 0.0
      %840 = vmatpush1.msra.mxu0 0.0
      %841 = vmatprep.subr.mxu0 0.0
      %842 = vmatpush1.msra.mxu0 0.0
      %843 = vmatprep.mubr.f32.mxu0 0.0
      %844 = vmatmul.mubr.f32.gmra.mrb[0].mxu0 %v777
      %v845 = vpop.f32.mrb[0].mxu0
      %v846 = vadd.f32 0.0, %v845
      %v847 = vpop.f32.mrb[0].mxu0
      %848 = vdwg.mxu0
      %850 = vrot.lane.b32.xlu0 %v502, 8
      %v851 = vpop.permute.xlu0 %850
      %854 = vrot.lane.b32.xlu0 %v674, 16
      %v855 = vpop.permute.xlu0 %854
      %858 = vrot.lane.b32.xlu0 %v846, 24
      %v859 = vpop.permute.xlu0 %858
      %v861 = vsel %vm162, %v330, %v851
      %v862 = vsel %vm242, %v861, %v855
      %vm863 = vcmask 195584
      %v864 = vsel %vm863, %v862, %v859
      %vm865 = vcmask 261120
      %866 = vst.msk [vmem:[%s158] sm:$0xff] %vm865, %v864
      %p867 = scmp.lt.s32.totalorder %s13, 1
      %s868 = scalar_select %p867, %s13, 1
      %s869 = smul.addr %s868, 8
      %s870 = scalar_lea.vmem %s2, %s869
      // Predicated region
      $region29: #{transformer_decoder_layer.14} parent=27 // pred_check
        %p871 = pneg %p83
      $region30: #{transformer_decoder_layer.14} parent=27 // pred_check_branch
        %873 = sbr.rel (%p871) target = $region32
      $region31: #{transformer_decoder_layer.14} parent=27 // pred_region
        _
      $region32: #{transformer_decoder_layer.14} parent=27 // pred_fallthru
        _
    $region28: #{transformer_decoder_layer.14} parent=5 // pred_fallthru
      _
    %p874 = scmp.le.s32.totalorder 2, %s8
    // Predicated region
    $region33: #{transformer_decoder_layer.14} parent=5 // pred_check
      %p875 = pneg %p874
    $region34: #{transformer_decoder_layer.14} parent=5 // pred_check_branch
      %877 = sbr.rel (%p875) target = $region36
    $region35: #{transformer_decoder_layer.14} parent=5 // pred_region
      %s878 = ssub.s32 %s8, 2
      // Predicated region
      $region37: #{transformer_decoder_layer.14} parent=35 // pred_check
        %p879 = pneg %p89
      $region38: #{transformer_decoder_layer.14} parent=35 // pred_check_branch
        %881 = sbr.rel (%p879) target = $region40
      $region39: #{transformer_decoder_layer.14} parent=35 // pred_region
        %p882 = scmp.lt.s32.totalorder %s14, 1
        %s883 = scalar_select %p882, %s14, 1
        %s884 = smul.addr %s883, 8
        %s885 = scalar_lea.vmem %s2, %s884
      $region40: #{transformer_decoder_layer.14} parent=35 // pred_fallthru
        _
    $region36: #{transformer_decoder_layer.14} parent=5 // pred_fallthru
      _
  $region6: #{transformer_decoder_layer.14} parent=0 // loop_footer
    %s12 = sadd.s32 1, %s8
  $region7: #{transformer_decoder_layer.14} parent=0 // loop_footer_branch
    %7 = sbr.rel target = $region3
  $region8: #{transformer_decoder_layer.14} parent=0 // loop_exit
    _

// kernel: transformer_decoder_layer.17
$region0: #{transformer_decoder_layer.17}
  #allocation0 [shape = 'u32[]', space=smem, size = 0x4, offset = 0x4, fixed_abs, tag = 'smem constant byte address 0x4 - core index']
  #allocation1 [shape = 'u32[144,128]{1,0:T(1,128)}', space=vmem, size = 0x12000, scoped, tag = 'internal scratch']
  #allocation2 [shape = 'f32[16,32]{1,0:T(8,128)}', space=vmem, size = 0x2000, scoped, tag = 'scratch operand']
  %s0 = inlined_call_operand.vmem [shape: f32[16,64], index: 0, kind: input, shape index: {}]
  %s1 = inlined_call_operand.vmem [shape: f32[64,32], index: 1, kind: input, shape index: {}]
  %s2 = inlined_call_operand.vmem [shape: f32[1,32], index: 2, kind: input, shape index: {}]
  %s3 = inlined_call_operand.vmem [shape: f32[16,32], index: 3, kind: input, shape index: {}]
  %s4 = inlined_call_operand.vmem [shape: f32[1,32], index: 4, kind: input, shape index: {}]
  %s5 = inlined_call_operand.vmem [shape: f32[1,32], index: 5, kind: input, shape index: {}]
  %s6 = inlined_call_operand.hbm [shape: f32[16,32], index: 6, kind: output, shape index: {}]
  %s7 = sld [smem:[#allocation0]]
  $region42: #{transformer_decoder_layer.17} parent=0
    _
  %s9 = ssub.s32 1, %s7
  %s10 = scalar_select 0, %s9, %s7
  $region1: #{transformer_decoder_layer.17} parent=0
    #allocation3 [shape = 'u8[8192]{0}', space=vmem, size = 0x2000, scoped, tag = 'output window, operand 0, single buffered']
    #allocation4 [shape = 's32[1]{0}', space=sflag, size = 0x4, scoped, tag = 'scoped memory for transformer_decoder_layer.17']
    %11 = vsyncpa [#allocation4], 0
    // Predicated region
    $region2: #{transformer_decoder_layer.17} parent=1 // pred_check
      _
    $region3: #{transformer_decoder_layer.17} parent=1 // pred_check_branch
      %13 = sbr.rel (0) target = $region5
    $region4: #{transformer_decoder_layer.17} parent=1 // pred_region
      _
    $region5: #{transformer_decoder_layer.17} parent=1 // pred_fallthru
      _
    // Predicated region
    $region6: #{transformer_decoder_layer.17} parent=1 // pred_check
      _
    $region7: #{transformer_decoder_layer.17} parent=1 // pred_check_branch
      %15 = sbr.rel (0) target = $region9
    $region8: #{transformer_decoder_layer.17} parent=1 // pred_region
      _
    $region9: #{transformer_decoder_layer.17} parent=1 // pred_fallthru
      _
    // Predicated region
    $region10: #{transformer_decoder_layer.17} parent=1 // pred_check
      _
    $region11: #{transformer_decoder_layer.17} parent=1 // pred_check_branch
      %17 = sbr.rel (0) target = $region13
    $region12: #{transformer_decoder_layer.17} parent=1 // pred_region
      _
    $region13: #{transformer_decoder_layer.17} parent=1 // pred_fallthru
      _
    // Predicated region
    $region14: #{transformer_decoder_layer.17} parent=1 // pred_check
      _
    $region15: #{transformer_decoder_layer.17} parent=1 // pred_check_branch
      %19 = sbr.rel (0) target = $region17
    $region16: #{transformer_decoder_layer.17} parent=1 // pred_region
      _
    $region17: #{transformer_decoder_layer.17} parent=1 // pred_fallthru
      _
    // Predicated region
    $region18: #{transformer_decoder_layer.17} parent=1 // pred_check
      _
    $region19: #{transformer_decoder_layer.17} parent=1 // pred_check_branch
      %21 = sbr.rel (0) target = $region21
    $region20: #{transformer_decoder_layer.17} parent=1 // pred_region
      _
    $region21: #{transformer_decoder_layer.17} parent=1 // pred_fallthru
      _
    // Predicated region
    $region22: #{transformer_decoder_layer.17} parent=1 // pred_check
      _
    $region23: #{transformer_decoder_layer.17} parent=1 // pred_check_branch
      %23 = sbr.rel (0) target = $region25
    $region24: #{transformer_decoder_layer.17} parent=1 // pred_region
      _
    $region25: #{transformer_decoder_layer.17} parent=1 // pred_fallthru
      _
    %p24 = scmp.eq.s32.totalorder 0, 0
    // Predicated region
    $region26: #{transformer_decoder_layer.17} parent=1 // pred_check
      %p25 = pneg %p24
    $region27: #{transformer_decoder_layer.17} parent=1 // pred_check_branch
      %27 = sbr.rel (%p25) target = $region29
    $region28: #{transformer_decoder_layer.17} parent=1 // pred_region
      %vm28 = vcmask 261120
      %29 = vst.msk [vmem:[#allocation2] sm:$0xff] %vm28, 0.0
      %30 = vst.msk [vmem:[#allocation2 + $0x8] sm:$0xff] %vm28, 0.0
    $region29: #{transformer_decoder_layer.17} parent=1 // pred_fallthru
      _
    %v31 = vld [vmem:[#allocation2] sm:$0xff]
    %v32 = vld [vmem:[#allocation2 + $0x8] sm:$0xff]
    %v33 = vld [vmem:[%s0] sm:$0xff]
    %v34 = vld [vmem:[%s0 + $0x8] sm:$0xff]
    %v35 = vld [vmem:[%s1] sm:$0xff]
    %v36 = vld [vmem:[%s1 + $0x8] sm:$0xff]
    %v37 = vld [vmem:[%s1 + $0x10] sm:$0xff]
    %v38 = vld [vmem:[%s1 + $0x18] sm:$0xff]
    %v39 = vld [vmem:[%s1 + $0x20] sm:$0xff]
    %v40 = vld [vmem:[%s1 + $0x28] sm:$0xff]
    %v41 = vld [vmem:[%s1 + $0x30] sm:$0xff]
    %v42 = vld [vmem:[%s1 + $0x38] sm:$0xff]
    %vm43 = vcmask 523264
    %v45 = vsel %vm43, %v33, 0
    %v48 = vsel %vm43, %v34, 0
    %50 = vmatprep.subr.mxu0 0.0
    %51 = vmatpush1.msra.mxu0 %v35
    %52 = vmatprep.subr.mxu0 0.0
    %53 = vmatpush1.msra.mxu0 %v36
    %54 = vmatprep.subr.mxu0 0.0
    %55 = vmatpush1.msra.mxu0 %v37
    %56 = vmatprep.subr.mxu0 0.0
    %57 = vmatpush1.msra.mxu0 %v38
    %58 = vmatprep.subr.mxu0 0.0
    %59 = vmatpush1.msra.mxu0 %v39
    %60 = vmatprep.subr.mxu0 0.0
    %61 = vmatpush1.msra.mxu0 %v40
    %62 = vmatprep.subr.mxu0 0.0
    %63 = vmatpush1.msra.mxu0 %v41
    %64 = vmatprep.subr.mxu0 0.0
    %65 = vmatpush1.msra.mxu0 %v42
    %66 = vmatprep.subr.mxu0 0.0
    %67 = vmatpush1.msra.mxu0 0.0
    %68 = vmatprep.subr.mxu0 0.0
    %69 = vmatpush1.msra.mxu0 0.0
    %70 = vmatprep.subr.mxu0 0.0
    %71 = vmatpush1.msra.mxu0 0.0
    %72 = vmatprep.subr.mxu0 0.0
    %73 = vmatpush1.msra.mxu0 0.0
    %74 = vmatprep.subr.mxu0 0.0
    %75 = vmatpush1.msra.mxu0 0.0
    %76 = vmatprep.subr.mxu0 0.0
    %77 = vmatpush1.msra.mxu0 0.0
    %78 = vmatprep.subr.mxu0 0.0
    %79 = vmatpush1.msra.mxu0 0.0
    %80 = vmatprep.subr.mxu0 0.0
    %81 = vmatpush1.msra.mxu0 0.0
    %82 = vmatprep.subr.mxu0 0.0
    %83 = vmatpush1.msra.mxu0 0.0
    %84 = vmatprep.subr.mxu0 0.0
    %85 = vmatpush1.msra.mxu0 0.0
    %86 = vmatprep.subr.mxu0 0.0
    %87 = vmatpush1.msra.mxu0 0.0
    %88 = vmatprep.subr.mxu0 0.0
    %89 = vmatpush1.msra.mxu0 0.0
    %90 = vmatprep.subr.mxu0 0.0
    %91 = vmatpush1.msra.mxu0 0.0
    %92 = vmatprep.subr.mxu0 0.0
    %93 = vmatpush1.msra.mxu0 0.0
    %94 = vmatprep.subr.mxu0 0.0
    %95 = vmatpush1.msra.mxu0 0.0
    %96 = vmatprep.subr.mxu0 0.0
    %97 = vmatpush1.msra.mxu0 0.0
    %98 = vmatprep.subr.mxu0 0.0
    %99 = vmatpush1.msra.mxu0 0.0
    %100 = vmatprep.subr.mxu0 0.0
    %101 = vmatpush1.msra.mxu0 0.0
    %102 = vmatprep.subr.mxu0 0.0
    %103 = vmatpush1.msra.mxu0 0.0
    %104 = vmatprep.subr.mxu0 0.0
    %105 = vmatpush1.msra.mxu0 0.0
    %106 = vmatprep.subr.mxu0 0.0
    %107 = vmatpush1.msra.mxu0 0.0
    %108 = vmatprep.subr.mxu0 0.0
    %109 = vmatpush1.msra.mxu0 0.0
    %110 = vmatprep.subr.mxu0 0.0
    %111 = vmatpush1.msra.mxu0 0.0
    %112 = vmatprep.subr.mxu0 0.0
    %113 = vmatpush1.msra.mxu0 0.0
    %114 = vmatprep.mubr.f32.mxu0 0.0
    %115 = vmatmul.mubr.f32.gmra.mrb[0].mxu0 %v45
    %v116 = vpop.f32.mrb[0].mxu0
    %v117 = vadd.f32 0.0, %v116
    %v118 = vpop.f32.mrb[0].mxu0
    %119 = vmatprep.mubr.f32.mxu0 0.0
    %120 = vmatmul.mubr.f32.gmra.mrb[0].mxu0 %v48
    %v121 = vpop.f32.mrb[0].mxu0
    %v122 = vadd.f32 0.0, %v121
    %v123 = vpop.f32.mrb[0].mxu0
    %124 = vdwg.mxu0
    %v125 = vadd.f32 %v31, %v117
    %v126 = vadd.f32 %v32, %v122
    %vm127 = vcmask 261120
    %128 = vst.msk [vmem:[#allocation2] sm:$0xff] %vm127, %v125
    %129 = vst.msk [vmem:[#allocation2 + $0x8] sm:$0xff] %vm127, %v126
    // Predicated region
    $region30: #{transformer_decoder_layer.17} parent=1 // pred_check
      %p130 = pneg %p24
    $region31: #{transformer_decoder_layer.17} parent=1 // pred_check_branch
      %132 = sbr.rel (%p130) target = $region33
    $region32: #{transformer_decoder_layer.17} parent=1 // pred_region
      %v133 = vld [vmem:[#allocation2] sm:$0xff]
      %v134 = vld [vmem:[#allocation2 + $0x8] sm:$0xff]
      %v135 = vld [vmem:[%s2] sm:$0x1]
      %v137 = vlaneseq
      %v138 = vshrl.u32 %v137, 7
      %v139 = vsub.s32 0, %v138
      %v140 = vrot.slane %v135, %v139
      %v142 = vadd.f32 %v133, %v140
      %v143 = vadd.f32 %v134, %v140
      %v144 = vld [vmem:[%s3] sm:$0xff]
      %v145 = vld [vmem:[%s3 + $0x8] sm:$0xff]
      %v146 = vadd.f32 %v142, %v144
      %v147 = vadd.f32 %v143, %v145
      %v148 = vsel %vm127, %v146, 0.0
      %149 = vadd.xlane.f32.xlu0 %v148
      %v150 = vpop.xlane.xlu0 %149
      %v151 = vsel %vm127, %v147, 0.0
      %152 = vadd.xlane.f32.xlu0 %v151
      %v153 = vpop.xlane.xlu0 %152
      %v154 = vrcp.pop 32.0
      %v155 = vmul.f32 %v150, %v154
      %v156 = vmul.f32 %v153, %v154
      %v157 = vsub.f32 %v146, %v155
      %v158 = vsub.f32 %v147, %v156
      %v159 = vmul.f32 %v157, %v157
      %v160 = vmul.f32 %v158, %v158
      %v161 = vsel %vm127, %v159, 0.0
      %162 = vadd.xlane.f32.xlu0 %v161
      %v163 = vpop.xlane.xlu0 %162
      %v164 = vsel %vm127, %v160, 0.0
      %165 = vadd.xlane.f32.xlu0 %v164
      %v166 = vpop.xlane.xlu0 %165
      %v167 = vmul.f32 %v163, %v154
      %v168 = vmul.f32 %v166, %v154
      %v169 = vadd.f32 %v167, 1e-05
      %v170 = vadd.f32 %v168, 1e-05
      %v171 = vrsqrt.pop %v169
      %v172 = vrsqrt.pop %v170
      %v173 = vmul.f32 %v157, %v171
      %v174 = vmul.f32 %v158, %v172
      %v175 = vld [vmem:[%s4] sm:$0x1]
      %v177 = vlaneseq
      %v178 = vshrl.u32 %v177, 7
      %v179 = vsub.s32 0, %v178
      %v180 = vrot.slane %v175, %v179
      %v182 = vmul.f32 %v173, %v180
      %v183 = vmul.f32 %v174, %v180
      %v184 = vld [vmem:[%s5] sm:$0x1]
      %v186 = vlaneseq
      %v187 = vshrl.u32 %v186, 7
      %v188 = vsub.s32 0, %v187
      %v189 = vrot.slane %v184, %v188
      %v191 = vadd.f32 %v182, %v189
      %v192 = vadd.f32 %v183, %v189
      %193 = vst.msk [vmem:[#allocation3] sm:$0xff] %vm127, %v191
      %194 = vst.msk [vmem:[#allocation3 + $0x8] sm:$0xff] %vm127, %v192
    $region33: #{transformer_decoder_layer.17} parent=1 // pred_fallthru
      _
    // Predicated region
    $region34: #{transformer_decoder_layer.17} parent=1 // pred_check
      _
    $region35: #{transformer_decoder_layer.17} parent=1 // pred_check_branch
      %196 = sbr.rel (0) target = $region37
    $region36: #{transformer_decoder_layer.17} parent=1 // pred_region
      %s198 = ssub.s32 256, 256
      %199 = vsyncadd [#allocation4], %s198
      %s200 = sshll.u32 [#allocation3], 4
      %s201 = int_to_ptr.vmem [resolvable:$true] %s200
      %206 = dma.vmem_to_hbm [thread:$0]  %s201, 256, %s6, [#allocation4], 128, 128, 8
    $region37: #{transformer_decoder_layer.17} parent=1 // pred_fallthru
      _
    // Predicated region
    $region38: #{transformer_decoder_layer.17} parent=1 // pred_check
      _
    $region39: #{transformer_decoder_layer.17} parent=1 // pred_check_branch
      %208 = sbr.rel (0) target = $region41
    $region40: #{transformer_decoder_layer.17} parent=1 // pred_region
      %209 = dma.done [#allocation4], 256
    $region41: #{transformer_decoder_layer.17} parent=1 // pred_fallthru
      _
    %210 = vsyncpa [#allocation4], 1

</llo_original>
